<compile_context>
chip_gen: v7x
topology: tpu7x:2x2x1
jax: 0.10.0
libtpu: 0.0.40
codegen_flags: <defaults>
</compile_context>

<pallas_src>
import math

import jax
import jax.numpy as jnp
from jax.experimental import pallas as pl
from jax.experimental.pallas import tpu as pltpu

D_MODEL = 50
HEADS = 2
D_K = D_MODEL // HEADS          # 25
D_FF = 2048
EPS = 1e-6
NEG_INF = -1000000000.0         # matches masked_fill value in the PyTorch code

# lane-dense padded sizes (last-dim multiples of 128)
D_PAD = 128
DK_PAD = 128


def _dot(a, b):
    # operands stay in their stored dtype; accumulate in f32 on the MXU
    return jnp.dot(a, b, preferred_element_type=jnp.float32)


def _norm(x, alpha, bias, valid):
    """PyTorch `Norm`: alpha*(x-mean)/(std+eps)+bias, std is Bessel-corrected.

    x: (S, D_PAD) with padded columns guaranteed zero; stats use real cols only.
    """
    mean = jnp.sum(x, axis=-1, keepdims=True) * (1.0 / D_MODEL)
    centered = jnp.where(valid, x - mean, 0.0)
    var = jnp.sum(centered * centered, axis=-1, keepdims=True) * (1.0 / (D_MODEL - 1))
    std = jnp.sqrt(var)
    return alpha * centered / (std + EPS) + bias


def encoder_layer_kernel(x_ref, mask_ref,
                         na1_ref, nb1_ref, na2_ref, nb2_ref,
                         wq_ref, bq_ref, wk_ref, bk_ref, wv_ref, bv_ref,
                         wo_ref, bo_ref,
                         w1_ref, fb1_ref, w2_ref, fb2_ref,
                         o_ref):
    S = x_ref.shape[0]
    x = x_ref[...]                                    # (S, D_PAD) f32, pads = 0
    mask = mask_ref[...]                              # (S, S) f32: 1 keep, 0 drop

    valid = jax.lax.broadcasted_iota(jnp.int32, (S, D_PAD), 1) < D_MODEL

    # ---------- sub-layer 1: x + attn(norm_1(x)) ----------  (dropout_1 = id)
    x2 = _norm(x, na1_ref[...], nb1_ref[...], valid)

    inv_sqrt_dk = 1.0 / math.sqrt(D_K)
    attn = jnp.zeros((S, D_PAD), jnp.float32)
    for h in range(HEADS):                            # static unroll (HEADS=2)
        q = _dot(x2, wq_ref[h]) + bq_ref[h]           # (S, DK_PAD)
        k = _dot(x2, wk_ref[h]) + bk_ref[h]
        v = _dot(x2, wv_ref[h]) + bv_ref[h]
        scores = jax.lax.dot_general(                 # q @ k.T  -> (S, S)
            q, k, (((1,), (1,)), ((), ())),
            preferred_element_type=jnp.float32) * inv_sqrt_dk
        scores = jnp.where(mask == 0.0, NEG_INF, scores)
        m = jnp.max(scores, axis=-1, keepdims=True)   # numerically stable softmax
        p = jnp.exp(scores - m)
        p = p / jnp.sum(p, axis=-1, keepdims=True)    # attention dropout = id
        o_h = _dot(p, v)                              # (S, DK_PAD)
        # "concat over heads then out-proj" == sum_h o_h @ Wo[h]
        attn = attn + _dot(o_h, wo_ref[h])
    attn = attn + bo_ref[...]
    x = x + attn

    # ---------- sub-layer 2: x + ff(norm_2(x)) ----------    (dropout_2 = id)
    x2 = _norm(x, na2_ref[...], nb2_ref[...], valid)
    h1 = jnp.maximum(_dot(x2, w1_ref[...]) + fb1_ref[...], 0.0)   # ReLU
    ff = _dot(h1, w2_ref[...]) + fb2_ref[...]
    o_ref[...] = x + ff


def encoder_layer_forward(x, mask, params):
    """x: (B, S, d_model) f32, mask: (B, S, S) f32 -> (B, S, d_model) f32."""
    B, S, _ = x.shape
    f32 = jnp.float32

    # ---- zero-pad activations / parameters to lane-dense shapes ----
    x_p = jnp.zeros((B, S, D_PAD), f32).at[:, :, :D_MODEL].set(x)

    def pad_row(v, n):                    # (k,) -> (1, n), zero padded
        return jnp.zeros((1, n), f32).at[0, : v.shape[0]].set(v)

    def split_w_in(w):                    # (D_MODEL, D_MODEL) -> (H, D_PAD, DK_PAD)
        out = jnp.zeros((HEADS, D_PAD, DK_PAD), f32)
        for h in range(HEADS):
            out = out.at[h, :D_MODEL, :D_K].set(w[:, h * D_K:(h + 1) * D_K])
        return out

    def split_b_in(b):                    # (D_MODEL,) -> (H, 1, DK_PAD)
        out = jnp.zeros((HEADS, 1, DK_PAD), f32)
        for h in range(HEADS):
            out = out.at[h, 0, :D_K].set(b[h * D_K:(h + 1) * D_K])
        return out

    def split_w_out(w):                   # (D_MODEL, D_MODEL) -> (H, DK_PAD, D_PAD)
        out = jnp.zeros((HEADS, DK_PAD, D_PAD), f32)
        for h in range(HEADS):
            out = out.at[h, :D_K, :D_MODEL].set(w[h * D_K:(h + 1) * D_K, :])
        return out

    operands = (
        x_p, mask,
        pad_row(params["na1"], D_PAD), pad_row(params["nb1"], D_PAD),
        pad_row(params["na2"], D_PAD), pad_row(params["nb2"], D_PAD),
        split_w_in(params["wq"]), split_b_in(params["bq"]),
        split_w_in(params["wk"]), split_b_in(params["bk"]),
        split_w_in(params["wv"]), split_b_in(params["bv"]),
        split_w_out(params["wo"]), pad_row(params["bo"], D_PAD),
        jnp.zeros((D_PAD, D_FF), f32).at[:D_MODEL, :].set(params["w1"]),
        pad_row(params["b1"], D_FF),
        jnp.zeros((D_FF, D_PAD), f32).at[:, :D_MODEL].set(params["w2"]),
        pad_row(params["b2"], D_PAD),
    )

    def full_spec(shape):                 # whole array, same block every step
        ndim = len(shape)
        return pl.BlockSpec(shape, lambda b, ndim=ndim: (0,) * ndim)

    batch_spec = pl.BlockSpec((None, S, D_PAD), lambda b: (b, 0, 0))
    mask_spec = pl.BlockSpec((None, S, S), lambda b: (b, 0, 0))
    in_specs = [batch_spec, mask_spec] + [full_spec(op.shape) for op in operands[2:]]

    per_head = (3 * 2 * S * D_PAD * DK_PAD          # q/k/v projections
                + 2 * 2 * S * S * DK_PAD            # q@k^T and p@v
                + 2 * S * DK_PAD * D_PAD)           # per-head output projection
    flops = B * (HEADS * per_head + 2 * 2 * S * D_PAD * D_FF)
    bytes_accessed = sum(4 * op.size for op in operands) + 4 * B * S * D_PAD

    out_p = pl.pallas_call(
        encoder_layer_kernel,
        out_shape=jax.ShapeDtypeStruct((B, S, D_PAD), f32),
        grid=(B,),
        in_specs=in_specs,
        out_specs=batch_spec,
        compiler_params=pltpu.CompilerParams(
            dimension_semantics=("parallel",)),
        cost_estimate=pl.CostEstimate(
            flops=flops,
            transcendentals=B * HEADS * S * S,
            bytes_accessed=bytes_accessed),
    )(*operands)

    return out_p[:, :, :D_MODEL]


def reference_forward(x, mask, p):
    """Pure-JAX reference matching the PyTorch EncoderLayer (eval mode)."""
    hp = jax.lax.Precision.HIGHEST

    def norm(t, alpha, bias):
        mean = jnp.mean(t, axis=-1, keepdims=True)
        var = jnp.sum((t - mean) ** 2, axis=-1, keepdims=True) / (t.shape[-1] - 1)
        return alpha * (t - mean) / (jnp.sqrt(var) + EPS) + bias

    B, S, D = x.shape
    x2 = norm(x, p["na1"], p["nb1"])
    q = jnp.einsum("bsd,de->bse", x2, p["wq"], precision=hp) + p["bq"]
    k = jnp.einsum("bsd,de->bse", x2, p["wk"], precision=hp) + p["bk"]
    v = jnp.einsum("bsd,de->bse", x2, p["wv"], precision=hp) + p["bv"]

    def to_heads(t):
        return t.reshape(B, S, HEADS, D_K).transpose(0, 2, 1, 3)

    q, k, v = to_heads(q), to_heads(k), to_heads(v)
    scores = jnp.einsum("bhqd,bhkd->bhqk", q, k, precision=hp) / math.sqrt(D_K)
    scores = jnp.where(mask[:, None, :, :] == 0.0, NEG_INF, scores)
    probs = jax.nn.softmax(scores, axis=-1)
    o = jnp.einsum("bhqk,bhkd->bhqd", probs, v, precision=hp)
    o = o.transpose(0, 2, 1, 3).reshape(B, S, D)
    attn = jnp.einsum("bsd,de->bse", o, p["wo"], precision=hp) + p["bo"]
    x = x + attn

    x2 = norm(x, p["na2"], p["nb2"])
    h1 = jax.nn.relu(jnp.einsum("bsd,df->bsf", x2, p["w1"], precision=hp) + p["b1"])
    ff = jnp.einsum("bsf,fd->bsd", h1, p["w2"], precision=hp) + p["b2"]
    return x + ff


if __name__ == "__main__":
    key = jax.random.PRNGKey(0)
    keys = jax.random.split(key, 14)

    B, S = 2, 8

    def linear_init(kw, kb, fan_in, fan_out):
        # nn.Linear default: U(-1/sqrt(fan_in), 1/sqrt(fan_in)); (in, out) layout.
        bound = 1.0 / math.sqrt(fan_in)
        w = jax.random.uniform(kw, (fan_in, fan_out), jnp.float32, -bound, bound)
        b = jax.random.uniform(kb, (fan_out,), jnp.float32, -bound, bound)
        return w, b

    wq, bq = linear_init(keys[0], keys[1], D_MODEL, D_MODEL)
    wk, bk = linear_init(keys[2], keys[3], D_MODEL, D_MODEL)
    wv, bv = linear_init(keys[4], keys[5], D_MODEL, D_MODEL)
    wo, bo = linear_init(keys[6], keys[7], D_MODEL, D_MODEL)
    w1, b1 = linear_init(keys[8], keys[9], D_MODEL, D_FF)
    w2, b2 = linear_init(keys[10], keys[11], D_FF, D_MODEL)

    params = dict(
        wq=wq, bq=bq, wk=wk, bk=bk, wv=wv, bv=bv, wo=wo, bo=bo,
        w1=w1, b1=b1, w2=w2, b2=b2,
        na1=jnp.ones((D_MODEL,), jnp.float32),   # Norm.alpha init = ones
        nb1=jnp.zeros((D_MODEL,), jnp.float32),  # Norm.bias  init = zeros
        na2=jnp.ones((D_MODEL,), jnp.float32),
        nb2=jnp.zeros((D_MODEL,), jnp.float32),
    )

    x = jax.random.normal(keys[12], (B, S, D_MODEL), jnp.float32)
    # Random 0/1 mask; keep the diagonal unmasked so every query row has at
    # least one valid key.
    mask = (jax.random.uniform(keys[13], (B, S, S)) > 0.3).astype(jnp.float32)
    mask = jnp.maximum(mask, jnp.eye(S, dtype=jnp.float32)[None])

    # TODO(synk): dropout layers are stochastic only in training mode; they are
    # implemented as identity here (eval/inference forward semantics).
    out = jax.block_until_ready(encoder_layer_forward(x, mask, params))
    ref = reference_forward(x, mask, params)

    assert out.shape == (B, S, D_MODEL)
    max_err = float(jnp.max(jnp.abs(out - ref)))
    assert jnp.allclose(out, ref, atol=1e-3, rtol=1e-3), (
        f"mismatch vs reference, max abs err = {max_err}")

    print("KERNEL_OK")
</pallas_src>

<mosaic_0001>
module attributes {stable_mosaic.version = 11 : i64} {
  func.func @encoder_layer_kernel(%arg0: i32, %arg1: memref<1x8x128xf32, #tpu.memory_space<vmem>>, %arg2: memref<1x8x8xf32, #tpu.memory_space<vmem>>, %arg3: memref<1x128xf32, #tpu.memory_space<vmem>>, %arg4: memref<1x128xf32, #tpu.memory_space<vmem>>, %arg5: memref<1x128xf32, #tpu.memory_space<vmem>>, %arg6: memref<1x128xf32, #tpu.memory_space<vmem>>, %arg7: memref<2x128x128xf32, #tpu.memory_space<vmem>>, %arg8: memref<2x1x128xf32, #tpu.memory_space<vmem>>, %arg9: memref<2x128x128xf32, #tpu.memory_space<vmem>>, %arg10: memref<2x1x128xf32, #tpu.memory_space<vmem>>, %arg11: memref<2x128x128xf32, #tpu.memory_space<vmem>>, %arg12: memref<2x1x128xf32, #tpu.memory_space<vmem>>, %arg13: memref<2x128x128xf32, #tpu.memory_space<vmem>>, %arg14: memref<1x128xf32, #tpu.memory_space<vmem>>, %arg15: memref<128x2048xf32, #tpu.memory_space<vmem>>, %arg16: memref<1x2048xf32, #tpu.memory_space<vmem>>, %arg17: memref<2048x128xf32, #tpu.memory_space<vmem>>, %arg18: memref<1x128xf32, #tpu.memory_space<vmem>>, %arg19: memref<1x8x128xf32, #tpu.memory_space<vmem>>) attributes {dimension_semantics = [#tpu.dimension_semantics<parallel>], iteration_bounds = array<i64: 2>, scalar_prefetch = 0 : i64, scratch_operands = 0 : i64, tpu.core_type = #tpu.core_type<tc>, window_params = [{transform_indices = @transform_0, window_bounds = array<i64: 1, 8, 128>}, {transform_indices = @transform_1, window_bounds = array<i64: 1, 8, 8>}, {pipeline_mode = #tpu.pipeline_mode<synchronous>, transform_indices = @transform_2, window_bounds = array<i64: 1, 128>}, {pipeline_mode = #tpu.pipeline_mode<synchronous>, transform_indices = @transform_3, window_bounds = array<i64: 1, 128>}, {pipeline_mode = #tpu.pipeline_mode<synchronous>, transform_indices = @transform_4, window_bounds = array<i64: 1, 128>}, {pipeline_mode = #tpu.pipeline_mode<synchronous>, transform_indices = @transform_5, window_bounds = array<i64: 1, 128>}, {pipeline_mode = #tpu.pipeline_mode<synchronous>, transform_indices = @transform_6, window_bounds = array<i64: 2, 128, 128>}, {pipeline_mode = #tpu.pipeline_mode<synchronous>, transform_indices = @transform_7, window_bounds = array<i64: 2, 1, 128>}, {pipeline_mode = #tpu.pipeline_mode<synchronous>, transform_indices = @transform_8, window_bounds = array<i64: 2, 128, 128>}, {pipeline_mode = #tpu.pipeline_mode<synchronous>, transform_indices = @transform_9, window_bounds = array<i64: 2, 1, 128>}, {pipeline_mode = #tpu.pipeline_mode<synchronous>, transform_indices = @transform_10, window_bounds = array<i64: 2, 128, 128>}, {pipeline_mode = #tpu.pipeline_mode<synchronous>, transform_indices = @transform_11, window_bounds = array<i64: 2, 1, 128>}, {pipeline_mode = #tpu.pipeline_mode<synchronous>, transform_indices = @transform_12, window_bounds = array<i64: 2, 128, 128>}, {pipeline_mode = #tpu.pipeline_mode<synchronous>, transform_indices = @transform_13, window_bounds = array<i64: 1, 128>}, {pipeline_mode = #tpu.pipeline_mode<synchronous>, transform_indices = @transform_14, window_bounds = array<i64: 128, 2048>}, {pipeline_mode = #tpu.pipeline_mode<synchronous>, transform_indices = @transform_15, window_bounds = array<i64: 1, 2048>}, {pipeline_mode = #tpu.pipeline_mode<synchronous>, transform_indices = @transform_16, window_bounds = array<i64: 2048, 128>}, {pipeline_mode = #tpu.pipeline_mode<synchronous>, transform_indices = @transform_17, window_bounds = array<i64: 1, 128>}, {transform_indices = @transform_18, window_bounds = array<i64: 1, 8, 128>}]} {
    %c0 = arith.constant 0 : index
    %c0_0 = arith.constant 0 : index
    %c0_1 = arith.constant 0 : index
    %0 = vector.load %arg1[%c0, %c0_0, %c0_1] : memref<1x8x128xf32, #tpu.memory_space<vmem>>, vector<1x8x128xf32>
    %1 = vector.shape_cast %0 : vector<1x8x128xf32> to vector<8x128xf32>
    %c0_2 = arith.constant 0 : index
    %c0_3 = arith.constant 0 : index
    %c0_4 = arith.constant 0 : index
    %2 = vector.load %arg2[%c0_2, %c0_3, %c0_4] : memref<1x8x8xf32, #tpu.memory_space<vmem>>, vector<1x8x8xf32>
    %3 = vector.shape_cast %2 : vector<1x8x8xf32> to vector<8x8xf32>
    %4 = tpu.iota {dimensions = array<i32: 1>} : vector<8x128xi32>
    %c50_i32 = arith.constant 50 : i32
    %5 = vector.broadcast %c50_i32 : i32 to vector<8x128xi32>
    %6 = arith.cmpi slt, %4, %5 : vector<8x128xi32>
    %c0_5 = arith.constant 0 : index
    %c0_6 = arith.constant 0 : index
    %7 = vector.load %arg3[%c0_5, %c0_6] : memref<1x128xf32, #tpu.memory_space<vmem>>, vector<1x128xf32>
    %c0_7 = arith.constant 0 : index
    %c0_8 = arith.constant 0 : index
    %8 = vector.load %arg4[%c0_7, %c0_8] : memref<1x128xf32, #tpu.memory_space<vmem>>, vector<1x128xf32>
    %cst = arith.constant dense<0.000000e+00> : vector<8xf32>
    %9 = vector.multi_reduction <add>, %1, %cst [1] : vector<8x128xf32> to vector<8xf32>
    %10 = vector.shape_cast %9 : vector<8xf32> to vector<8x1xf32>
    %cst_9 = arith.constant 2.000000e-02 : f32
    %11 = vector.broadcast %cst_9 : f32 to vector<8x1xf32>
    %12 = arith.mulf %10, %11 : vector<8x1xf32>
    %13 = vector.broadcast %12 : vector<8x1xf32> to vector<8x128xf32>
    %14 = arith.subf %1, %13 : vector<8x128xf32>
    %cst_10 = arith.constant 0.000000e+00 : f32
    %15 = vector.broadcast %cst_10 : f32 to vector<8x128xf32>
    %16 = arith.select %6, %14, %15 : vector<8x128xi1>, vector<8x128xf32>
    %17 = arith.mulf %16, %16 : vector<8x128xf32>
    %cst_11 = arith.constant dense<0.000000e+00> : vector<8xf32>
    %18 = vector.multi_reduction <add>, %17, %cst_11 [1] : vector<8x128xf32> to vector<8xf32>
    %19 = vector.shape_cast %18 : vector<8xf32> to vector<8x1xf32>
    %cst_12 = arith.constant 0.0204081628 : f32
    %20 = vector.broadcast %cst_12 : f32 to vector<8x1xf32>
    %21 = arith.mulf %19, %20 : vector<8x1xf32>
    %22 = math.sqrt %21 : vector<8x1xf32>
    %23 = vector.broadcast %7 : vector<1x128xf32> to vector<8x128xf32>
    %24 = arith.mulf %23, %16 : vector<8x128xf32>
    %cst_13 = arith.constant 9.99999997E-7 : f32
    %25 = vector.broadcast %cst_13 : f32 to vector<8x1xf32>
    %26 = arith.addf %22, %25 : vector<8x1xf32>
    %27 = vector.broadcast %26 : vector<8x1xf32> to vector<8x128xf32>
    %28 = arith.divf %24, %27 : vector<8x128xf32>
    %29 = vector.broadcast %8 : vector<1x128xf32> to vector<8x128xf32>
    %30 = arith.addf %28, %29 : vector<8x128xf32>
    %cst_14 = arith.constant 0.000000e+00 : f32
    %31 = vector.broadcast %cst_14 : f32 to vector<8x128xf32>
    %c0_15 = arith.constant 0 : index
    %c0_16 = arith.constant 0 : index
    %c0_17 = arith.constant 0 : index
    %32 = vector.load %arg7[%c0_15, %c0_16, %c0_17] : memref<2x128x128xf32, #tpu.memory_space<vmem>>, vector<1x128x128xf32>
    %33 = vector.shape_cast %32 : vector<1x128x128xf32> to vector<128x128xf32>
    %cst_18 = arith.constant dense<0.000000e+00> : vector<8x128xf32>
    %34 = tpu.matmul %30, %33, %cst_18 {dimension_numbers = #tpu.dot_dimension_numbers<[1], [0], [0], [1], [0, 0, 1, 1], [], []>} : vector<8x128xf32>, vector<128x128xf32>, vector<8x128xf32> -> vector<8x128xf32>
    %c0_19 = arith.constant 0 : index
    %c0_20 = arith.constant 0 : index
    %c0_21 = arith.constant 0 : index
    %35 = vector.load %arg8[%c0_19, %c0_20, %c0_21] : memref<2x1x128xf32, #tpu.memory_space<vmem>>, vector<1x1x128xf32>
    %36 = vector.shape_cast %35 : vector<1x1x128xf32> to vector<1x128xf32>
    %37 = vector.broadcast %36 : vector<1x128xf32> to vector<8x128xf32>
    %38 = arith.addf %34, %37 : vector<8x128xf32>
    %c0_22 = arith.constant 0 : index
    %c0_23 = arith.constant 0 : index
    %c0_24 = arith.constant 0 : index
    %39 = vector.load %arg9[%c0_22, %c0_23, %c0_24] : memref<2x128x128xf32, #tpu.memory_space<vmem>>, vector<1x128x128xf32>
    %40 = vector.shape_cast %39 : vector<1x128x128xf32> to vector<128x128xf32>
    %cst_25 = arith.constant dense<0.000000e+00> : vector<8x128xf32>
    %41 = tpu.matmul %30, %40, %cst_25 {dimension_numbers = #tpu.dot_dimension_numbers<[1], [0], [0], [1], [0, 0, 1, 1], [], []>} : vector<8x128xf32>, vector<128x128xf32>, vector<8x128xf32> -> vector<8x128xf32>
    %c0_26 = arith.constant 0 : index
    %c0_27 = arith.constant 0 : index
    %c0_28 = arith.constant 0 : index
    %42 = vector.load %arg10[%c0_26, %c0_27, %c0_28] : memref<2x1x128xf32, #tpu.memory_space<vmem>>, vector<1x1x128xf32>
    %43 = vector.shape_cast %42 : vector<1x1x128xf32> to vector<1x128xf32>
    %44 = vector.broadcast %43 : vector<1x128xf32> to vector<8x128xf32>
    %45 = arith.addf %41, %44 : vector<8x128xf32>
    %c0_29 = arith.constant 0 : index
    %c0_30 = arith.constant 0 : index
    %c0_31 = arith.constant 0 : index
    %46 = vector.load %arg11[%c0_29, %c0_30, %c0_31] : memref<2x128x128xf32, #tpu.memory_space<vmem>>, vector<1x128x128xf32>
    %47 = vector.shape_cast %46 : vector<1x128x128xf32> to vector<128x128xf32>
    %cst_32 = arith.constant dense<0.000000e+00> : vector<8x128xf32>
    %48 = tpu.matmul %30, %47, %cst_32 {dimension_numbers = #tpu.dot_dimension_numbers<[1], [0], [0], [1], [0, 0, 1, 1], [], []>} : vector<8x128xf32>, vector<128x128xf32>, vector<8x128xf32> -> vector<8x128xf32>
    %c0_33 = arith.constant 0 : index
    %c0_34 = arith.constant 0 : index
    %c0_35 = arith.constant 0 : index
    %49 = vector.load %arg12[%c0_33, %c0_34, %c0_35] : memref<2x1x128xf32, #tpu.memory_space<vmem>>, vector<1x1x128xf32>
    %50 = vector.shape_cast %49 : vector<1x1x128xf32> to vector<1x128xf32>
    %51 = vector.broadcast %50 : vector<1x128xf32> to vector<8x128xf32>
    %52 = arith.addf %48, %51 : vector<8x128xf32>
    %cst_36 = arith.constant dense<0.000000e+00> : vector<8x8xf32>
    %53 = tpu.matmul %38, %45, %cst_36 {dimension_numbers = #tpu.dot_dimension_numbers<[1], [1], [0], [0], [0, 0, 1, 0], [], []>} : vector<8x128xf32>, vector<8x128xf32>, vector<8x8xf32> -> vector<8x8xf32>
    %cst_37 = arith.constant 2.000000e-01 : f32
    %54 = vector.broadcast %cst_37 : f32 to vector<8x8xf32>
    %55 = arith.mulf %53, %54 : vector<8x8xf32>
    %cst_38 = arith.constant 0.000000e+00 : f32
    %56 = vector.broadcast %cst_38 : f32 to vector<8x8xf32>
    %57 = arith.cmpf oeq, %3, %56 : vector<8x8xf32>
    %cst_39 = arith.constant -1.000000e+09 : f32
    %58 = vector.broadcast %cst_39 : f32 to vector<8x8xf32>
    %59 = arith.select %57, %58, %55 : vector<8x8xi1>, vector<8x8xf32>
    %cst_40 = arith.constant dense<0xFF800000> : vector<8xf32>
    %60 = vector.multi_reduction <maximumf>, %59, %cst_40 [1] : vector<8x8xf32> to vector<8xf32>
    %61 = vector.shape_cast %60 : vector<8xf32> to vector<8x1xf32>
    %62 = vector.broadcast %61 : vector<8x1xf32> to vector<8x8xf32>
    %63 = arith.subf %59, %62 : vector<8x8xf32>
    %64 = math.exp %63 : vector<8x8xf32>
    %cst_41 = arith.constant dense<0.000000e+00> : vector<8xf32>
    %65 = vector.multi_reduction <add>, %64, %cst_41 [1] : vector<8x8xf32> to vector<8xf32>
    %66 = vector.shape_cast %65 : vector<8xf32> to vector<8x1xf32>
    %67 = vector.broadcast %66 : vector<8x1xf32> to vector<8x8xf32>
    %68 = arith.divf %64, %67 : vector<8x8xf32>
    %cst_42 = arith.constant dense<0.000000e+00> : vector<8x128xf32>
    %69 = tpu.matmul %68, %52, %cst_42 {dimension_numbers = #tpu.dot_dimension_numbers<[1], [0], [0], [1], [0, 0, 1, 1], [], []>} : vector<8x8xf32>, vector<8x128xf32>, vector<8x128xf32> -> vector<8x128xf32>
    %c0_43 = arith.constant 0 : index
    %c0_44 = arith.constant 0 : index
    %c0_45 = arith.constant 0 : index
    %70 = vector.load %arg13[%c0_43, %c0_44, %c0_45] : memref<2x128x128xf32, #tpu.memory_space<vmem>>, vector<1x128x128xf32>
    %71 = vector.shape_cast %70 : vector<1x128x128xf32> to vector<128x128xf32>
    %cst_46 = arith.constant dense<0.000000e+00> : vector<8x128xf32>
    %72 = tpu.matmul %69, %71, %cst_46 {dimension_numbers = #tpu.dot_dimension_numbers<[1], [0], [0], [1], [0, 0, 1, 1], [], []>} : vector<8x128xf32>, vector<128x128xf32>, vector<8x128xf32> -> vector<8x128xf32>
    %73 = arith.addf %31, %72 : vector<8x128xf32>
    %c1 = arith.constant 1 : index
    %c0_47 = arith.constant 0 : index
    %c0_48 = arith.constant 0 : index
    %74 = vector.load %arg7[%c1, %c0_47, %c0_48] : memref<2x128x128xf32, #tpu.memory_space<vmem>>, vector<1x128x128xf32>
    %75 = vector.shape_cast %74 : vector<1x128x128xf32> to vector<128x128xf32>
    %cst_49 = arith.constant dense<0.000000e+00> : vector<8x128xf32>
    %76 = tpu.matmul %30, %75, %cst_49 {dimension_numbers = #tpu.dot_dimension_numbers<[1], [0], [0], [1], [0, 0, 1, 1], [], []>} : vector<8x128xf32>, vector<128x128xf32>, vector<8x128xf32> -> vector<8x128xf32>
    %c1_50 = arith.constant 1 : index
    %c0_51 = arith.constant 0 : index
    %c0_52 = arith.constant 0 : index
    %77 = vector.load %arg8[%c1_50, %c0_51, %c0_52] : memref<2x1x128xf32, #tpu.memory_space<vmem>>, vector<1x1x128xf32>
    %78 = vector.shape_cast %77 : vector<1x1x128xf32> to vector<1x128xf32>
    %79 = vector.broadcast %78 : vector<1x128xf32> to vector<8x128xf32>
    %80 = arith.addf %76, %79 : vector<8x128xf32>
    %c1_53 = arith.constant 1 : index
    %c0_54 = arith.constant 0 : index
    %c0_55 = arith.constant 0 : index
    %81 = vector.load %arg9[%c1_53, %c0_54, %c0_55] : memref<2x128x128xf32, #tpu.memory_space<vmem>>, vector<1x128x128xf32>
    %82 = vector.shape_cast %81 : vector<1x128x128xf32> to vector<128x128xf32>
    %cst_56 = arith.constant dense<0.000000e+00> : vector<8x128xf32>
    %83 = tpu.matmul %30, %82, %cst_56 {dimension_numbers = #tpu.dot_dimension_numbers<[1], [0], [0], [1], [0, 0, 1, 1], [], []>} : vector<8x128xf32>, vector<128x128xf32>, vector<8x128xf32> -> vector<8x128xf32>
    %c1_57 = arith.constant 1 : index
    %c0_58 = arith.constant 0 : index
    %c0_59 = arith.constant 0 : index
    %84 = vector.load %arg10[%c1_57, %c0_58, %c0_59] : memref<2x1x128xf32, #tpu.memory_space<vmem>>, vector<1x1x128xf32>
    %85 = vector.shape_cast %84 : vector<1x1x128xf32> to vector<1x128xf32>
    %86 = vector.broadcast %85 : vector<1x128xf32> to vector<8x128xf32>
    %87 = arith.addf %83, %86 : vector<8x128xf32>
    %c1_60 = arith.constant 1 : index
    %c0_61 = arith.constant 0 : index
    %c0_62 = arith.constant 0 : index
    %88 = vector.load %arg11[%c1_60, %c0_61, %c0_62] : memref<2x128x128xf32, #tpu.memory_space<vmem>>, vector<1x128x128xf32>
    %89 = vector.shape_cast %88 : vector<1x128x128xf32> to vector<128x128xf32>
    %cst_63 = arith.constant dense<0.000000e+00> : vector<8x128xf32>
    %90 = tpu.matmul %30, %89, %cst_63 {dimension_numbers = #tpu.dot_dimension_numbers<[1], [0], [0], [1], [0, 0, 1, 1], [], []>} : vector<8x128xf32>, vector<128x128xf32>, vector<8x128xf32> -> vector<8x128xf32>
    %c1_64 = arith.constant 1 : index
    %c0_65 = arith.constant 0 : index
    %c0_66 = arith.constant 0 : index
    %91 = vector.load %arg12[%c1_64, %c0_65, %c0_66] : memref<2x1x128xf32, #tpu.memory_space<vmem>>, vector<1x1x128xf32>
    %92 = vector.shape_cast %91 : vector<1x1x128xf32> to vector<1x128xf32>
    %93 = vector.broadcast %92 : vector<1x128xf32> to vector<8x128xf32>
    %94 = arith.addf %90, %93 : vector<8x128xf32>
    %cst_67 = arith.constant dense<0.000000e+00> : vector<8x8xf32>
    %95 = tpu.matmul %80, %87, %cst_67 {dimension_numbers = #tpu.dot_dimension_numbers<[1], [1], [0], [0], [0, 0, 1, 0], [], []>} : vector<8x128xf32>, vector<8x128xf32>, vector<8x8xf32> -> vector<8x8xf32>
    %cst_68 = arith.constant 2.000000e-01 : f32
    %96 = vector.broadcast %cst_68 : f32 to vector<8x8xf32>
    %97 = arith.mulf %95, %96 : vector<8x8xf32>
    %cst_69 = arith.constant 0.000000e+00 : f32
    %98 = vector.broadcast %cst_69 : f32 to vector<8x8xf32>
    %99 = arith.cmpf oeq, %3, %98 : vector<8x8xf32>
    %cst_70 = arith.constant -1.000000e+09 : f32
    %100 = vector.broadcast %cst_70 : f32 to vector<8x8xf32>
    %101 = arith.select %99, %100, %97 : vector<8x8xi1>, vector<8x8xf32>
    %cst_71 = arith.constant dense<0xFF800000> : vector<8xf32>
    %102 = vector.multi_reduction <maximumf>, %101, %cst_71 [1] : vector<8x8xf32> to vector<8xf32>
    %103 = vector.shape_cast %102 : vector<8xf32> to vector<8x1xf32>
    %104 = vector.broadcast %103 : vector<8x1xf32> to vector<8x8xf32>
    %105 = arith.subf %101, %104 : vector<8x8xf32>
    %106 = math.exp %105 : vector<8x8xf32>
    %cst_72 = arith.constant dense<0.000000e+00> : vector<8xf32>
    %107 = vector.multi_reduction <add>, %106, %cst_72 [1] : vector<8x8xf32> to vector<8xf32>
    %108 = vector.shape_cast %107 : vector<8xf32> to vector<8x1xf32>
    %109 = vector.broadcast %108 : vector<8x1xf32> to vector<8x8xf32>
    %110 = arith.divf %106, %109 : vector<8x8xf32>
    %cst_73 = arith.constant dense<0.000000e+00> : vector<8x128xf32>
    %111 = tpu.matmul %110, %94, %cst_73 {dimension_numbers = #tpu.dot_dimension_numbers<[1], [0], [0], [1], [0, 0, 1, 1], [], []>} : vector<8x8xf32>, vector<8x128xf32>, vector<8x128xf32> -> vector<8x128xf32>
    %c1_74 = arith.constant 1 : index
    %c0_75 = arith.constant 0 : index
    %c0_76 = arith.constant 0 : index
    %112 = vector.load %arg13[%c1_74, %c0_75, %c0_76] : memref<2x128x128xf32, #tpu.memory_space<vmem>>, vector<1x128x128xf32>
    %113 = vector.shape_cast %112 : vector<1x128x128xf32> to vector<128x128xf32>
    %cst_77 = arith.constant dense<0.000000e+00> : vector<8x128xf32>
    %114 = tpu.matmul %111, %113, %cst_77 {dimension_numbers = #tpu.dot_dimension_numbers<[1], [0], [0], [1], [0, 0, 1, 1], [], []>} : vector<8x128xf32>, vector<128x128xf32>, vector<8x128xf32> -> vector<8x128xf32>
    %115 = arith.addf %73, %114 : vector<8x128xf32>
    %c0_78 = arith.constant 0 : index
    %c0_79 = arith.constant 0 : index
    %116 = vector.load %arg14[%c0_78, %c0_79] : memref<1x128xf32, #tpu.memory_space<vmem>>, vector<1x128xf32>
    %117 = vector.broadcast %116 : vector<1x128xf32> to vector<8x128xf32>
    %118 = arith.addf %115, %117 : vector<8x128xf32>
    %119 = arith.addf %1, %118 : vector<8x128xf32>
    %c0_80 = arith.constant 0 : index
    %c0_81 = arith.constant 0 : index
    %120 = vector.load %arg5[%c0_80, %c0_81] : memref<1x128xf32, #tpu.memory_space<vmem>>, vector<1x128xf32>
    %c0_82 = arith.constant 0 : index
    %c0_83 = arith.constant 0 : index
    %121 = vector.load %arg6[%c0_82, %c0_83] : memref<1x128xf32, #tpu.memory_space<vmem>>, vector<1x128xf32>
    %cst_84 = arith.constant dense<0.000000e+00> : vector<8xf32>
    %122 = vector.multi_reduction <add>, %119, %cst_84 [1] : vector<8x128xf32> to vector<8xf32>
    %123 = vector.shape_cast %122 : vector<8xf32> to vector<8x1xf32>
    %cst_85 = arith.constant 2.000000e-02 : f32
    %124 = vector.broadcast %cst_85 : f32 to vector<8x1xf32>
    %125 = arith.mulf %123, %124 : vector<8x1xf32>
    %126 = vector.broadcast %125 : vector<8x1xf32> to vector<8x128xf32>
    %127 = arith.subf %119, %126 : vector<8x128xf32>
    %cst_86 = arith.constant 0.000000e+00 : f32
    %128 = vector.broadcast %cst_86 : f32 to vector<8x128xf32>
    %129 = arith.select %6, %127, %128 : vector<8x128xi1>, vector<8x128xf32>
    %130 = arith.mulf %129, %129 : vector<8x128xf32>
    %cst_87 = arith.constant dense<0.000000e+00> : vector<8xf32>
    %131 = vector.multi_reduction <add>, %130, %cst_87 [1] : vector<8x128xf32> to vector<8xf32>
    %132 = vector.shape_cast %131 : vector<8xf32> to vector<8x1xf32>
    %cst_88 = arith.constant 0.0204081628 : f32
    %133 = vector.broadcast %cst_88 : f32 to vector<8x1xf32>
    %134 = arith.mulf %132, %133 : vector<8x1xf32>
    %135 = math.sqrt %134 : vector<8x1xf32>
    %136 = vector.broadcast %120 : vector<1x128xf32> to vector<8x128xf32>
    %137 = arith.mulf %136, %129 : vector<8x128xf32>
    %cst_89 = arith.constant 9.99999997E-7 : f32
    %138 = vector.broadcast %cst_89 : f32 to vector<8x1xf32>
    %139 = arith.addf %135, %138 : vector<8x1xf32>
    %140 = vector.broadcast %139 : vector<8x1xf32> to vector<8x128xf32>
    %141 = arith.divf %137, %140 : vector<8x128xf32>
    %142 = vector.broadcast %121 : vector<1x128xf32> to vector<8x128xf32>
    %143 = arith.addf %141, %142 : vector<8x128xf32>
    %c0_90 = arith.constant 0 : index
    %c0_91 = arith.constant 0 : index
    %144 = vector.load %arg15[%c0_90, %c0_91] : memref<128x2048xf32, #tpu.memory_space<vmem>>, vector<128x2048xf32>
    %cst_92 = arith.constant dense<0.000000e+00> : vector<8x2048xf32>
    %145 = tpu.matmul %143, %144, %cst_92 {dimension_numbers = #tpu.dot_dimension_numbers<[1], [0], [0], [1], [0, 0, 1, 1], [], []>} : vector<8x128xf32>, vector<128x2048xf32>, vector<8x2048xf32> -> vector<8x2048xf32>
    %c0_93 = arith.constant 0 : index
    %c0_94 = arith.constant 0 : index
    %146 = vector.load %arg16[%c0_93, %c0_94] : memref<1x2048xf32, #tpu.memory_space<vmem>>, vector<1x2048xf32>
    %147 = vector.broadcast %146 : vector<1x2048xf32> to vector<8x2048xf32>
    %148 = arith.addf %145, %147 : vector<8x2048xf32>
    %cst_95 = arith.constant 0.000000e+00 : f32
    %149 = vector.broadcast %cst_95 : f32 to vector<8x2048xf32>
    %150 = arith.maximumf %148, %149 : vector<8x2048xf32>
    %c0_96 = arith.constant 0 : index
    %c0_97 = arith.constant 0 : index
    %151 = vector.load %arg17[%c0_96, %c0_97] : memref<2048x128xf32, #tpu.memory_space<vmem>>, vector<2048x128xf32>
    %cst_98 = arith.constant dense<0.000000e+00> : vector<8x128xf32>
    %152 = tpu.matmul %150, %151, %cst_98 {dimension_numbers = #tpu.dot_dimension_numbers<[1], [0], [0], [1], [0, 0, 1, 1], [], []>} : vector<8x2048xf32>, vector<2048x128xf32>, vector<8x128xf32> -> vector<8x128xf32>
    %c0_99 = arith.constant 0 : index
    %c0_100 = arith.constant 0 : index
    %153 = vector.load %arg18[%c0_99, %c0_100] : memref<1x128xf32, #tpu.memory_space<vmem>>, vector<1x128xf32>
    %154 = vector.broadcast %153 : vector<1x128xf32> to vector<8x128xf32>
    %155 = arith.addf %152, %154 : vector<8x128xf32>
    %156 = arith.addf %119, %155 : vector<8x128xf32>
    %c0_101 = arith.constant 0 : index
    %c0_102 = arith.constant 0 : index
    %c0_103 = arith.constant 0 : index
    %157 = vector.load %arg19[%c0_101, %c0_102, %c0_103] : memref<1x8x128xf32, #tpu.memory_space<vmem>>, vector<1x8x128xf32>
    %158 = vector.shape_cast %157 : vector<1x8x128xf32> to vector<8x128xf32>
    %159 = vector.shape_cast %156 : vector<8x128xf32> to vector<1x8x128xf32>
    tpu.vector_store %arg19[%c0_101, %c0_102, %c0_103], %159 {strides = array<i32>} : memref<1x8x128xf32, #tpu.memory_space<vmem>>, vector<1x8x128xf32>,
    return
  }
  func.func @transform_0(%arg0: i32) -> (i32, i32, i32) {
    %c0_i32 = arith.constant 0 : i32
    %c0_i32_0 = arith.constant 0 : i32
    %c0_i32_1 = arith.constant 0 : i32
    return %arg0, %c0_i32, %c0_i32_0 : i32, i32, i32
  }
  func.func @transform_1(%arg0: i32) -> (i32, i32, i32) {
    %c0_i32 = arith.constant 0 : i32
    %c0_i32_0 = arith.constant 0 : i32
    %c0_i32_1 = arith.constant 0 : i32
    return %arg0, %c0_i32, %c0_i32_0 : i32, i32, i32
  }
  func.func @transform_2(%arg0: i32) -> (i32, i32) {
    %c0_i32 = arith.constant 0 : i32
    %c0_i32_0 = arith.constant 0 : i32
    %c0_i32_1 = arith.constant 0 : i32
    return %c0_i32, %c0_i32_0 : i32, i32
  }
  func.func @transform_3(%arg0: i32) -> (i32, i32) {
    %c0_i32 = arith.constant 0 : i32
    %c0_i32_0 = arith.constant 0 : i32
    %c0_i32_1 = arith.constant 0 : i32
    return %c0_i32, %c0_i32_0 : i32, i32
  }
  func.func @transform_4(%arg0: i32) -> (i32, i32) {
    %c0_i32 = arith.constant 0 : i32
    %c0_i32_0 = arith.constant 0 : i32
    %c0_i32_1 = arith.constant 0 : i32
    return %c0_i32, %c0_i32_0 : i32, i32
  }
  func.func @transform_5(%arg0: i32) -> (i32, i32) {
    %c0_i32 = arith.constant 0 : i32
    %c0_i32_0 = arith.constant 0 : i32
    %c0_i32_1 = arith.constant 0 : i32
    return %c0_i32, %c0_i32_0 : i32, i32
  }
  func.func @transform_6(%arg0: i32) -> (i32, i32, i32) {
    %c0_i32 = arith.constant 0 : i32
    %c0_i32_0 = arith.constant 0 : i32
    %c0_i32_1 = arith.constant 0 : i32
    %c0_i32_2 = arith.constant 0 : i32
    return %c0_i32, %c0_i32_0, %c0_i32_1 : i32, i32, i32
  }
  func.func @transform_7(%arg0: i32) -> (i32, i32, i32) {
    %c0_i32 = arith.constant 0 : i32
    %c0_i32_0 = arith.constant 0 : i32
    %c0_i32_1 = arith.constant 0 : i32
    %c0_i32_2 = arith.constant 0 : i32
    return %c0_i32, %c0_i32_0, %c0_i32_1 : i32, i32, i32
  }
  func.func @transform_8(%arg0: i32) -> (i32, i32, i32) {
    %c0_i32 = arith.constant 0 : i32
    %c0_i32_0 = arith.constant 0 : i32
    %c0_i32_1 = arith.constant 0 : i32
    %c0_i32_2 = arith.constant 0 : i32
    return %c0_i32, %c0_i32_0, %c0_i32_1 : i32, i32, i32
  }
  func.func @transform_9(%arg0: i32) -> (i32, i32, i32) {
    %c0_i32 = arith.constant 0 : i32
    %c0_i32_0 = arith.constant 0 : i32
    %c0_i32_1 = arith.constant 0 : i32
    %c0_i32_2 = arith.constant 0 : i32
    return %c0_i32, %c0_i32_0, %c0_i32_1 : i32, i32, i32
  }
  func.func @transform_10(%arg0: i32) -> (i32, i32, i32) {
    %c0_i32 = arith.constant 0 : i32
    %c0_i32_0 = arith.constant 0 : i32
    %c0_i32_1 = arith.constant 0 : i32
    %c0_i32_2 = arith.constant 0 : i32
    return %c0_i32, %c0_i32_0, %c0_i32_1 : i32, i32, i32
  }
  func.func @transform_11(%arg0: i32) -> (i32, i32, i32) {
    %c0_i32 = arith.constant 0 : i32
    %c0_i32_0 = arith.constant 0 : i32
    %c0_i32_1 = arith.constant 0 : i32
    %c0_i32_2 = arith.constant 0 : i32
    return %c0_i32, %c0_i32_0, %c0_i32_1 : i32, i32, i32
  }
  func.func @transform_12(%arg0: i32) -> (i32, i32, i32) {
    %c0_i32 = arith.constant 0 : i32
    %c0_i32_0 = arith.constant 0 : i32
    %c0_i32_1 = arith.constant 0 : i32
    %c0_i32_2 = arith.constant 0 : i32
    return %c0_i32, %c0_i32_0, %c0_i32_1 : i32, i32, i32
  }
  func.func @transform_13(%arg0: i32) -> (i32, i32) {
    %c0_i32 = arith.constant 0 : i32
    %c0_i32_0 = arith.constant 0 : i32
    %c0_i32_1 = arith.constant 0 : i32
    return %c0_i32, %c0_i32_0 : i32, i32
  }
  func.func @transform_14(%arg0: i32) -> (i32, i32) {
    %c0_i32 = arith.constant 0 : i32
    %c0_i32_0 = arith.constant 0 : i32
    %c0_i32_1 = arith.constant 0 : i32
    return %c0_i32, %c0_i32_0 : i32, i32
  }
  func.func @transform_15(%arg0: i32) -> (i32, i32) {
    %c0_i32 = arith.constant 0 : i32
    %c0_i32_0 = arith.constant 0 : i32
    %c0_i32_1 = arith.constant 0 : i32
    return %c0_i32, %c0_i32_0 : i32, i32
  }
  func.func @transform_16(%arg0: i32) -> (i32, i32) {
    %c0_i32 = arith.constant 0 : i32
    %c0_i32_0 = arith.constant 0 : i32
    %c0_i32_1 = arith.constant 0 : i32
    return %c0_i32, %c0_i32_0 : i32, i32
  }
  func.func @transform_17(%arg0: i32) -> (i32, i32) {
    %c0_i32 = arith.constant 0 : i32
    %c0_i32_0 = arith.constant 0 : i32
    %c0_i32_1 = arith.constant 0 : i32
    return %c0_i32, %c0_i32_0 : i32, i32
  }
  func.func @transform_18(%arg0: i32) -> (i32, i32, i32) {
    %c0_i32 = arith.constant 0 : i32
    %c0_i32_0 = arith.constant 0 : i32
    %c0_i32_1 = arith.constant 0 : i32
    return %arg0, %c0_i32, %c0_i32_0 : i32, i32, i32
  }
}

</mosaic_0001>

<llo_original>
// kernel: tpu_custom_call.1
$region0: #{tpu_custom_call.1}
  #allocation0 [shape = 'u32[]', space=smem, size = 0x4, offset = 0x4, fixed_abs, tag = 'smem constant byte address 0x4 - core index']
  #allocation1 [shape = 'u32[144,128]{1,0:T(1,128)}', space=vmem, size = 0x12000, scoped, tag = 'internal scratch']
  %s0 = inlined_call_operand.hbm [shape: f32[2,8,128], index: 0, kind: input, shape index: {}]
  %s1 = inlined_call_operand.hbm [shape: f32[2,8,8], index: 1, kind: input, shape index: {}]
  %s2 = inlined_call_operand.vmem [shape: f32[1,128], index: 2, kind: input, shape index: {}]
  %s3 = inlined_call_operand.vmem [shape: f32[1,128], index: 3, kind: input, shape index: {}]
  %s4 = inlined_call_operand.vmem [shape: f32[1,128], index: 4, kind: input, shape index: {}]
  %s5 = inlined_call_operand.vmem [shape: f32[1,128], index: 5, kind: input, shape index: {}]
  %s6 = inlined_call_operand.hbm [shape: f32[2,128,128], index: 6, kind: input, shape index: {}]
  %s7 = inlined_call_operand.vmem [shape: f32[2,1,128], index: 7, kind: input, shape index: {}]
  %s8 = inlined_call_operand.hbm [shape: f32[2,128,128], index: 8, kind: input, shape index: {}]
  %s9 = inlined_call_operand.vmem [shape: f32[2,1,128], index: 9, kind: input, shape index: {}]
  %s10 = inlined_call_operand.hbm [shape: f32[2,128,128], index: 10, kind: input, shape index: {}]
  %s11 = inlined_call_operand.vmem [shape: f32[2,1,128], index: 11, kind: input, shape index: {}]
  %s12 = inlined_call_operand.hbm [shape: f32[2,128,128], index: 12, kind: input, shape index: {}]
  %s13 = inlined_call_operand.vmem [shape: f32[1,128], index: 13, kind: input, shape index: {}]
  %s14 = inlined_call_operand.hbm [shape: f32[128,2048], index: 14, kind: input, shape index: {}]
  %s15 = inlined_call_operand.vmem [shape: f32[1,2048], index: 15, kind: input, shape index: {}]
  %s16 = inlined_call_operand.hbm [shape: f32[2048,128], index: 16, kind: input, shape index: {}]
  %s17 = inlined_call_operand.vmem [shape: f32[1,128], index: 17, kind: input, shape index: {}]
  %s18 = inlined_call_operand.hbm [shape: f32[2,8,128], index: 18, kind: output, shape index: {}]
  %s19 = sld [smem:[#allocation0]]
  $region137: #{tpu_custom_call.1} parent=0
    _
  %s21 = ssub.s32 1, %s19
  %s22 = scalar_select 0, %s21, %s19
  $region1: #{tpu_custom_call.1} parent=0
    #allocation2 [shape = 'u8[8192]{0}', space=vmem, size = 0x2000, scoped, tag = 'input window, operand 0']
    #allocation3 [shape = 's32[2]{0}', space=sflag, size = 0x8, scoped, tag = 'scoped memory for tpu_custom_call.1']
    #allocation4 [shape = 's32[2]{0}', space=sflag, size = 0x8, scoped, tag = 'scoped memory for tpu_custom_call.1']
    #allocation5 [shape = 'u8[8192]{0}', space=vmem, size = 0x2000, scoped, tag = 'input window, operand 1']
    #allocation6 [shape = 's32[2]{0}', space=sflag, size = 0x8, scoped, tag = 'scoped memory for tpu_custom_call.1']
    #allocation7 [shape = 'u8[131072]{0}', space=vmem, size = 0x20000, scoped, tag = 'input window, operand 6, single buffered']
    #allocation8 [shape = 'u8[131072]{0}', space=vmem, size = 0x20000, scoped, tag = 'input window, operand 8, single buffered']
    #allocation9 [shape = 's32[1]{0}', space=sflag, size = 0x4, scoped, tag = 'scoped memory for tpu_custom_call.1']
    #allocation10 [shape = 'u8[131072]{0}', space=vmem, size = 0x20000, scoped, tag = 'input window, operand 10, single buffered']
    #allocation11 [shape = 'u8[131072]{0}', space=vmem, size = 0x20000, scoped, tag = 'input window, operand 12, single buffered']
    #allocation12 [shape = 's32[1]{0}', space=sflag, size = 0x4, scoped, tag = 'scoped memory for tpu_custom_call.1']
    #allocation13 [shape = 'u8[1048576]{0}', space=vmem, size = 0x100000, scoped, tag = 'input window, operand 14, single buffered']
    #allocation14 [shape = 'u8[1048576]{0}', space=vmem, size = 0x100000, scoped, tag = 'input window, operand 16, single buffered']
    #allocation15 [shape = 's32[1]{0}', space=sflag, size = 0x4, scoped, tag = 'scoped memory for tpu_custom_call.1']
    #allocation16 [shape = 'u8[8192]{0}', space=vmem, size = 0x2000, scoped, tag = 'output window, operand 0']
    %23 = vsyncpa [#allocation3], 0
    %s24 = scalar_lea.sflag [#allocation3], 1
    %25 = vsyncpa %s24, 0
    %26 = vsyncpa [#allocation6], 0
    %s27 = scalar_lea.sflag [#allocation6], 1
    %28 = vsyncpa %s27, 0
    %29 = vsyncpa [#allocation9], 0
    %30 = vsyncpa [#allocation12], 0
    %31 = vsyncpa [#allocation15], 0
    %32 = vsyncpa [#allocation4], 0
    %s33 = scalar_lea.sflag [#allocation4], 1
    %34 = vsyncpa %s33, 0
    loop: start=0, step=1, limit=4
    $region2: #{tpu_custom_call.1} parent=1 // loop_pre_header
      _
    $region3: #{tpu_custom_call.1} parent=1 // loop_header
      %s36 = sphi 0, %s40
      %p37 = scmp.ge.s32.totalorder %s36, 4
      %s46 = sphi 0, %s48
      %s49 = sphi 0, %s46
      %s50 = sphi 0, %s49
      %s66 = sphi 0, %s50
      %s72 = sphi 0, %s74
      %s75 = sphi 0, %s72
      %s76 = sphi 0, %s75
      %s92 = sphi 0, %s76
      %s96 = sphi 0, %s96
      %s98 = sphi 0, %s96
      %s99 = sphi 0, %s98
      %s113 = sphi 0, %s99
      %s117 = sphi 0, %s117
      %s119 = sphi 0, %s117
      %s120 = sphi 0, %s119
      %s134 = sphi 0, %s120
      %s138 = sphi 0, %s138
      %s140 = sphi 0, %s138
      %s141 = sphi 0, %s140
      %s155 = sphi 0, %s141
      %s159 = sphi 0, %s159
      %s161 = sphi 0, %s159
      %s162 = sphi 0, %s161
      %s176 = sphi 0, %s162
      %s180 = sphi 0, %s180
      %s182 = sphi 0, %s180
      %s183 = sphi 0, %s182
      %s197 = sphi 0, %s183
      %s201 = sphi 0, %s201
      %s203 = sphi 0, %s201
      %s204 = sphi 0, %s203
      %s218 = sphi 0, %s204
      %s222 = sphi 0, %s222
      %s224 = sphi 0, %s222
      %s225 = sphi 0, %s224
      %s239 = sphi 0, %s225
      %s243 = sphi 0, %s243
      %s245 = sphi 0, %s243
      %s246 = sphi 0, %s245
      %s260 = sphi 0, %s246
      %s264 = sphi 0, %s264
      %s266 = sphi 0, %s264
      %s267 = sphi 0, %s266
      %s281 = sphi 0, %s267
      %s285 = sphi 0, %s285
      %s287 = sphi 0, %s285
      %s288 = sphi 0, %s287
      %s302 = sphi 0, %s288
      %s306 = sphi 0, %s306
      %s308 = sphi 0, %s306
      %s309 = sphi 0, %s308
      %s323 = sphi 0, %s309
      %s327 = sphi 0, %s327
      %s329 = sphi 0, %s327
      %s330 = sphi 0, %s329
      %s344 = sphi 0, %s330
      %s348 = sphi 0, %s348
      %s350 = sphi 0, %s348
      %s351 = sphi 0, %s350
      %s365 = sphi 0, %s351
      %s369 = sphi 0, %s369
      %s371 = sphi 0, %s369
      %s372 = sphi 0, %s371
      %s386 = sphi 0, %s372
      %s390 = sphi 0, %s390
      %s392 = sphi 0, %s390
      %s393 = sphi 0, %s392
      %s407 = sphi 0, %s393
      %s411 = sphi 0, %s411
      %s413 = sphi 0, %s411
      %s414 = sphi 0, %s413
      %s428 = sphi 0, %s414
      %s434 = sphi 0, %s436
      %s437 = sphi 0, %s434
      %s438 = sphi 0, %s437
      %s454 = sphi 0, %s438
    $region4: #{tpu_custom_call.1} parent=1 // loop_header_branch
      %39 = sbr.rel (%p37) target = $region8
    $region5: #{tpu_custom_call.1} parent=1 // loop_body
      %s41 = ssub.s32 %s36, 1
      %s42 = ssub.s32 %s36, 2
      %s43 = sadd.s32 %s36, 1
      %s44 = ssub.s32 %s36, %s43
      %p45 = scmp.eq.s32.totalorder %s44, 0
      %s47 = sadd.s32 %s46, 1
      %s48 = scalar_select %p45, %s46, %s47
      %p51 = pneg %p45
      %p52 = scmp.eq.s32.totalorder %s36, 1
      %p53 = por %p51, %p52
      %p54 = scmp.ne.s32.totalorder %s46, %s49
      %p55 = scmp.eq.s32.totalorder %s36, 0
      %p56 = por %p54, %p55
      %p57 = scmp.ne.s32.totalorder %s46, %s49
      %p58 = scmp.eq.s32.totalorder %s41, 1
      %p59 = por %p57, %p58
      %p60 = scmp.ne.s32.totalorder %s49, %s50
      %p61 = scmp.eq.s32.totalorder %s41, 0
      %p62 = por %p60, %p61
      %p63 = scmp.ne.s32.totalorder %s49, %s50
      %p64 = scmp.eq.s32.totalorder %s42, 1
      %p65 = por %p63, %p64
      %p67 = scmp.ne.s32.totalorder %s50, %s66
      %p68 = scmp.eq.s32.totalorder %s42, 0
      %p69 = por %p67, %p68
      %s70 = ssub.s32 %s36, %s43
      %p71 = scmp.eq.s32.totalorder %s70, 0
      %s73 = sadd.s32 %s72, 1
      %s74 = scalar_select %p71, %s72, %s73
      %p77 = pneg %p71
      %p78 = scmp.eq.s32.totalorder %s36, 1
      %p79 = por %p77, %p78
      %p80 = scmp.ne.s32.totalorder %s72, %s75
      %p81 = scmp.eq.s32.totalorder %s36, 0
      %p82 = por %p80, %p81
      %p83 = scmp.ne.s32.totalorder %s72, %s75
      %p84 = scmp.eq.s32.totalorder %s41, 1
      %p85 = por %p83, %p84
      %p86 = scmp.ne.s32.totalorder %s75, %s76
      %p87 = scmp.eq.s32.totalorder %s41, 0
      %p88 = por %p86, %p87
      %p89 = scmp.ne.s32.totalorder %s75, %s76
      %p90 = scmp.eq.s32.totalorder %s42, 1
      %p91 = por %p89, %p90
      %p93 = scmp.ne.s32.totalorder %s76, %s92
      %p94 = scmp.eq.s32.totalorder %s42, 0
      %p95 = por %p93, %p94
      %s97 = sadd.s32 %s96, 1
      %p100 = scmp.eq.s32.totalorder %s36, 1
      %p101 = scmp.ne.s32.totalorder %s96, %s98
      %p102 = scmp.eq.s32.totalorder %s36, 0
      %p103 = por %p101, %p102
      %p104 = scmp.ne.s32.totalorder %s96, %s98
      %p105 = scmp.eq.s32.totalorder %s41, 1
      %p106 = por %p104, %p105
      %p107 = scmp.ne.s32.totalorder %s98, %s99
      %p108 = scmp.eq.s32.totalorder %s41, 0
      %p109 = por %p107, %p108
      %p110 = scmp.ne.s32.totalorder %s98, %s99
      %p111 = scmp.eq.s32.totalorder %s42, 1
      %p112 = por %p110, %p111
      %p114 = scmp.ne.s32.totalorder %s99, %s113
      %p115 = scmp.eq.s32.totalorder %s42, 0
      %p116 = por %p114, %p115
      %s118 = sadd.s32 %s117, 1
      %p121 = scmp.eq.s32.totalorder %s36, 1
      %p122 = scmp.ne.s32.totalorder %s117, %s119
      %p123 = scmp.eq.s32.totalorder %s36, 0
      %p124 = por %p122, %p123
      %p125 = scmp.ne.s32.totalorder %s117, %s119
      %p126 = scmp.eq.s32.totalorder %s41, 1
      %p127 = por %p125, %p126
      %p128 = scmp.ne.s32.totalorder %s119, %s120
      %p129 = scmp.eq.s32.totalorder %s41, 0
      %p130 = por %p128, %p129
      %p131 = scmp.ne.s32.totalorder %s119, %s120
      %p132 = scmp.eq.s32.totalorder %s42, 1
      %p133 = por %p131, %p132
      %p135 = scmp.ne.s32.totalorder %s120, %s134
      %p136 = scmp.eq.s32.totalorder %s42, 0
      %p137 = por %p135, %p136
      %s139 = sadd.s32 %s138, 1
      %p142 = scmp.eq.s32.totalorder %s36, 1
      %p143 = scmp.ne.s32.totalorder %s138, %s140
      %p144 = scmp.eq.s32.totalorder %s36, 0
      %p145 = por %p143, %p144
      %p146 = scmp.ne.s32.totalorder %s138, %s140
      %p147 = scmp.eq.s32.totalorder %s41, 1
      %p148 = por %p146, %p147
      %p149 = scmp.ne.s32.totalorder %s140, %s141
      %p150 = scmp.eq.s32.totalorder %s41, 0
      %p151 = por %p149, %p150
      %p152 = scmp.ne.s32.totalorder %s140, %s141
      %p153 = scmp.eq.s32.totalorder %s42, 1
      %p154 = por %p152, %p153
      %p156 = scmp.ne.s32.totalorder %s141, %s155
      %p157 = scmp.eq.s32.totalorder %s42, 0
      %p158 = por %p156, %p157
      %s160 = sadd.s32 %s159, 1
      %p163 = scmp.eq.s32.totalorder %s36, 1
      %p164 = scmp.ne.s32.totalorder %s159, %s161
      %p165 = scmp.eq.s32.totalorder %s36, 0
      %p166 = por %p164, %p165
      %p167 = scmp.ne.s32.totalorder %s159, %s161
      %p168 = scmp.eq.s32.totalorder %s41, 1
      %p169 = por %p167, %p168
      %p170 = scmp.ne.s32.totalorder %s161, %s162
      %p171 = scmp.eq.s32.totalorder %s41, 0
      %p172 = por %p170, %p171
      %p173 = scmp.ne.s32.totalorder %s161, %s162
      %p174 = scmp.eq.s32.totalorder %s42, 1
      %p175 = por %p173, %p174
      %p177 = scmp.ne.s32.totalorder %s162, %s176
      %p178 = scmp.eq.s32.totalorder %s42, 0
      %p179 = por %p177, %p178
      %s181 = sadd.s32 %s180, 1
      %p184 = scmp.eq.s32.totalorder %s36, 1
      %p185 = scmp.ne.s32.totalorder %s180, %s182
      %p186 = scmp.eq.s32.totalorder %s36, 0
      %p187 = por %p185, %p186
      %p188 = scmp.ne.s32.totalorder %s180, %s182
      %p189 = scmp.eq.s32.totalorder %s41, 1
      %p190 = por %p188, %p189
      %p191 = scmp.ne.s32.totalorder %s182, %s183
      %p192 = scmp.eq.s32.totalorder %s41, 0
      %p193 = por %p191, %p192
      %p194 = scmp.ne.s32.totalorder %s182, %s183
      %p195 = scmp.eq.s32.totalorder %s42, 1
      %p196 = por %p194, %p195
      %p198 = scmp.ne.s32.totalorder %s183, %s197
      %p199 = scmp.eq.s32.totalorder %s42, 0
      %p200 = por %p198, %p199
      %s202 = sadd.s32 %s201, 1
      %p205 = scmp.eq.s32.totalorder %s36, 1
      %p206 = scmp.ne.s32.totalorder %s201, %s203
      %p207 = scmp.eq.s32.totalorder %s36, 0
      %p208 = por %p206, %p207
      %p209 = scmp.ne.s32.totalorder %s201, %s203
      %p210 = scmp.eq.s32.totalorder %s41, 1
      %p211 = por %p209, %p210
      %p212 = scmp.ne.s32.totalorder %s203, %s204
      %p213 = scmp.eq.s32.totalorder %s41, 0
      %p214 = por %p212, %p213
      %p215 = scmp.ne.s32.totalorder %s203, %s204
      %p216 = scmp.eq.s32.totalorder %s42, 1
      %p217 = por %p215, %p216
      %p219 = scmp.ne.s32.totalorder %s204, %s218
      %p220 = scmp.eq.s32.totalorder %s42, 0
      %p221 = por %p219, %p220
      %s223 = sadd.s32 %s222, 1
      %p226 = scmp.eq.s32.totalorder %s36, 1
      %p227 = scmp.ne.s32.totalorder %s222, %s224
      %p228 = scmp.eq.s32.totalorder %s36, 0
      %p229 = por %p227, %p228
      %p230 = scmp.ne.s32.totalorder %s222, %s224
      %p231 = scmp.eq.s32.totalorder %s41, 1
      %p232 = por %p230, %p231
      %p233 = scmp.ne.s32.totalorder %s224, %s225
      %p234 = scmp.eq.s32.totalorder %s41, 0
      %p235 = por %p233, %p234
      %p236 = scmp.ne.s32.totalorder %s224, %s225
      %p237 = scmp.eq.s32.totalorder %s42, 1
      %p238 = por %p236, %p237
      %p240 = scmp.ne.s32.totalorder %s225, %s239
      %p241 = scmp.eq.s32.totalorder %s42, 0
      %p242 = por %p240, %p241
      %s244 = sadd.s32 %s243, 1
      %p247 = scmp.eq.s32.totalorder %s36, 1
      %p248 = scmp.ne.s32.totalorder %s243, %s245
      %p249 = scmp.eq.s32.totalorder %s36, 0
      %p250 = por %p248, %p249
      %p251 = scmp.ne.s32.totalorder %s243, %s245
      %p252 = scmp.eq.s32.totalorder %s41, 1
      %p253 = por %p251, %p252
      %p254 = scmp.ne.s32.totalorder %s245, %s246
      %p255 = scmp.eq.s32.totalorder %s41, 0
      %p256 = por %p254, %p255
      %p257 = scmp.ne.s32.totalorder %s245, %s246
      %p258 = scmp.eq.s32.totalorder %s42, 1
      %p259 = por %p257, %p258
      %p261 = scmp.ne.s32.totalorder %s246, %s260
      %p262 = scmp.eq.s32.totalorder %s42, 0
      %p263 = por %p261, %p262
      %s265 = sadd.s32 %s264, 1
      %p268 = scmp.eq.s32.totalorder %s36, 1
      %p269 = scmp.ne.s32.totalorder %s264, %s266
      %p270 = scmp.eq.s32.totalorder %s36, 0
      %p271 = por %p269, %p270
      %p272 = scmp.ne.s32.totalorder %s264, %s266
      %p273 = scmp.eq.s32.totalorder %s41, 1
      %p274 = por %p272, %p273
      %p275 = scmp.ne.s32.totalorder %s266, %s267
      %p276 = scmp.eq.s32.totalorder %s41, 0
      %p277 = por %p275, %p276
      %p278 = scmp.ne.s32.totalorder %s266, %s267
      %p279 = scmp.eq.s32.totalorder %s42, 1
      %p280 = por %p278, %p279
      %p282 = scmp.ne.s32.totalorder %s267, %s281
      %p283 = scmp.eq.s32.totalorder %s42, 0
      %p284 = por %p282, %p283
      %s286 = sadd.s32 %s285, 1
      %p289 = scmp.eq.s32.totalorder %s36, 1
      %p290 = scmp.ne.s32.totalorder %s285, %s287
      %p291 = scmp.eq.s32.totalorder %s36, 0
      %p292 = por %p290, %p291
      %p293 = scmp.ne.s32.totalorder %s285, %s287
      %p294 = scmp.eq.s32.totalorder %s41, 1
      %p295 = por %p293, %p294
      %p296 = scmp.ne.s32.totalorder %s287, %s288
      %p297 = scmp.eq.s32.totalorder %s41, 0
      %p298 = por %p296, %p297
      %p299 = scmp.ne.s32.totalorder %s287, %s288
      %p300 = scmp.eq.s32.totalorder %s42, 1
      %p301 = por %p299, %p300
      %p303 = scmp.ne.s32.totalorder %s288, %s302
      %p304 = scmp.eq.s32.totalorder %s42, 0
      %p305 = por %p303, %p304
      %s307 = sadd.s32 %s306, 1
      %p310 = scmp.eq.s32.totalorder %s36, 1
      %p311 = scmp.ne.s32.totalorder %s306, %s308
      %p312 = scmp.eq.s32.totalorder %s36, 0
      %p313 = por %p311, %p312
      %p314 = scmp.ne.s32.totalorder %s306, %s308
      %p315 = scmp.eq.s32.totalorder %s41, 1
      %p316 = por %p314, %p315
      %p317 = scmp.ne.s32.totalorder %s308, %s309
      %p318 = scmp.eq.s32.totalorder %s41, 0
      %p319 = por %p317, %p318
      %p320 = scmp.ne.s32.totalorder %s308, %s309
      %p321 = scmp.eq.s32.totalorder %s42, 1
      %p322 = por %p320, %p321
      %p324 = scmp.ne.s32.totalorder %s309, %s323
      %p325 = scmp.eq.s32.totalorder %s42, 0
      %p326 = por %p324, %p325
      %s328 = sadd.s32 %s327, 1
      %p331 = scmp.eq.s32.totalorder %s36, 1
      %p332 = scmp.ne.s32.totalorder %s327, %s329
      %p333 = scmp.eq.s32.totalorder %s36, 0
      %p334 = por %p332, %p333
      %p335 = scmp.ne.s32.totalorder %s327, %s329
      %p336 = scmp.eq.s32.totalorder %s41, 1
      %p337 = por %p335, %p336
      %p338 = scmp.ne.s32.totalorder %s329, %s330
      %p339 = scmp.eq.s32.totalorder %s41, 0
      %p340 = por %p338, %p339
      %p341 = scmp.ne.s32.totalorder %s329, %s330
      %p342 = scmp.eq.s32.totalorder %s42, 1
      %p343 = por %p341, %p342
      %p345 = scmp.ne.s32.totalorder %s330, %s344
      %p346 = scmp.eq.s32.totalorder %s42, 0
      %p347 = por %p345, %p346
      %s349 = sadd.s32 %s348, 1
      %p352 = scmp.eq.s32.totalorder %s36, 1
      %p353 = scmp.ne.s32.totalorder %s348, %s350
      %p354 = scmp.eq.s32.totalorder %s36, 0
      %p355 = por %p353, %p354
      %p356 = scmp.ne.s32.totalorder %s348, %s350
      %p357 = scmp.eq.s32.totalorder %s41, 1
      %p358 = por %p356, %p357
      %p359 = scmp.ne.s32.totalorder %s350, %s351
      %p360 = scmp.eq.s32.totalorder %s41, 0
      %p361 = por %p359, %p360
      %p362 = scmp.ne.s32.totalorder %s350, %s351
      %p363 = scmp.eq.s32.totalorder %s42, 1
      %p364 = por %p362, %p363
      %p366 = scmp.ne.s32.totalorder %s351, %s365
      %p367 = scmp.eq.s32.totalorder %s42, 0
      %p368 = por %p366, %p367
      %s370 = sadd.s32 %s369, 1
      %p373 = scmp.eq.s32.totalorder %s36, 1
      %p374 = scmp.ne.s32.totalorder %s369, %s371
      %p375 = scmp.eq.s32.totalorder %s36, 0
      %p376 = por %p374, %p375
      %p377 = scmp.ne.s32.totalorder %s369, %s371
      %p378 = scmp.eq.s32.totalorder %s41, 1
      %p379 = por %p377, %p378
      %p380 = scmp.ne.s32.totalorder %s371, %s372
      %p381 = scmp.eq.s32.totalorder %s41, 0
      %p382 = por %p380, %p381
      %p383 = scmp.ne.s32.totalorder %s371, %s372
      %p384 = scmp.eq.s32.totalorder %s42, 1
      %p385 = por %p383, %p384
      %p387 = scmp.ne.s32.totalorder %s372, %s386
      %p388 = scmp.eq.s32.totalorder %s42, 0
      %p389 = por %p387, %p388
      %s391 = sadd.s32 %s390, 1
      %p394 = scmp.eq.s32.totalorder %s36, 1
      %p395 = scmp.ne.s32.totalorder %s390, %s392
      %p396 = scmp.eq.s32.totalorder %s36, 0
      %p397 = por %p395, %p396
      %p398 = scmp.ne.s32.totalorder %s390, %s392
      %p399 = scmp.eq.s32.totalorder %s41, 1
      %p400 = por %p398, %p399
      %p401 = scmp.ne.s32.totalorder %s392, %s393
      %p402 = scmp.eq.s32.totalorder %s41, 0
      %p403 = por %p401, %p402
      %p404 = scmp.ne.s32.totalorder %s392, %s393
      %p405 = scmp.eq.s32.totalorder %s42, 1
      %p406 = por %p404, %p405
      %p408 = scmp.ne.s32.totalorder %s393, %s407
      %p409 = scmp.eq.s32.totalorder %s42, 0
      %p410 = por %p408, %p409
      %s412 = sadd.s32 %s411, 1
      %p415 = scmp.eq.s32.totalorder %s36, 1
      %p416 = scmp.ne.s32.totalorder %s411, %s413
      %p417 = scmp.eq.s32.totalorder %s36, 0
      %p418 = por %p416, %p417
      %p419 = scmp.ne.s32.totalorder %s411, %s413
      %p420 = scmp.eq.s32.totalorder %s41, 1
      %p421 = por %p419, %p420
      %p422 = scmp.ne.s32.totalorder %s413, %s414
      %p423 = scmp.eq.s32.totalorder %s41, 0
      %p424 = por %p422, %p423
      %p425 = scmp.ne.s32.totalorder %s413, %s414
      %p426 = scmp.eq.s32.totalorder %s42, 1
      %p427 = por %p425, %p426
      %p429 = scmp.ne.s32.totalorder %s414, %s428
      %p430 = scmp.eq.s32.totalorder %s42, 0
      %p431 = por %p429, %p430
      %s432 = ssub.s32 %s36, %s43
      %p433 = scmp.eq.s32.totalorder %s432, 0
      %s435 = sadd.s32 %s434, 1
      %s436 = scalar_select %p433, %s434, %s435
      %p439 = pneg %p433
      %p440 = scmp.eq.s32.totalorder %s36, 1
      %p441 = por %p439, %p440
      %p442 = scmp.ne.s32.totalorder %s434, %s437
      %p443 = scmp.eq.s32.totalorder %s36, 0
      %p444 = por %p442, %p443
      %p445 = scmp.ne.s32.totalorder %s434, %s437
      %p446 = scmp.eq.s32.totalorder %s41, 1
      %p447 = por %p445, %p446
      %p448 = scmp.ne.s32.totalorder %s437, %s438
      %p449 = scmp.eq.s32.totalorder %s41, 0
      %p450 = por %p448, %p449
      %p451 = scmp.ne.s32.totalorder %s437, %s438
      %p452 = scmp.eq.s32.totalorder %s42, 1
      %p453 = por %p451, %p452
      %p455 = scmp.ne.s32.totalorder %s438, %s454
      %p456 = scmp.eq.s32.totalorder %s42, 0
      %p457 = por %p455, %p456
      %p458 = scmp.le.s32.totalorder 1, %s36
      %p459 = scmp.lt.s32.totalorder %s36, 3
      %p460 = pnand %p458, %p459
      %p461 = pneg %p460
      // Predicated region
      $region9: #{tpu_custom_call.1} parent=5 // pred_check
        _
      $region10: #{tpu_custom_call.1} parent=5 // pred_check_branch
        %463 = sbr.rel (%p460) target = $region12
      $region11: #{tpu_custom_call.1} parent=5 // pred_region
        %s464 = ssub.s32 %s36, 1
        // Predicated region
        $region13: #{tpu_custom_call.1} parent=11 // pred_check
          %p465 = pneg %p109
        $region14: #{tpu_custom_call.1} parent=11 // pred_check_branch
          %467 = sbr.rel (%p465) target = $region16
        $region15: #{tpu_custom_call.1} parent=11 // pred_region
          _
        $region16: #{tpu_custom_call.1} parent=11 // pred_fallthru
          _
        // Predicated region
        $region17: #{tpu_custom_call.1} parent=11 // pred_check
          %p468 = pneg %p130
        $region18: #{tpu_custom_call.1} parent=11 // pred_check_branch
          %470 = sbr.rel (%p468) target = $region20
        $region19: #{tpu_custom_call.1} parent=11 // pred_region
          _
        $region20: #{tpu_custom_call.1} parent=11 // pred_fallthru
          _
        // Predicated region
        $region21: #{tpu_custom_call.1} parent=11 // pred_check
          %p471 = pneg %p151
        $region22: #{tpu_custom_call.1} parent=11 // pred_check_branch
          %473 = sbr.rel (%p471) target = $region24
        $region23: #{tpu_custom_call.1} parent=11 // pred_region
          _
        $region24: #{tpu_custom_call.1} parent=11 // pred_fallthru
          _
        // Predicated region
        $region25: #{tpu_custom_call.1} parent=11 // pred_check
          %p474 = pneg %p172
        $region26: #{tpu_custom_call.1} parent=11 // pred_check_branch
          %476 = sbr.rel (%p474) target = $region28
        $region27: #{tpu_custom_call.1} parent=11 // pred_region
          _
        $region28: #{tpu_custom_call.1} parent=11 // pred_fallthru
          _
        // Predicated region
        $region29: #{tpu_custom_call.1} parent=11 // pred_check
          %p477 = pneg %p193
        $region30: #{tpu_custom_call.1} parent=11 // pred_check_branch
          %479 = sbr.rel (%p477) target = $region32
        $region31: #{tpu_custom_call.1} parent=11 // pred_region
          %s481 = ssub.s32 4096, 4096
          %482 = vsyncadd [#allocation6], %s481
          %s483 = sshll.u32 [#allocation7], 4
          %s484 = int_to_ptr.vmem [resolvable:$true] %s483
          %489 = dma.hbm_to_vmem [thread:$0]  %s6, 4096, %s484, [#allocation6], 128, 128, 8
        $region32: #{tpu_custom_call.1} parent=11 // pred_fallthru
          _
        // Predicated region
        $region33: #{tpu_custom_call.1} parent=11 // pred_check
          %p490 = pneg %p214
        $region34: #{tpu_custom_call.1} parent=11 // pred_check_branch
          %492 = sbr.rel (%p490) target = $region36
        $region35: #{tpu_custom_call.1} parent=11 // pred_region
          _
        $region36: #{tpu_custom_call.1} parent=11 // pred_fallthru
          _
        // Predicated region
        $region37: #{tpu_custom_call.1} parent=11 // pred_check
          %p493 = pneg %p235
        $region38: #{tpu_custom_call.1} parent=11 // pred_check_branch
          %495 = sbr.rel (%p493) target = $region40
        $region39: #{tpu_custom_call.1} parent=11 // pred_region
          %s497 = ssub.s32 4096, 4096
          %498 = vsyncadd [#allocation9], %s497
          %s499 = sshll.u32 [#allocation8], 4
          %s500 = int_to_ptr.vmem [resolvable:$true] %s499
          %505 = dma.hbm_to_vmem [thread:$0]  %s8, 4096, %s500, [#allocation9], 128, 128, 8
        $region40: #{tpu_custom_call.1} parent=11 // pred_fallthru
          _
        // Predicated region
        $region41: #{tpu_custom_call.1} parent=11 // pred_check
          %p506 = pneg %p256
        $region42: #{tpu_custom_call.1} parent=11 // pred_check_branch
          %508 = sbr.rel (%p506) target = $region44
        $region43: #{tpu_custom_call.1} parent=11 // pred_region
          _
        $region44: #{tpu_custom_call.1} parent=11 // pred_fallthru
          _
        // Predicated region
        $region45: #{tpu_custom_call.1} parent=11 // pred_check
          %p509 = pneg %p277
        $region46: #{tpu_custom_call.1} parent=11 // pred_check_branch
          %511 = sbr.rel (%p509) target = $region48
        $region47: #{tpu_custom_call.1} parent=11 // pred_region
          %s513 = ssub.s32 4096, 4096
          %514 = vsyncadd [#allocation9], %s513
          %s515 = sshll.u32 [#allocation10], 4
          %s516 = int_to_ptr.vmem [resolvable:$true] %s515
          %521 = dma.hbm_to_vmem [thread:$0]  %s10, 4096, %s516, [#allocation9], 128, 128, 8
        $region48: #{tpu_custom_call.1} parent=11 // pred_fallthru
          _
        // Predicated region
        $region49: #{tpu_custom_call.1} parent=11 // pred_check
          %p522 = pneg %p298
        $region50: #{tpu_custom_call.1} parent=11 // pred_check_branch
          %524 = sbr.rel (%p522) target = $region52
        $region51: #{tpu_custom_call.1} parent=11 // pred_region
          _
        $region52: #{tpu_custom_call.1} parent=11 // pred_fallthru
          _
        // Predicated region
        $region53: #{tpu_custom_call.1} parent=11 // pred_check
          %p525 = pneg %p319
        $region54: #{tpu_custom_call.1} parent=11 // pred_check_branch
          %527 = sbr.rel (%p525) target = $region56
        $region55: #{tpu_custom_call.1} parent=11 // pred_region
          %s529 = ssub.s32 4096, 4096
          %530 = vsyncadd [#allocation12], %s529
          %s531 = sshll.u32 [#allocation11], 4
          %s532 = int_to_ptr.vmem [resolvable:$true] %s531
          %537 = dma.hbm_to_vmem [thread:$0]  %s12, 4096, %s532, [#allocation12], 128, 128, 8
        $region56: #{tpu_custom_call.1} parent=11 // pred_fallthru
          _
        // Predicated region
        $region57: #{tpu_custom_call.1} parent=11 // pred_check
          %p538 = pneg %p340
        $region58: #{tpu_custom_call.1} parent=11 // pred_check_branch
          %540 = sbr.rel (%p538) target = $region60
        $region59: #{tpu_custom_call.1} parent=11 // pred_region
          _
        $region60: #{tpu_custom_call.1} parent=11 // pred_fallthru
          _
        // Predicated region
        $region61: #{tpu_custom_call.1} parent=11 // pred_check
          %p541 = pneg %p361
        $region62: #{tpu_custom_call.1} parent=11 // pred_check_branch
          %543 = sbr.rel (%p541) target = $region64
        $region63: #{tpu_custom_call.1} parent=11 // pred_region
          %s545 = ssub.s32 32768, 32768
          %546 = vsyncadd [#allocation12], %s545
          %s547 = sshll.u32 [#allocation13], 4
          %s548 = int_to_ptr.vmem [resolvable:$true] %s547
          %553 = dma.hbm_to_vmem [thread:$0]  %s14, 32768, %s548, [#allocation12], 2048, 2048, 128
        $region64: #{tpu_custom_call.1} parent=11 // pred_fallthru
          _
        // Predicated region
        $region65: #{tpu_custom_call.1} parent=11 // pred_check
          %p554 = pneg %p382
        $region66: #{tpu_custom_call.1} parent=11 // pred_check_branch
          %556 = sbr.rel (%p554) target = $region68
        $region67: #{tpu_custom_call.1} parent=11 // pred_region
          _
        $region68: #{tpu_custom_call.1} parent=11 // pred_fallthru
          _
        // Predicated region
        $region69: #{tpu_custom_call.1} parent=11 // pred_check
          %p557 = pneg %p403
        $region70: #{tpu_custom_call.1} parent=11 // pred_check_branch
          %559 = sbr.rel (%p557) target = $region72
        $region71: #{tpu_custom_call.1} parent=11 // pred_region
          %s561 = ssub.s32 32768, 32768
          %562 = vsyncadd [#allocation15], %s561
          %s563 = sshll.u32 [#allocation14], 4
          %s564 = int_to_ptr.vmem [resolvable:$true] %s563
          %569 = dma.hbm_to_vmem [thread:$0]  %s16, 32768, %s564, [#allocation15], 128, 128, 8
        $region72: #{tpu_custom_call.1} parent=11 // pred_fallthru
          _
        // Predicated region
        $region73: #{tpu_custom_call.1} parent=11 // pred_check
          %p570 = pneg %p424
        $region74: #{tpu_custom_call.1} parent=11 // pred_check_branch
          %572 = sbr.rel (%p570) target = $region76
        $region75: #{tpu_custom_call.1} parent=11 // pred_region
          _
        $region76: #{tpu_custom_call.1} parent=11 // pred_fallthru
          _
      $region12: #{tpu_custom_call.1} parent=5 // pred_fallthru
        _
      %p573 = scmp.lt.s32.totalorder %s36, 2
      // Predicated region
      $region77: #{tpu_custom_call.1} parent=5 // pred_check
        %p574 = pneg %p573
      $region78: #{tpu_custom_call.1} parent=5 // pred_check_branch
        %576 = sbr.rel (%p574) target = $region80
      $region79: #{tpu_custom_call.1} parent=5 // pred_region
        // Predicated region
        $region81: #{tpu_custom_call.1} parent=79 // pred_check
          %p577 = pneg %p56
        $region82: #{tpu_custom_call.1} parent=79 // pred_check_branch
          %579 = sbr.rel (%p577) target = $region84
        $region83: #{tpu_custom_call.1} parent=79 // pred_region
          %s580 = sand.u32 %s46, 1
          %s581 = scalar_lea.sflag [#allocation3], %s580
          %s582 = sand.u32 %s46, 1
          %s583 = smul.addr %s582, 8
          %s584 = scalar_lea.vmem [#allocation2], %s583
          %s586 = ssub.s32 128, 128
          %587 = vsyncadd %s581, %s586
          %s588 = smul.addr %s36, 128
          %s589 = scalar_lea.hbm %s0, %s588
          %s591 = sshll.u32 %s584, 4
          %s592 = int_to_ptr.vmem [resolvable:$true] %s591
          %594 = dma.hbm_to_vmem [thread:$0]  %s589, 128, %s592, %s581
        $region84: #{tpu_custom_call.1} parent=79 // pred_fallthru
          _
        // Predicated region
        $region85: #{tpu_custom_call.1} parent=79 // pred_check
          %p595 = pneg %p82
        $region86: #{tpu_custom_call.1} parent=79 // pred_check_branch
          %597 = sbr.rel (%p595) target = $region88
        $region87: #{tpu_custom_call.1} parent=79 // pred_region
          %s598 = sand.u32 %s36, 1
          %s599 = scalar_lea.sflag [#allocation6], %s598
          %s600 = sand.u32 %s72, 1
          %s601 = smul.addr %s600, 8
          %s602 = scalar_lea.vmem [#allocation5], %s601
          %s604 = ssub.s32 128, 128
          %605 = vsyncadd %s599, %s604
          %s606 = smul.addr %s36, 128
          %s607 = scalar_lea.hbm %s1, %s606
          %s609 = sshll.u32 %s602, 4
          %s610 = int_to_ptr.vmem [resolvable:$true] %s609
          %612 = dma.hbm_to_vmem [thread:$0]  %s607, 128, %s610, %s599
        $region88: #{tpu_custom_call.1} parent=79 // pred_fallthru
          _
      $region80: #{tpu_custom_call.1} parent=5 // pred_fallthru
        _
      %p613 = scmp.le.s32.totalorder 1, %s36
      %p614 = scmp.lt.s32.totalorder %s36, 3
      %p615 = pnand %p613, %p614
      %p616 = pneg %p615
      // Predicated region
      $region89: #{tpu_custom_call.1} parent=5 // pred_check
        _
      $region90: #{tpu_custom_call.1} parent=5 // pred_check_branch
        %618 = sbr.rel (%p615) target = $region92
      $region91: #{tpu_custom_call.1} parent=5 // pred_region
        %s619 = ssub.s32 %s36, 1
        %s620 = sand.u32 %s49, 1
        %s621 = scalar_lea.sflag [#allocation3], %s620
        %s622 = sand.u32 %s49, 1
        %s623 = smul.addr %s622, 8
        %s624 = scalar_lea.vmem [#allocation2], %s623
        // Predicated region
        $region93: #{tpu_custom_call.1} parent=91 // pred_check
          %p625 = pneg %p62
        $region94: #{tpu_custom_call.1} parent=91 // pred_check_branch
          %627 = sbr.rel (%p625) target = $region96
        $region95: #{tpu_custom_call.1} parent=91 // pred_region
          %628 = dma.done %s621, 128
        $region96: #{tpu_custom_call.1} parent=91 // pred_fallthru
          _
        %s629 = sand.u32 %s41, 1
        %s630 = scalar_lea.sflag [#allocation6], %s629
        %s631 = sand.u32 %s75, 1
        %s632 = smul.addr %s631, 8
        %s633 = scalar_lea.vmem [#allocation5], %s632
        // Predicated region
        $region97: #{tpu_custom_call.1} parent=91 // pred_check
          %p634 = pneg %p88
        $region98: #{tpu_custom_call.1} parent=91 // pred_check_branch
          %636 = sbr.rel (%p634) target = $region100
        $region99: #{tpu_custom_call.1} parent=91 // pred_region
          %637 = dma.done %s630, 128
        $region100: #{tpu_custom_call.1} parent=91 // pred_fallthru
          _
        // Predicated region
        $region101: #{tpu_custom_call.1} parent=91 // pred_check
          %p638 = pneg %p193
        $region102: #{tpu_custom_call.1} parent=91 // pred_check_branch
          %640 = sbr.rel (%p638) target = $region104
        $region103: #{tpu_custom_call.1} parent=91 // pred_region
          %641 = dma.done [#allocation6], 4096
        $region104: #{tpu_custom_call.1} parent=91 // pred_fallthru
          _
        // Predicated region
        $region105: #{tpu_custom_call.1} parent=91 // pred_check
          %p642 = pneg %p235
        $region106: #{tpu_custom_call.1} parent=91 // pred_check_branch
          %644 = sbr.rel (%p642) target = $region108
        $region107: #{tpu_custom_call.1} parent=91 // pred_region
          %645 = dma.done [#allocation9], 4096
        $region108: #{tpu_custom_call.1} parent=91 // pred_fallthru
          _
        // Predicated region
        $region109: #{tpu_custom_call.1} parent=91 // pred_check
          %p646 = pneg %p277
        $region110: #{tpu_custom_call.1} parent=91 // pred_check_branch
          %648 = sbr.rel (%p646) target = $region112
        $region111: #{tpu_custom_call.1} parent=91 // pred_region
          %649 = dma.done [#allocation9], 4096
        $region112: #{tpu_custom_call.1} parent=91 // pred_fallthru
          _
        // Predicated region
        $region113: #{tpu_custom_call.1} parent=91 // pred_check
          %p650 = pneg %p319
        $region114: #{tpu_custom_call.1} parent=91 // pred_check_branch
          %652 = sbr.rel (%p650) target = $region116
        $region115: #{tpu_custom_call.1} parent=91 // pred_region
          %653 = dma.done [#allocation12], 4096
        $region116: #{tpu_custom_call.1} parent=91 // pred_fallthru
          _
        // Predicated region
        $region117: #{tpu_custom_call.1} parent=91 // pred_check
          %p654 = pneg %p361
        $region118: #{tpu_custom_call.1} parent=91 // pred_check_branch
          %656 = sbr.rel (%p654) target = $region120
        $region119: #{tpu_custom_call.1} parent=91 // pred_region
          %657 = dma.done [#allocation12], 32768
        $region120: #{tpu_custom_call.1} parent=91 // pred_fallthru
          _
        // Predicated region
        $region121: #{tpu_custom_call.1} parent=91 // pred_check
          %p658 = pneg %p403
        $region122: #{tpu_custom_call.1} parent=91 // pred_check_branch
          %660 = sbr.rel (%p658) target = $region124
        $region123: #{tpu_custom_call.1} parent=91 // pred_region
          %661 = dma.done [#allocation15], 32768
        $region124: #{tpu_custom_call.1} parent=91 // pred_fallthru
          _
        %s662 = sand.u32 %s49, 1
        %s663 = scalar_lea.sflag [#allocation3], %s662
        %s664 = sand.u32 %s49, 1
        %s665 = smul.addr %s664, 8
        %s666 = scalar_lea.vmem [#allocation2], %s665
        %p667 = pneg %p62
        %p668 = pneg %p59
        %s669 = sand.u32 %s41, 1
        %s670 = scalar_lea.sflag [#allocation6], %s669
        %s671 = sand.u32 %s75, 1
        %s672 = smul.addr %s671, 8
        %s673 = scalar_lea.vmem [#allocation5], %s672
        %p674 = pneg %p88
        %p675 = pneg %p85
        %p676 = pneg %p109
        %p677 = pneg %p106
        %p678 = pneg %p130
        %p679 = pneg %p127
        %p680 = pneg %p151
        %p681 = pneg %p148
        %p682 = pneg %p172
        %p683 = pneg %p169
        %p684 = pneg %p193
        %p685 = pneg %p190
        %p686 = pneg %p214
        %p687 = pneg %p211
        %p688 = pneg %p235
        %p689 = pneg %p232
        %p690 = pneg %p256
        %p691 = pneg %p253
        %p692 = pneg %p277
        %p693 = pneg %p274
        %p694 = pneg %p298
        %p695 = pneg %p295
        %p696 = pneg %p319
        %p697 = pneg %p316
        %p698 = pneg %p340
        %p699 = pneg %p337
        %p700 = pneg %p361
        %p701 = pneg %p358
        %p702 = pneg %p382
        %p703 = pneg %p379
        %p704 = pneg %p403
        %p705 = pneg %p400
        %p706 = pneg %p424
        %p707 = pneg %p421
        %p708 = pneg %p450
        %p709 = pneg %p447
        %s710 = sand.u32 %s437, 1
        %s711 = scalar_lea.sflag [#allocation4], %s710
        %s712 = sand.u32 %s437, 1
        %s713 = smul.addr %s712, 8
        %s714 = scalar_lea.vmem [#allocation16], %s713
        %v715 = vld [vmem:[%s624] sm:$0xff]
        %v716 = vld [vmem:[%s633] sm:$0xff]
        %v717 = vlaneseq
        %v718 = vand.u32 %v717, 127
        %vm719 = vcmp.lt.s32.totalorder %v718, 50
        %v720 = vld [vmem:[%s2] sm:$0x1]
        %v721 = vld [vmem:[%s3] sm:$0x1]
        %722 = vadd.xlane.f32.xlu0 %v715
        %v723 = vpop.xlane.xlu0 %722
        %v724 = vmul.f32 %v723, 0.02
        %v725 = vsub.f32 %v715, %v724
        %v726 = vsel %vm719, %v725, 0.0
        %v727 = vmul.f32 %v726, %v726
        %728 = vadd.xlane.f32.xlu0 %v727
        %v729 = vpop.xlane.xlu0 %728
        %v730 = vmul.f32 %v729, 0.020408163
        %v731 = vrsqrt.pop %v730
        %v732 = vmul.f32 %v730, %v731
        %vm733 = vcmp.eq.f32.partialorder %v730, inf
        %v734 = vsel %vm733, %v730, %v732
        %vm735 = vcmp.eq.f32.partialorder %v730, 0.0
        %v736 = vand.u32 %v730, 2147483648
        %v737 = vsel %vm735, %v736, %v734
        %v739 = vlaneseq
        %v740 = vshrl.u32 %v739, 7
        %v741 = vsub.s32 0, %v740
        %v742 = vrot.slane %v720, %v741
        %v744 = vmul.f32 %v742, %v726
        %v745 = vadd.f32 %v737, 1e-06
        %v746 = vrcp.pop %v745
        %v747 = vmul.f32 %v744, %v746
        %v749 = vlaneseq
        %v750 = vshrl.u32 %v749, 7
        %v751 = vsub.s32 0, %v750
        %v752 = vrot.slane %v721, %v751
        %v754 = vadd.f32 %v747, %v752
        %v755 = vld [vmem:[#allocation7] sm:$0xff]
        %v756 = vld [vmem:[#allocation7 + $0x8] sm:$0xff]
        %v757 = vld [vmem:[#allocation7 + $0x10] sm:$0xff]
        %v758 = vld [vmem:[#allocation7 + $0x18] sm:$0xff]
        %v759 = vld [vmem:[#allocation7 + $0x20] sm:$0xff]
        %v760 = vld [vmem:[#allocation7 + $0x28] sm:$0xff]
        %v761 = vld [vmem:[#allocation7 + $0x30] sm:$0xff]
        %v762 = vld [vmem:[#allocation7 + $0x38] sm:$0xff]
        %v763 = vld [vmem:[#allocation7 + $0x40] sm:$0xff]
        %v764 = vld [vmem:[#allocation7 + $0x48] sm:$0xff]
        %v765 = vld [vmem:[#allocation7 + $0x50] sm:$0xff]
        %v766 = vld [vmem:[#allocation7 + $0x58] sm:$0xff]
        %v767 = vld [vmem:[#allocation7 + $0x60] sm:$0xff]
        %v768 = vld [vmem:[#allocation7 + $0x68] sm:$0xff]
        %v769 = vld [vmem:[#allocation7 + $0x70] sm:$0xff]
        %v770 = vld [vmem:[#allocation7 + $0x78] sm:$0xff]
        %v771 = vld [vmem:[%s7] sm:$0x1]
        %v773 = vlaneseq
        %v774 = vshrl.u32 %v773, 7
        %v775 = vsub.s32 0, %v774
        %v776 = vrot.slane %v771, %v775
        %778 = vmatprep.subr.mxu0 0.0
        %779 = vmatpush1.msra.mxu0 %v755
        %780 = vmatprep.subr.mxu0 0.0
        %781 = vmatpush1.msra.mxu0 %v756
        %782 = vmatprep.subr.mxu0 0.0
        %783 = vmatpush1.msra.mxu0 %v757
        %784 = vmatprep.subr.mxu0 0.0
        %785 = vmatpush1.msra.mxu0 %v758
        %786 = vmatprep.subr.mxu0 0.0
        %787 = vmatpush1.msra.mxu0 %v759
        %788 = vmatprep.subr.mxu0 0.0
        %789 = vmatpush1.msra.mxu0 %v760
        %790 = vmatprep.subr.mxu0 0.0
        %791 = vmatpush1.msra.mxu0 %v761
        %792 = vmatprep.subr.mxu0 0.0
        %793 = vmatpush1.msra.mxu0 %v762
        %794 = vmatprep.subr.mxu0 0.0
        %795 = vmatpush1.msra.mxu0 %v763
        %796 = vmatprep.subr.mxu0 0.0
        %797 = vmatpush1.msra.mxu0 %v764
        %798 = vmatprep.subr.mxu0 0.0
        %799 = vmatpush1.msra.mxu0 %v765
        %800 = vmatprep.subr.mxu0 0.0
        %801 = vmatpush1.msra.mxu0 %v766
        %802 = vmatprep.subr.mxu0 0.0
        %803 = vmatpush1.msra.mxu0 %v767
        %804 = vmatprep.subr.mxu0 0.0
        %805 = vmatpush1.msra.mxu0 %v768
        %806 = vmatprep.subr.mxu0 0.0
        %807 = vmatpush1.msra.mxu0 %v769
        %808 = vmatprep.subr.mxu0 0.0
        %809 = vmatpush1.msra.mxu0 %v770
        %810 = vmatprep.subr.mxu0 0.0
        %811 = vmatpush1.msra.mxu0 0.0
        %812 = vmatprep.subr.mxu0 0.0
        %813 = vmatpush1.msra.mxu0 0.0
        %814 = vmatprep.subr.mxu0 0.0
        %815 = vmatpush1.msra.mxu0 0.0
        %816 = vmatprep.subr.mxu0 0.0
        %817 = vmatpush1.msra.mxu0 0.0
        %818 = vmatprep.subr.mxu0 0.0
        %819 = vmatpush1.msra.mxu0 0.0
        %820 = vmatprep.subr.mxu0 0.0
        %821 = vmatpush1.msra.mxu0 0.0
        %822 = vmatprep.subr.mxu0 0.0
        %823 = vmatpush1.msra.mxu0 0.0
        %824 = vmatprep.subr.mxu0 0.0
        %825 = vmatpush1.msra.mxu0 0.0
        %826 = vmatprep.subr.mxu0 0.0
        %827 = vmatpush1.msra.mxu0 0.0
        %828 = vmatprep.subr.mxu0 0.0
        %829 = vmatpush1.msra.mxu0 0.0
        %830 = vmatprep.subr.mxu0 0.0
        %831 = vmatpush1.msra.mxu0 0.0
        %832 = vmatprep.subr.mxu0 0.0
        %833 = vmatpush1.msra.mxu0 0.0
        %834 = vmatprep.subr.mxu0 0.0
        %835 = vmatpush1.msra.mxu0 0.0
        %836 = vmatprep.subr.mxu0 0.0
        %837 = vmatpush1.msra.mxu0 0.0
        %838 = vmatprep.subr.mxu0 0.0
        %839 = vmatpush1.msra.mxu0 0.0
        %840 = vmatprep.subr.mxu0 0.0
        %841 = vmatpush1.msra.mxu0 0.0
        %842 = vmatprep.mubr.f32.mxu0 0.0
        %843 = vmatmul.mubr.f32.gmra.mrb[0].mxu0 %v754
        %v844 = vpop.f32.mrb[0].mxu0
        %v845 = vadd.f32 %v776, %v844
        %v846 = vpop.f32.mrb[0].mxu0
        %847 = vdwg.mxu0
        %v848 = vld [vmem:[#allocation8] sm:$0xff]
        %v849 = vld [vmem:[#allocation8 + $0x8] sm:$0xff]
        %v850 = vld [vmem:[#allocation8 + $0x10] sm:$0xff]
        %v851 = vld [vmem:[#allocation8 + $0x18] sm:$0xff]
        %v852 = vld [vmem:[#allocation8 + $0x20] sm:$0xff]
        %v853 = vld [vmem:[#allocation8 + $0x28] sm:$0xff]
        %v854 = vld [vmem:[#allocation8 + $0x30] sm:$0xff]
        %v855 = vld [vmem:[#allocation8 + $0x38] sm:$0xff]
        %v856 = vld [vmem:[#allocation8 + $0x40] sm:$0xff]
        %v857 = vld [vmem:[#allocation8 + $0x48] sm:$0xff]
        %v858 = vld [vmem:[#allocation8 + $0x50] sm:$0xff]
        %v859 = vld [vmem:[#allocation8 + $0x58] sm:$0xff]
        %v860 = vld [vmem:[#allocation8 + $0x60] sm:$0xff]
        %v861 = vld [vmem:[#allocation8 + $0x68] sm:$0xff]
        %v862 = vld [vmem:[#allocation8 + $0x70] sm:$0xff]
        %v863 = vld [vmem:[#allocation8 + $0x78] sm:$0xff]
        %v864 = vld [vmem:[%s9] sm:$0x1]
        %v866 = vlaneseq
        %v867 = vshrl.u32 %v866, 7
        %v868 = vsub.s32 0, %v867
        %v869 = vrot.slane %v864, %v868
        %871 = vmatprep.subr.mxu0 0.0
        %872 = vmatpush1.msra.mxu0 %v848
        %873 = vmatprep.subr.mxu0 0.0
        %874 = vmatpush1.msra.mxu0 %v849
        %875 = vmatprep.subr.mxu0 0.0
        %876 = vmatpush1.msra.mxu0 %v850
        %877 = vmatprep.subr.mxu0 0.0
        %878 = vmatpush1.msra.mxu0 %v851
        %879 = vmatprep.subr.mxu0 0.0
        %880 = vmatpush1.msra.mxu0 %v852
        %881 = vmatprep.subr.mxu0 0.0
        %882 = vmatpush1.msra.mxu0 %v853
        %883 = vmatprep.subr.mxu0 0.0
        %884 = vmatpush1.msra.mxu0 %v854
        %885 = vmatprep.subr.mxu0 0.0
        %886 = vmatpush1.msra.mxu0 %v855
        %887 = vmatprep.subr.mxu0 0.0
        %888 = vmatpush1.msra.mxu0 %v856
        %889 = vmatprep.subr.mxu0 0.0
        %890 = vmatpush1.msra.mxu0 %v857
        %891 = vmatprep.subr.mxu0 0.0
        %892 = vmatpush1.msra.mxu0 %v858
        %893 = vmatprep.subr.mxu0 0.0
        %894 = vmatpush1.msra.mxu0 %v859
        %895 = vmatprep.subr.mxu0 0.0
        %896 = vmatpush1.msra.mxu0 %v860
        %897 = vmatprep.subr.mxu0 0.0
        %898 = vmatpush1.msra.mxu0 %v861
        %899 = vmatprep.subr.mxu0 0.0
        %900 = vmatpush1.msra.mxu0 %v862
        %901 = vmatprep.subr.mxu0 0.0
        %902 = vmatpush1.msra.mxu0 %v863
        %903 = vmatprep.subr.mxu0 0.0
        %904 = vmatpush1.msra.mxu0 0.0
        %905 = vmatprep.subr.mxu0 0.0
        %906 = vmatpush1.msra.mxu0 0.0
        %907 = vmatprep.subr.mxu0 0.0
        %908 = vmatpush1.msra.mxu0 0.0
        %909 = vmatprep.subr.mxu0 0.0
        %910 = vmatpush1.msra.mxu0 0.0
        %911 = vmatprep.subr.mxu0 0.0
        %912 = vmatpush1.msra.mxu0 0.0
        %913 = vmatprep.subr.mxu0 0.0
        %914 = vmatpush1.msra.mxu0 0.0
        %915 = vmatprep.subr.mxu0 0.0
        %916 = vmatpush1.msra.mxu0 0.0
        %917 = vmatprep.subr.mxu0 0.0
        %918 = vmatpush1.msra.mxu0 0.0
        %919 = vmatprep.subr.mxu0 0.0
        %920 = vmatpush1.msra.mxu0 0.0
        %921 = vmatprep.subr.mxu0 0.0
        %922 = vmatpush1.msra.mxu0 0.0
        %923 = vmatprep.subr.mxu0 0.0
        %924 = vmatpush1.msra.mxu0 0.0
        %925 = vmatprep.subr.mxu0 0.0
        %926 = vmatpush1.msra.mxu0 0.0
        %927 = vmatprep.subr.mxu0 0.0
        %928 = vmatpush1.msra.mxu0 0.0
        %929 = vmatprep.subr.mxu0 0.0
        %930 = vmatpush1.msra.mxu0 0.0
        %931 = vmatprep.subr.mxu0 0.0
        %932 = vmatpush1.msra.mxu0 0.0
        %933 = vmatprep.subr.mxu0 0.0
        %934 = vmatpush1.msra.mxu0 0.0
        %935 = vmatprep.mubr.f32.mxu0 0.0
        %936 = vmatmul.mubr.f32.gmra.mrb[0].mxu0 %v754
        %v937 = vpop.f32.mrb[0].mxu0
        %v938 = vadd.f32 %v869, %v937
        %v939 = vpop.f32.mrb[0].mxu0
        %940 = vdwg.mxu0
        %v941 = vld [vmem:[#allocation10] sm:$0xff]
        %v942 = vld [vmem:[#allocation10 + $0x8] sm:$0xff]
        %v943 = vld [vmem:[#allocation10 + $0x10] sm:$0xff]
        %v944 = vld [vmem:[#allocation10 + $0x18] sm:$0xff]
        %v945 = vld [vmem:[#allocation10 + $0x20] sm:$0xff]
        %v946 = vld [vmem:[#allocation10 + $0x28] sm:$0xff]
        %v947 = vld [vmem:[#allocation10 + $0x30] sm:$0xff]
        %v948 = vld [vmem:[#allocation10 + $0x38] sm:$0xff]
        %v949 = vld [vmem:[#allocation10 + $0x40] sm:$0xff]
        %v950 = vld [vmem:[#allocation10 + $0x48] sm:$0xff]
        %v951 = vld [vmem:[#allocation10 + $0x50] sm:$0xff]
        %v952 = vld [vmem:[#allocation10 + $0x58] sm:$0xff]
        %v953 = vld [vmem:[#allocation10 + $0x60] sm:$0xff]
        %v954 = vld [vmem:[#allocation10 + $0x68] sm:$0xff]
        %v955 = vld [vmem:[#allocation10 + $0x70] sm:$0xff]
        %v956 = vld [vmem:[#allocation10 + $0x78] sm:$0xff]
        %v957 = vld [vmem:[%s11] sm:$0x1]
        %v959 = vlaneseq
        %v960 = vshrl.u32 %v959, 7
        %v961 = vsub.s32 0, %v960
        %v962 = vrot.slane %v957, %v961
        %964 = vmatprep.subr.mxu0 0.0
        %965 = vmatpush1.msra.mxu0 %v941
        %966 = vmatprep.subr.mxu0 0.0
        %967 = vmatpush1.msra.mxu0 %v942
        %968 = vmatprep.subr.mxu0 0.0
        %969 = vmatpush1.msra.mxu0 %v943
        %970 = vmatprep.subr.mxu0 0.0
        %971 = vmatpush1.msra.mxu0 %v944
        %972 = vmatprep.subr.mxu0 0.0
        %973 = vmatpush1.msra.mxu0 %v945
        %974 = vmatprep.subr.mxu0 0.0
        %975 = vmatpush1.msra.mxu0 %v946
        %976 = vmatprep.subr.mxu0 0.0
        %977 = vmatpush1.msra.mxu0 %v947
        %978 = vmatprep.subr.mxu0 0.0
        %979 = vmatpush1.msra.mxu0 %v948
        %980 = vmatprep.subr.mxu0 0.0
        %981 = vmatpush1.msra.mxu0 %v949
        %982 = vmatprep.subr.mxu0 0.0
        %983 = vmatpush1.msra.mxu0 %v950
        %984 = vmatprep.subr.mxu0 0.0
        %985 = vmatpush1.msra.mxu0 %v951
        %986 = vmatprep.subr.mxu0 0.0
        %987 = vmatpush1.msra.mxu0 %v952
        %988 = vmatprep.subr.mxu0 0.0
        %989 = vmatpush1.msra.mxu0 %v953
        %990 = vmatprep.subr.mxu0 0.0
        %991 = vmatpush1.msra.mxu0 %v954
        %992 = vmatprep.subr.mxu0 0.0
        %993 = vmatpush1.msra.mxu0 %v955
        %994 = vmatprep.subr.mxu0 0.0
        %995 = vmatpush1.msra.mxu0 %v956
        %996 = vmatprep.subr.mxu0 0.0
        %997 = vmatpush1.msra.mxu0 0.0
        %998 = vmatprep.subr.mxu0 0.0
        %999 = vmatpush1.msra.mxu0 0.0
        %1000 = vmatprep.subr.mxu0 0.0
        %1001 = vmatpush1.msra.mxu0 0.0
        %1002 = vmatprep.subr.mxu0 0.0
        %1003 = vmatpush1.msra.mxu0 0.0
        %1004 = vmatprep.subr.mxu0 0.0
        %1005 = vmatpush1.msra.mxu0 0.0
        %1006 = vmatprep.subr.mxu0 0.0
        %1007 = vmatpush1.msra.mxu0 0.0
        %1008 = vmatprep.subr.mxu0 0.0
        %1009 = vmatpush1.msra.mxu0 0.0
        %1010 = vmatprep.subr.mxu0 0.0
        %1011 = vmatpush1.msra.mxu0 0.0
        %1012 = vmatprep.subr.mxu0 0.0
        %1013 = vmatpush1.msra.mxu0 0.0
        %1014 = vmatprep.subr.mxu0 0.0
        %1015 = vmatpush1.msra.mxu0 0.0
        %1016 = vmatprep.subr.mxu0 0.0
        %1017 = vmatpush1.msra.mxu0 0.0
        %1018 = vmatprep.subr.mxu0 0.0
        %1019 = vmatpush1.msra.mxu0 0.0
        %1020 = vmatprep.subr.mxu0 0.0
        %1021 = vmatpush1.msra.mxu0 0.0
        %1022 = vmatprep.subr.mxu0 0.0
        %1023 = vmatpush1.msra.mxu0 0.0
        %1024 = vmatprep.subr.mxu0 0.0
        %1025 = vmatpush1.msra.mxu0 0.0
        %1026 = vmatprep.subr.mxu0 0.0
        %1027 = vmatpush1.msra.mxu0 0.0
        %1028 = vmatprep.mubr.f32.mxu0 0.0
        %1029 = vmatmul.mubr.f32.gmra.mrb[0].mxu0 %v754
        %v1030 = vpop.f32.mrb[0].mxu0
        %v1031 = vadd.f32 %v962, %v1030
        %v1032 = vpop.f32.mrb[0].mxu0
        %1033 = vdwg.mxu0
        %1034 = vmatprep.subr.mxu0 0.0
        %1035 = vmatpush1.xpose.msra.mxu0 %v938
        %1036 = vmatprep.subr.mxu0 0.0
        %1037 = vmatpush1.xpose.msra.mxu0 0.0
        %1038 = vmatprep.subr.mxu0 0.0
        %1039 = vmatpush1.xpose.msra.mxu0 0.0
        %1040 = vmatprep.subr.mxu0 0.0
        %1041 = vmatpush1.xpose.msra.mxu0 0.0
        %1042 = vmatprep.subr.mxu0 0.0
        %1043 = vmatpush1.xpose.msra.mxu0 0.0
        %1044 = vmatprep.subr.mxu0 0.0
        %1045 = vmatpush1.xpose.msra.mxu0 0.0
        %1046 = vmatprep.subr.mxu0 0.0
        %1047 = vmatpush1.xpose.msra.mxu0 0.0
        %1048 = vmatprep.subr.mxu0 0.0
        %1049 = vmatpush1.xpose.msra.mxu0 0.0
        %1050 = vmatprep.subr.mxu0 0.0
        %1051 = vmatpush1.xpose.msra.mxu0 0.0
        %1052 = vmatprep.subr.mxu0 0.0
        %1053 = vmatpush1.xpose.msra.mxu0 0.0
        %1054 = vmatprep.subr.mxu0 0.0
        %1055 = vmatpush1.xpose.msra.mxu0 0.0
        %1056 = vmatprep.subr.mxu0 0.0
        %1057 = vmatpush1.xpose.msra.mxu0 0.0
        %1058 = vmatprep.subr.mxu0 0.0
        %1059 = vmatpush1.xpose.msra.mxu0 0.0
        %1060 = vmatprep.subr.mxu0 0.0
        %1061 = vmatpush1.xpose.msra.mxu0 0.0
        %1062 = vmatprep.subr.mxu0 0.0
        %1063 = vmatpush1.xpose.msra.mxu0 0.0
        %1064 = vmatprep.subr.mxu0 0.0
        %1065 = vmatpush1.xpose.msra.mxu0 0.0
        %1066 = vmatprep.subr.mxu0 0.0
        %1067 = vmatpush1.xpose.msra.mxu0 0.0
        %1068 = vmatprep.subr.mxu0 0.0
        %1069 = vmatpush1.xpose.msra.mxu0 0.0
        %1070 = vmatprep.subr.mxu0 0.0
        %1071 = vmatpush1.xpose.msra.mxu0 0.0
        %1072 = vmatprep.subr.mxu0 0.0
        %1073 = vmatpush1.xpose.msra.mxu0 0.0
        %1074 = vmatprep.subr.mxu0 0.0
        %1075 = vmatpush1.xpose.msra.mxu0 0.0
        %1076 = vmatprep.subr.mxu0 0.0
        %1077 = vmatpush1.xpose.msra.mxu0 0.0
        %1078 = vmatprep.subr.mxu0 0.0
        %1079 = vmatpush1.xpose.msra.mxu0 0.0
        %1080 = vmatprep.subr.mxu0 0.0
        %1081 = vmatpush1.xpose.msra.mxu0 0.0
        %1082 = vmatprep.subr.mxu0 0.0
        %1083 = vmatpush1.xpose.msra.mxu0 0.0
        %1084 = vmatprep.subr.mxu0 0.0
        %1085 = vmatpush1.xpose.msra.mxu0 0.0
        %1086 = vmatprep.subr.mxu0 0.0
        %1087 = vmatpush1.xpose.msra.mxu0 0.0
        %1088 = vmatprep.subr.mxu0 0.0
        %1089 = vmatpush1.xpose.msra.mxu0 0.0
        %1090 = vmatprep.subr.mxu0 0.0
        %1091 = vmatpush1.xpose.msra.mxu0 0.0
        %1092 = vmatprep.subr.mxu0 0.0
        %1093 = vmatpush1.xpose.msra.mxu0 0.0
        %1094 = vmatprep.subr.mxu0 0.0
        %1095 = vmatpush1.xpose.msra.mxu0 0.0
        %1096 = vmatprep.subr.mxu0 0.0
        %1097 = vmatpush1.xpose.msra.mxu0 0.0
        %1098 = vmatprep.mubr.f32.mxu0 0.0
        %1099 = vmatmul.mubr.f32.gmra.mrb[0].mxu0 %v845
        %v1100 = vpop.f32.mrb[0].mxu0
        %v1101 = vadd.f32 0.0, %v1100
        %v1102 = vpop.f32.mrb[0].mxu0
        %1103 = vdwg.mxu0
        %v1104 = vmul.f32 %v1101, 0.2
        %vm1105 = vcmp.eq.f32.partialorder %v716, 0.0
        %v1106 = vsel %vm1105, -1e+09, %v1104
        %vm1107 = vcmask 64512
        %v1108 = vsel %vm1107, %v1106, -inf
        %1109 = vmax.xlane.f32.xlu0 %v1108
        %v1110 = vpop.xlane.xlu0 %1109
        %v1111 = vsub.f32 %v1106, %v1110
        %v1112 = vmul.f32 %v1111, 1.442695
        %v1113 = vpow.pop %v1112
        %v1114 = vsel %vm1107, %v1113, 0.0
        %1115 = vadd.xlane.f32.xlu0 %v1114
        %v1116 = vpop.xlane.xlu0 %1115
        %v1117 = vrcp.pop %v1116
        %v1118 = vmul.f32 %v1113, %v1117
        %v1120 = vsel %vm1107, %v1118, 0
        %1122 = vmatprep.subr.mxu0 0.0
        %1123 = vmatpush1.msra.mxu0 %v1031
        %1124 = vmatprep.subr.mxu0 0.0
        %1125 = vmatpush1.msra.mxu0 0.0
        %1126 = vmatprep.subr.mxu0 0.0
        %1127 = vmatpush1.msra.mxu0 0.0
        %1128 = vmatprep.subr.mxu0 0.0
        %1129 = vmatpush1.msra.mxu0 0.0
        %1130 = vmatprep.subr.mxu0 0.0
        %1131 = vmatpush1.msra.mxu0 0.0
        %1132 = vmatprep.subr.mxu0 0.0
        %1133 = vmatpush1.msra.mxu0 0.0
        %1134 = vmatprep.subr.mxu0 0.0
        %1135 = vmatpush1.msra.mxu0 0.0
        %1136 = vmatprep.subr.mxu0 0.0
        %1137 = vmatpush1.msra.mxu0 0.0
        %1138 = vmatprep.subr.mxu0 0.0
        %1139 = vmatpush1.msra.mxu0 0.0
        %1140 = vmatprep.subr.mxu0 0.0
        %1141 = vmatpush1.msra.mxu0 0.0
        %1142 = vmatprep.subr.mxu0 0.0
        %1143 = vmatpush1.msra.mxu0 0.0
        %1144 = vmatprep.subr.mxu0 0.0
        %1145 = vmatpush1.msra.mxu0 0.0
        %1146 = vmatprep.subr.mxu0 0.0
        %1147 = vmatpush1.msra.mxu0 0.0
        %1148 = vmatprep.subr.mxu0 0.0
        %1149 = vmatpush1.msra.mxu0 0.0
        %1150 = vmatprep.subr.mxu0 0.0
        %1151 = vmatpush1.msra.mxu0 0.0
        %1152 = vmatprep.subr.mxu0 0.0
        %1153 = vmatpush1.msra.mxu0 0.0
        %1154 = vmatprep.subr.mxu0 0.0
        %1155 = vmatpush1.msra.mxu0 0.0
        %1156 = vmatprep.subr.mxu0 0.0
        %1157 = vmatpush1.msra.mxu0 0.0
        %1158 = vmatprep.subr.mxu0 0.0
        %1159 = vmatpush1.msra.mxu0 0.0
        %1160 = vmatprep.subr.mxu0 0.0
        %1161 = vmatpush1.msra.mxu0 0.0
        %1162 = vmatprep.subr.mxu0 0.0
        %1163 = vmatpush1.msra.mxu0 0.0
        %1164 = vmatprep.subr.mxu0 0.0
        %1165 = vmatpush1.msra.mxu0 0.0
        %1166 = vmatprep.subr.mxu0 0.0
        %1167 = vmatpush1.msra.mxu0 0.0
        %1168 = vmatprep.subr.mxu0 0.0
        %1169 = vmatpush1.msra.mxu0 0.0
        %1170 = vmatprep.subr.mxu0 0.0
        %1171 = vmatpush1.msra.mxu0 0.0
        %1172 = vmatprep.subr.mxu0 0.0
        %1173 = vmatpush1.msra.mxu0 0.0
        %1174 = vmatprep.subr.mxu0 0.0
        %1175 = vmatpush1.msra.mxu0 0.0
        %1176 = vmatprep.subr.mxu0 0.0
        %1177 = vmatpush1.msra.mxu0 0.0
        %1178 = vmatprep.subr.mxu0 0.0
        %1179 = vmatpush1.msra.mxu0 0.0
        %1180 = vmatprep.subr.mxu0 0.0
        %1181 = vmatpush1.msra.mxu0 0.0
        %1182 = vmatprep.subr.mxu0 0.0
        %1183 = vmatpush1.msra.mxu0 0.0
        %1184 = vmatprep.subr.mxu0 0.0
        %1185 = vmatpush1.msra.mxu0 0.0
        %1186 = vmatprep.mubr.f32.mxu0 0.0
        %1187 = vmatmul.mubr.f32.gmra.mrb[0].mxu0 %v1120
        %v1188 = vpop.f32.mrb[0].mxu0
        %v1189 = vadd.f32 0.0, %v1188
        %v1190 = vpop.f32.mrb[0].mxu0
        %1191 = vdwg.mxu0
        %v1192 = vld [vmem:[#allocation11] sm:$0xff]
        %v1193 = vld [vmem:[#allocation11 + $0x8] sm:$0xff]
        %v1194 = vld [vmem:[#allocation11 + $0x10] sm:$0xff]
        %v1195 = vld [vmem:[#allocation11 + $0x18] sm:$0xff]
        %v1196 = vld [vmem:[#allocation11 + $0x20] sm:$0xff]
        %v1197 = vld [vmem:[#allocation11 + $0x28] sm:$0xff]
        %v1198 = vld [vmem:[#allocation11 + $0x30] sm:$0xff]
        %v1199 = vld [vmem:[#allocation11 + $0x38] sm:$0xff]
        %v1200 = vld [vmem:[#allocation11 + $0x40] sm:$0xff]
        %v1201 = vld [vmem:[#allocation11 + $0x48] sm:$0xff]
        %v1202 = vld [vmem:[#allocation11 + $0x50] sm:$0xff]
        %v1203 = vld [vmem:[#allocation11 + $0x58] sm:$0xff]
        %v1204 = vld [vmem:[#allocation11 + $0x60] sm:$0xff]
        %v1205 = vld [vmem:[#allocation11 + $0x68] sm:$0xff]
        %v1206 = vld [vmem:[#allocation11 + $0x70] sm:$0xff]
        %v1207 = vld [vmem:[#allocation11 + $0x78] sm:$0xff]
        %s1208 = scalar_lea.vmem [#allocation7], 128
        %v1209 = vld [vmem:[%s1208] sm:$0xff]
        %v1210 = vld [vmem:[%s1208 + $0x8] sm:$0xff]
        %v1211 = vld [vmem:[%s1208 + $0x10] sm:$0xff]
        %v1212 = vld [vmem:[%s1208 + $0x18] sm:$0xff]
        %v1213 = vld [vmem:[%s1208 + $0x20] sm:$0xff]
        %v1214 = vld [vmem:[%s1208 + $0x28] sm:$0xff]
        %v1215 = vld [vmem:[%s1208 + $0x30] sm:$0xff]
        %v1216 = vld [vmem:[%s1208 + $0x38] sm:$0xff]
        %v1217 = vld [vmem:[%s1208 + $0x40] sm:$0xff]
        %v1218 = vld [vmem:[%s1208 + $0x48] sm:$0xff]
        %v1219 = vld [vmem:[%s1208 + $0x50] sm:$0xff]
        %v1220 = vld [vmem:[%s1208 + $0x58] sm:$0xff]
        %v1221 = vld [vmem:[%s1208 + $0x60] sm:$0xff]
        %v1222 = vld [vmem:[%s1208 + $0x68] sm:$0xff]
        %v1223 = vld [vmem:[%s1208 + $0x70] sm:$0xff]
        %v1224 = vld [vmem:[%s1208 + $0x78] sm:$0xff]
        %s1225 = scalar_lea.vmem %s7, 1
        %v1226 = vld [vmem:[%s1225] sm:$0x1]
        %v1228 = vlaneseq
        %v1229 = vshrl.u32 %v1228, 7
        %v1230 = vsub.s32 0, %v1229
        %v1231 = vrot.slane %v1226, %v1230
        %1233 = vmatprep.subr.mxu0 0.0
        %1234 = vmatpush1.msra.mxu0 %v1209
        %1235 = vmatprep.subr.mxu0 0.0
        %1236 = vmatpush1.msra.mxu0 %v1210
        %1237 = vmatprep.subr.mxu0 0.0
        %1238 = vmatpush1.msra.mxu0 %v1211
        %1239 = vmatprep.subr.mxu0 0.0
        %1240 = vmatpush1.msra.mxu0 %v1212
        %1241 = vmatprep.subr.mxu0 0.0
        %1242 = vmatpush1.msra.mxu0 %v1213
        %1243 = vmatprep.subr.mxu0 0.0
        %1244 = vmatpush1.msra.mxu0 %v1214
        %1245 = vmatprep.subr.mxu0 0.0
        %1246 = vmatpush1.msra.mxu0 %v1215
        %1247 = vmatprep.subr.mxu0 0.0
        %1248 = vmatpush1.msra.mxu0 %v1216
        %1249 = vmatprep.subr.mxu0 0.0
        %1250 = vmatpush1.msra.mxu0 %v1217
        %1251 = vmatprep.subr.mxu0 0.0
        %1252 = vmatpush1.msra.mxu0 %v1218
        %1253 = vmatprep.subr.mxu0 0.0
        %1254 = vmatpush1.msra.mxu0 %v1219
        %1255 = vmatprep.subr.mxu0 0.0
        %1256 = vmatpush1.msra.mxu0 %v1220
        %1257 = vmatprep.subr.mxu0 0.0
        %1258 = vmatpush1.msra.mxu0 %v1221
        %1259 = vmatprep.subr.mxu0 0.0
        %1260 = vmatpush1.msra.mxu0 %v1222
        %1261 = vmatprep.subr.mxu0 0.0
        %1262 = vmatpush1.msra.mxu0 %v1223
        %1263 = vmatprep.subr.mxu0 0.0
        %1264 = vmatpush1.msra.mxu0 %v1224
        %1265 = vmatprep.subr.mxu0 0.0
        %1266 = vmatpush1.msra.mxu0 0.0
        %1267 = vmatprep.subr.mxu0 0.0
        %1268 = vmatpush1.msra.mxu0 0.0
        %1269 = vmatprep.subr.mxu0 0.0
        %1270 = vmatpush1.msra.mxu0 0.0
        %1271 = vmatprep.subr.mxu0 0.0
        %1272 = vmatpush1.msra.mxu0 0.0
        %1273 = vmatprep.subr.mxu0 0.0
        %1274 = vmatpush1.msra.mxu0 0.0
        %1275 = vmatprep.subr.mxu0 0.0
        %1276 = vmatpush1.msra.mxu0 0.0
        %1277 = vmatprep.subr.mxu0 0.0
        %1278 = vmatpush1.msra.mxu0 0.0
        %1279 = vmatprep.subr.mxu0 0.0
        %1280 = vmatpush1.msra.mxu0 0.0
        %1281 = vmatprep.subr.mxu0 0.0
        %1282 = vmatpush1.msra.mxu0 0.0
        %1283 = vmatprep.subr.mxu0 0.0
        %1284 = vmatpush1.msra.mxu0 0.0
        %1285 = vmatprep.subr.mxu0 0.0
        %1286 = vmatpush1.msra.mxu0 0.0
        %1287 = vmatprep.subr.mxu0 0.0
        %1288 = vmatpush1.msra.mxu0 0.0
        %1289 = vmatprep.subr.mxu0 0.0
        %1290 = vmatpush1.msra.mxu0 0.0
        %1291 = vmatprep.subr.mxu0 0.0
        %1292 = vmatpush1.msra.mxu0 0.0
        %1293 = vmatprep.subr.mxu0 0.0
        %1294 = vmatpush1.msra.mxu0 0.0
        %1295 = vmatprep.subr.mxu0 0.0
        %1296 = vmatpush1.msra.mxu0 0.0
        %1297 = vmatprep.mubr.f32.mxu0 0.0
        %1298 = vmatmul.mubr.f32.gmra.mrb[0].mxu0 %v754
        %v1299 = vpop.f32.mrb[0].mxu0
        %v1300 = vadd.f32 %v1231, %v1299
        %v1301 = vpop.f32.mrb[0].mxu0
        %1302 = vdwg.mxu0
        %s1303 = scalar_lea.vmem [#allocation8], 128
        %v1304 = vld [vmem:[%s1303] sm:$0xff]
        %v1305 = vld [vmem:[%s1303 + $0x8] sm:$0xff]
        %v1306 = vld [vmem:[%s1303 + $0x10] sm:$0xff]
        %v1307 = vld [vmem:[%s1303 + $0x18] sm:$0xff]
        %v1308 = vld [vmem:[%s1303 + $0x20] sm:$0xff]
        %v1309 = vld [vmem:[%s1303 + $0x28] sm:$0xff]
        %v1310 = vld [vmem:[%s1303 + $0x30] sm:$0xff]
        %v1311 = vld [vmem:[%s1303 + $0x38] sm:$0xff]
        %v1312 = vld [vmem:[%s1303 + $0x40] sm:$0xff]
        %v1313 = vld [vmem:[%s1303 + $0x48] sm:$0xff]
        %v1314 = vld [vmem:[%s1303 + $0x50] sm:$0xff]
        %v1315 = vld [vmem:[%s1303 + $0x58] sm:$0xff]
        %v1316 = vld [vmem:[%s1303 + $0x60] sm:$0xff]
        %v1317 = vld [vmem:[%s1303 + $0x68] sm:$0xff]
        %v1318 = vld [vmem:[%s1303 + $0x70] sm:$0xff]
        %v1319 = vld [vmem:[%s1303 + $0x78] sm:$0xff]
        %s1320 = scalar_lea.vmem %s9, 1
        %v1321 = vld [vmem:[%s1320] sm:$0x1]
        %v1323 = vlaneseq
        %v1324 = vshrl.u32 %v1323, 7
        %v1325 = vsub.s32 0, %v1324
        %v1326 = vrot.slane %v1321, %v1325
        %1328 = vmatprep.subr.mxu0 0.0
        %1329 = vmatpush1.msra.mxu0 %v1304
        %1330 = vmatprep.subr.mxu0 0.0
        %1331 = vmatpush1.msra.mxu0 %v1305
        %1332 = vmatprep.subr.mxu0 0.0
        %1333 = vmatpush1.msra.mxu0 %v1306
        %1334 = vmatprep.subr.mxu0 0.0
        %1335 = vmatpush1.msra.mxu0 %v1307
        %1336 = vmatprep.subr.mxu0 0.0
        %1337 = vmatpush1.msra.mxu0 %v1308
        %1338 = vmatprep.subr.mxu0 0.0
        %1339 = vmatpush1.msra.mxu0 %v1309
        %1340 = vmatprep.subr.mxu0 0.0
        %1341 = vmatpush1.msra.mxu0 %v1310
        %1342 = vmatprep.subr.mxu0 0.0
        %1343 = vmatpush1.msra.mxu0 %v1311
        %1344 = vmatprep.subr.mxu0 0.0
        %1345 = vmatpush1.msra.mxu0 %v1312
        %1346 = vmatprep.subr.mxu0 0.0
        %1347 = vmatpush1.msra.mxu0 %v1313
        %1348 = vmatprep.subr.mxu0 0.0
        %1349 = vmatpush1.msra.mxu0 %v1314
        %1350 = vmatprep.subr.mxu0 0.0
        %1351 = vmatpush1.msra.mxu0 %v1315
        %1352 = vmatprep.subr.mxu0 0.0
        %1353 = vmatpush1.msra.mxu0 %v1316
        %1354 = vmatprep.subr.mxu0 0.0
        %1355 = vmatpush1.msra.mxu0 %v1317
        %1356 = vmatprep.subr.mxu0 0.0
        %1357 = vmatpush1.msra.mxu0 %v1318
        %1358 = vmatprep.subr.mxu0 0.0
        %1359 = vmatpush1.msra.mxu0 %v1319
        %1360 = vmatprep.subr.mxu0 0.0
        %1361 = vmatpush1.msra.mxu0 0.0
        %1362 = vmatprep.subr.mxu0 0.0
        %1363 = vmatpush1.msra.mxu0 0.0
        %1364 = vmatprep.subr.mxu0 0.0
        %1365 = vmatpush1.msra.mxu0 0.0
        %1366 = vmatprep.subr.mxu0 0.0
        %1367 = vmatpush1.msra.mxu0 0.0
        %1368 = vmatprep.subr.mxu0 0.0
        %1369 = vmatpush1.msra.mxu0 0.0
        %1370 = vmatprep.subr.mxu0 0.0
        %1371 = vmatpush1.msra.mxu0 0.0
        %1372 = vmatprep.subr.mxu0 0.0
        %1373 = vmatpush1.msra.mxu0 0.0
        %1374 = vmatprep.subr.mxu0 0.0
        %1375 = vmatpush1.msra.mxu0 0.0
        %1376 = vmatprep.subr.mxu0 0.0
        %1377 = vmatpush1.msra.mxu0 0.0
        %1378 = vmatprep.subr.mxu0 0.0
        %1379 = vmatpush1.msra.mxu0 0.0
        %1380 = vmatprep.subr.mxu0 0.0
        %1381 = vmatpush1.msra.mxu0 0.0
        %1382 = vmatprep.subr.mxu0 0.0
        %1383 = vmatpush1.msra.mxu0 0.0
        %1384 = vmatprep.subr.mxu0 0.0
        %1385 = vmatpush1.msra.mxu0 0.0
        %1386 = vmatprep.subr.mxu0 0.0
        %1387 = vmatpush1.msra.mxu0 0.0
        %1388 = vmatprep.subr.mxu0 0.0
        %1389 = vmatpush1.msra.mxu0 0.0
        %1390 = vmatprep.subr.mxu0 0.0
        %1391 = vmatpush1.msra.mxu0 0.0
        %1392 = vmatprep.mubr.f32.mxu0 0.0
        %1393 = vmatmul.mubr.f32.gmra.mrb[0].mxu0 %v754
        %v1394 = vpop.f32.mrb[0].mxu0
        %v1395 = vadd.f32 %v1326, %v1394
        %v1396 = vpop.f32.mrb[0].mxu0
        %1397 = vdwg.mxu0
        %s1398 = scalar_lea.vmem [#allocation10], 128
        %v1399 = vld [vmem:[%s1398] sm:$0xff]
        %v1400 = vld [vmem:[%s1398 + $0x8] sm:$0xff]
        %v1401 = vld [vmem:[%s1398 + $0x10] sm:$0xff]
        %v1402 = vld [vmem:[%s1398 + $0x18] sm:$0xff]
        %v1403 = vld [vmem:[%s1398 + $0x20] sm:$0xff]
        %v1404 = vld [vmem:[%s1398 + $0x28] sm:$0xff]
        %v1405 = vld [vmem:[%s1398 + $0x30] sm:$0xff]
        %v1406 = vld [vmem:[%s1398 + $0x38] sm:$0xff]
        %v1407 = vld [vmem:[%s1398 + $0x40] sm:$0xff]
        %v1408 = vld [vmem:[%s1398 + $0x48] sm:$0xff]
        %v1409 = vld [vmem:[%s1398 + $0x50] sm:$0xff]
        %v1410 = vld [vmem:[%s1398 + $0x58] sm:$0xff]
        %v1411 = vld [vmem:[%s1398 + $0x60] sm:$0xff]
        %v1412 = vld [vmem:[%s1398 + $0x68] sm:$0xff]
        %v1413 = vld [vmem:[%s1398 + $0x70] sm:$0xff]
        %v1414 = vld [vmem:[%s1398 + $0x78] sm:$0xff]
        %s1415 = scalar_lea.vmem %s11, 1
        %v1416 = vld [vmem:[%s1415] sm:$0x1]
        %v1418 = vlaneseq
        %v1419 = vshrl.u32 %v1418, 7
        %v1420 = vsub.s32 0, %v1419
        %v1421 = vrot.slane %v1416, %v1420
        %1423 = vmatprep.subr.mxu0 0.0
        %1424 = vmatpush1.msra.mxu0 %v1399
        %1425 = vmatprep.subr.mxu0 0.0
        %1426 = vmatpush1.msra.mxu0 %v1400
        %1427 = vmatprep.subr.mxu0 0.0
        %1428 = vmatpush1.msra.mxu0 %v1401
        %1429 = vmatprep.subr.mxu0 0.0
        %1430 = vmatpush1.msra.mxu0 %v1402
        %1431 = vmatprep.subr.mxu0 0.0
        %1432 = vmatpush1.msra.mxu0 %v1403
        %1433 = vmatprep.subr.mxu0 0.0
        %1434 = vmatpush1.msra.mxu0 %v1404
        %1435 = vmatprep.subr.mxu0 0.0
        %1436 = vmatpush1.msra.mxu0 %v1405
        %1437 = vmatprep.subr.mxu0 0.0
        %1438 = vmatpush1.msra.mxu0 %v1406
        %1439 = vmatprep.subr.mxu0 0.0
        %1440 = vmatpush1.msra.mxu0 %v1407
        %1441 = vmatprep.subr.mxu0 0.0
        %1442 = vmatpush1.msra.mxu0 %v1408
        %1443 = vmatprep.subr.mxu0 0.0
        %1444 = vmatpush1.msra.mxu0 %v1409
        %1445 = vmatprep.subr.mxu0 0.0
        %1446 = vmatpush1.msra.mxu0 %v1410
        %1447 = vmatprep.subr.mxu0 0.0
        %1448 = vmatpush1.msra.mxu0 %v1411
        %1449 = vmatprep.subr.mxu0 0.0
        %1450 = vmatpush1.msra.mxu0 %v1412
        %1451 = vmatprep.subr.mxu0 0.0
        %1452 = vmatpush1.msra.mxu0 %v1413
        %1453 = vmatprep.subr.mxu0 0.0
        %1454 = vmatpush1.msra.mxu0 %v1414
        %1455 = vmatprep.subr.mxu0 0.0
        %1456 = vmatpush1.msra.mxu0 0.0
        %1457 = vmatprep.subr.mxu0 0.0
        %1458 = vmatpush1.msra.mxu0 0.0
        %1459 = vmatprep.subr.mxu0 0.0
        %1460 = vmatpush1.msra.mxu0 0.0
        %1461 = vmatprep.subr.mxu0 0.0
        %1462 = vmatpush1.msra.mxu0 0.0
        %1463 = vmatprep.subr.mxu0 0.0
        %1464 = vmatpush1.msra.mxu0 0.0
        %1465 = vmatprep.subr.mxu0 0.0
        %1466 = vmatpush1.msra.mxu0 0.0
        %1467 = vmatprep.subr.mxu0 0.0
        %1468 = vmatpush1.msra.mxu0 0.0
        %1469 = vmatprep.subr.mxu0 0.0
        %1470 = vmatpush1.msra.mxu0 0.0
        %1471 = vmatprep.subr.mxu0 0.0
        %1472 = vmatpush1.msra.mxu0 0.0
        %1473 = vmatprep.subr.mxu0 0.0
        %1474 = vmatpush1.msra.mxu0 0.0
        %1475 = vmatprep.subr.mxu0 0.0
        %1476 = vmatpush1.msra.mxu0 0.0
        %1477 = vmatprep.subr.mxu0 0.0
        %1478 = vmatpush1.msra.mxu0 0.0
        %1479 = vmatprep.subr.mxu0 0.0
        %1480 = vmatpush1.msra.mxu0 0.0
        %1481 = vmatprep.subr.mxu0 0.0
        %1482 = vmatpush1.msra.mxu0 0.0
        %1483 = vmatprep.subr.mxu0 0.0
        %1484 = vmatpush1.msra.mxu0 0.0
        %1485 = vmatprep.subr.mxu0 0.0
        %1486 = vmatpush1.msra.mxu0 0.0
        %1487 = vmatprep.mubr.f32.mxu0 0.0
        %1488 = vmatmul.mubr.f32.gmra.mrb[0].mxu0 %v754
        %v1489 = vpop.f32.mrb[0].mxu0
        %v1490 = vadd.f32 %v1421, %v1489
        %v1491 = vpop.f32.mrb[0].mxu0
        %1492 = vdwg.mxu0
        %1493 = vmatprep.subr.mxu0 0.0
        %1494 = vmatpush1.xpose.msra.mxu0 %v1395
        %1495 = vmatprep.subr.mxu0 0.0
        %1496 = vmatpush1.xpose.msra.mxu0 0.0
        %1497 = vmatprep.subr.mxu0 0.0
        %1498 = vmatpush1.xpose.msra.mxu0 0.0
        %1499 = vmatprep.subr.mxu0 0.0
        %1500 = vmatpush1.xpose.msra.mxu0 0.0
        %1501 = vmatprep.subr.mxu0 0.0
        %1502 = vmatpush1.xpose.msra.mxu0 0.0
        %1503 = vmatprep.subr.mxu0 0.0
        %1504 = vmatpush1.xpose.msra.mxu0 0.0
        %1505 = vmatprep.subr.mxu0 0.0
        %1506 = vmatpush1.xpose.msra.mxu0 0.0
        %1507 = vmatprep.subr.mxu0 0.0
        %1508 = vmatpush1.xpose.msra.mxu0 0.0
        %1509 = vmatprep.subr.mxu0 0.0
        %1510 = vmatpush1.xpose.msra.mxu0 0.0
        %1511 = vmatprep.subr.mxu0 0.0
        %1512 = vmatpush1.xpose.msra.mxu0 0.0
        %1513 = vmatprep.subr.mxu0 0.0
        %1514 = vmatpush1.xpose.msra.mxu0 0.0
        %1515 = vmatprep.subr.mxu0 0.0
        %1516 = vmatpush1.xpose.msra.mxu0 0.0
        %1517 = vmatprep.subr.mxu0 0.0
        %1518 = vmatpush1.xpose.msra.mxu0 0.0
        %1519 = vmatprep.subr.mxu0 0.0
        %1520 = vmatpush1.xpose.msra.mxu0 0.0
        %1521 = vmatprep.subr.mxu0 0.0
        %1522 = vmatpush1.xpose.msra.mxu0 0.0
        %1523 = vmatprep.subr.mxu0 0.0
        %1524 = vmatpush1.xpose.msra.mxu0 0.0
        %1525 = vmatprep.subr.mxu0 0.0
        %1526 = vmatpush1.xpose.msra.mxu0 0.0
        %1527 = vmatprep.subr.mxu0 0.0
        %1528 = vmatpush1.xpose.msra.mxu0 0.0
        %1529 = vmatprep.subr.mxu0 0.0
        %1530 = vmatpush1.xpose.msra.mxu0 0.0
        %1531 = vmatprep.subr.mxu0 0.0
        %1532 = vmatpush1.xpose.msra.mxu0 0.0
        %1533 = vmatprep.subr.mxu0 0.0
        %1534 = vmatpush1.xpose.msra.mxu0 0.0
        %1535 = vmatprep.subr.mxu0 0.0
        %1536 = vmatpush1.xpose.msra.mxu0 0.0
        %1537 = vmatprep.subr.mxu0 0.0
        %1538 = vmatpush1.xpose.msra.mxu0 0.0
        %1539 = vmatprep.subr.mxu0 0.0
        %1540 = vmatpush1.xpose.msra.mxu0 0.0
        %1541 = vmatprep.subr.mxu0 0.0
        %1542 = vmatpush1.xpose.msra.mxu0 0.0
        %1543 = vmatprep.subr.mxu0 0.0
        %1544 = vmatpush1.xpose.msra.mxu0 0.0
        %1545 = vmatprep.subr.mxu0 0.0
        %1546 = vmatpush1.xpose.msra.mxu0 0.0
        %1547 = vmatprep.subr.mxu0 0.0
        %1548 = vmatpush1.xpose.msra.mxu0 0.0
        %1549 = vmatprep.subr.mxu0 0.0
        %1550 = vmatpush1.xpose.msra.mxu0 0.0
        %1551 = vmatprep.subr.mxu0 0.0
        %1552 = vmatpush1.xpose.msra.mxu0 0.0
        %1553 = vmatprep.subr.mxu0 0.0
        %1554 = vmatpush1.xpose.msra.mxu0 0.0
        %1555 = vmatprep.subr.mxu0 0.0
        %1556 = vmatpush1.xpose.msra.mxu0 0.0
        %1557 = vmatprep.mubr.f32.mxu0 0.0
        %1558 = vmatmul.mubr.f32.gmra.mrb[0].mxu0 %v1300
        %v1559 = vpop.f32.mrb[0].mxu0
        %v1560 = vadd.f32 0.0, %v1559
        %v1561 = vpop.f32.mrb[0].mxu0
        %1562 = vdwg.mxu0
        %v1563 = vmul.f32 %v1560, 0.2
        %v1564 = vsel %vm1105, -1e+09, %v1563
        %v1565 = vsel %vm1107, %v1564, -inf
        %1566 = vmax.xlane.f32.xlu0 %v1565
        %v1567 = vpop.xlane.xlu0 %1566
        %v1568 = vsub.f32 %v1564, %v1567
        %v1569 = vmul.f32 %v1568, 1.442695
        %v1570 = vpow.pop %v1569
        %v1571 = vsel %vm1107, %v1570, 0.0
        %1572 = vadd.xlane.f32.xlu0 %v1571
        %v1573 = vpop.xlane.xlu0 %1572
        %v1574 = vrcp.pop %v1573
        %v1575 = vmul.f32 %v1570, %v1574
        %v1577 = vsel %vm1107, %v1575, 0
        %1579 = vmatprep.subr.mxu0 0.0
        %1580 = vmatpush1.msra.mxu0 %v1490
        %1581 = vmatprep.subr.mxu0 0.0
        %1582 = vmatpush1.msra.mxu0 0.0
        %1583 = vmatprep.subr.mxu0 0.0
        %1584 = vmatpush1.msra.mxu0 0.0
        %1585 = vmatprep.subr.mxu0 0.0
        %1586 = vmatpush1.msra.mxu0 0.0
        %1587 = vmatprep.subr.mxu0 0.0
        %1588 = vmatpush1.msra.mxu0 0.0
        %1589 = vmatprep.subr.mxu0 0.0
        %1590 = vmatpush1.msra.mxu0 0.0
        %1591 = vmatprep.subr.mxu0 0.0
        %1592 = vmatpush1.msra.mxu0 0.0
        %1593 = vmatprep.subr.mxu0 0.0
        %1594 = vmatpush1.msra.mxu0 0.0
        %1595 = vmatprep.subr.mxu0 0.0
        %1596 = vmatpush1.msra.mxu0 0.0
        %1597 = vmatprep.subr.mxu0 0.0
        %1598 = vmatpush1.msra.mxu0 0.0
        %1599 = vmatprep.subr.mxu0 0.0
        %1600 = vmatpush1.msra.mxu0 0.0
        %1601 = vmatprep.subr.mxu0 0.0
        %1602 = vmatpush1.msra.mxu0 0.0
        %1603 = vmatprep.subr.mxu0 0.0
        %1604 = vmatpush1.msra.mxu0 0.0
        %1605 = vmatprep.subr.mxu0 0.0
        %1606 = vmatpush1.msra.mxu0 0.0
        %1607 = vmatprep.subr.mxu0 0.0
        %1608 = vmatpush1.msra.mxu0 0.0
        %1609 = vmatprep.subr.mxu0 0.0
        %1610 = vmatpush1.msra.mxu0 0.0
        %1611 = vmatprep.subr.mxu0 0.0
        %1612 = vmatpush1.msra.mxu0 0.0
        %1613 = vmatprep.subr.mxu0 0.0
        %1614 = vmatpush1.msra.mxu0 0.0
        %1615 = vmatprep.subr.mxu0 0.0
        %1616 = vmatpush1.msra.mxu0 0.0
        %1617 = vmatprep.subr.mxu0 0.0
        %1618 = vmatpush1.msra.mxu0 0.0
        %1619 = vmatprep.subr.mxu0 0.0
        %1620 = vmatpush1.msra.mxu0 0.0
        %1621 = vmatprep.subr.mxu0 0.0
        %1622 = vmatpush1.msra.mxu0 0.0
        %1623 = vmatprep.subr.mxu0 0.0
        %1624 = vmatpush1.msra.mxu0 0.0
        %1625 = vmatprep.subr.mxu0 0.0
        %1626 = vmatpush1.msra.mxu0 0.0
        %1627 = vmatprep.subr.mxu0 0.0
        %1628 = vmatpush1.msra.mxu0 0.0
        %1629 = vmatprep.subr.mxu0 0.0
        %1630 = vmatpush1.msra.mxu0 0.0
        %1631 = vmatprep.subr.mxu0 0.0
        %1632 = vmatpush1.msra.mxu0 0.0
        %1633 = vmatprep.subr.mxu0 0.0
        %1634 = vmatpush1.msra.mxu0 0.0
        %1635 = vmatprep.subr.mxu0 0.0
        %1636 = vmatpush1.msra.mxu0 0.0
        %1637 = vmatprep.subr.mxu0 0.0
        %1638 = vmatpush1.msra.mxu0 0.0
        %1639 = vmatprep.subr.mxu0 0.0
        %1640 = vmatpush1.msra.mxu0 0.0
        %1641 = vmatprep.subr.mxu0 0.0
        %1642 = vmatpush1.msra.mxu0 0.0
        %1643 = vmatprep.mubr.f32.mxu0 0.0
        %1644 = vmatmul.mubr.f32.gmra.mrb[0].mxu0 %v1577
        %v1645 = vpop.f32.mrb[0].mxu0
        %v1646 = vadd.f32 0.0, %v1645
        %v1647 = vpop.f32.mrb[0].mxu0
        %1648 = vdwg.mxu0
        %s1649 = scalar_lea.vmem [#allocation11], 128
        %v1650 = vld [vmem:[%s1649] sm:$0xff]
        %v1651 = vld [vmem:[%s1649 + $0x8] sm:$0xff]
        %v1652 = vld [vmem:[%s1649 + $0x10] sm:$0xff]
        %v1653 = vld [vmem:[%s1649 + $0x18] sm:$0xff]
        %v1654 = vld [vmem:[%s1649 + $0x20] sm:$0xff]
        %v1655 = vld [vmem:[%s1649 + $0x28] sm:$0xff]
        %v1656 = vld [vmem:[%s1649 + $0x30] sm:$0xff]
        %v1657 = vld [vmem:[%s1649 + $0x38] sm:$0xff]
        %v1658 = vld [vmem:[%s1649 + $0x40] sm:$0xff]
        %v1659 = vld [vmem:[%s1649 + $0x48] sm:$0xff]
        %v1660 = vld [vmem:[%s1649 + $0x50] sm:$0xff]
        %v1661 = vld [vmem:[%s1649 + $0x58] sm:$0xff]
        %v1662 = vld [vmem:[%s1649 + $0x60] sm:$0xff]
        %v1663 = vld [vmem:[%s1649 + $0x68] sm:$0xff]
        %v1664 = vld [vmem:[%s1649 + $0x70] sm:$0xff]
        %v1665 = vld [vmem:[%s1649 + $0x78] sm:$0xff]
        %1666 = vmatprep.subr.mxu0 0.0
        %1667 = vmatpush1.msra.mxu0 %v1650
        %1668 = vmatprep.subr.mxu0 0.0
        %1669 = vmatpush1.msra.mxu0 %v1651
        %1670 = vmatprep.subr.mxu0 0.0
        %1671 = vmatpush1.msra.mxu0 %v1652
        %1672 = vmatprep.subr.mxu0 0.0
        %1673 = vmatpush1.msra.mxu0 %v1653
        %1674 = vmatprep.subr.mxu0 0.0
        %1675 = vmatpush1.msra.mxu0 %v1654
        %1676 = vmatprep.subr.mxu0 0.0
        %1677 = vmatpush1.msra.mxu0 %v1655
        %1678 = vmatprep.subr.mxu0 0.0
        %1679 = vmatpush1.msra.mxu0 %v1656
        %1680 = vmatprep.subr.mxu0 0.0
        %1681 = vmatpush1.msra.mxu0 %v1657
        %1682 = vmatprep.subr.mxu0 0.0
        %1683 = vmatpush1.msra.mxu0 %v1658
        %1684 = vmatprep.subr.mxu0 0.0
        %1685 = vmatpush1.msra.mxu0 %v1659
        %1686 = vmatprep.subr.mxu0 0.0
        %1687 = vmatpush1.msra.mxu0 %v1660
        %1688 = vmatprep.subr.mxu0 0.0
        %1689 = vmatpush1.msra.mxu0 %v1661
        %1690 = vmatprep.subr.mxu0 0.0
        %1691 = vmatpush1.msra.mxu0 %v1662
        %1692 = vmatprep.subr.mxu0 0.0
        %1693 = vmatpush1.msra.mxu0 %v1663
        %1694 = vmatprep.subr.mxu0 0.0
        %1695 = vmatpush1.msra.mxu0 %v1664
        %1696 = vmatprep.subr.mxu0 0.0
        %1697 = vmatpush1.msra.mxu0 %v1665
        %1698 = vmatprep.subr.mxu0 0.0
        %1699 = vmatpush1.msra.mxu0 0.0
        %1700 = vmatprep.subr.mxu0 0.0
        %1701 = vmatpush1.msra.mxu0 0.0
        %1702 = vmatprep.subr.mxu0 0.0
        %1703 = vmatpush1.msra.mxu0 0.0
        %1704 = vmatprep.subr.mxu0 0.0
        %1705 = vmatpush1.msra.mxu0 0.0
        %1706 = vmatprep.subr.mxu0 0.0
        %1707 = vmatpush1.msra.mxu0 0.0
        %1708 = vmatprep.subr.mxu0 0.0
        %1709 = vmatpush1.msra.mxu0 0.0
        %1710 = vmatprep.subr.mxu0 0.0
        %1711 = vmatpush1.msra.mxu0 0.0
        %1712 = vmatprep.subr.mxu0 0.0
        %1713 = vmatpush1.msra.mxu0 0.0
        %1714 = vmatprep.subr.mxu0 0.0
        %1715 = vmatpush1.msra.mxu0 0.0
        %1716 = vmatprep.subr.mxu0 0.0
        %1717 = vmatpush1.msra.mxu0 0.0
        %1718 = vmatprep.subr.mxu0 0.0
        %1719 = vmatpush1.msra.mxu0 0.0
        %1720 = vmatprep.subr.mxu0 0.0
        %1721 = vmatpush1.msra.mxu0 0.0
        %1722 = vmatprep.subr.mxu0 0.0
        %1723 = vmatpush1.msra.mxu0 0.0
        %1724 = vmatprep.subr.mxu0 0.0
        %1725 = vmatpush1.msra.mxu0 0.0
        %1726 = vmatprep.subr.mxu0 0.0
        %1727 = vmatpush1.msra.mxu0 0.0
        %1728 = vmatprep.subr.mxu0 0.0
        %1729 = vmatpush1.msra.mxu0 0.0
        %1730 = vmatprep.mubr.f32.mxu0 0.0
        %1731 = vmatmul.mubr.f32.gmra.mrb[0].mxu0 %v1646
        %v1732 = vpop.f32.mrb[0].mxu0
        %v1733 = vadd.f32 0.0, %v1732
        %v1734 = vpop.f32.mrb[0].mxu0
        %1735 = vdwg.mxu0
        %1736 = vmatprep.subr.mxu0 0.0
        %1737 = vmatpush1.msra.mxu0 %v1192
        %1738 = vmatprep.subr.mxu0 0.0
        %1739 = vmatpush1.msra.mxu0 %v1193
        %1740 = vmatprep.subr.mxu0 0.0
        %1741 = vmatpush1.msra.mxu0 %v1194
        %1742 = vmatprep.subr.mxu0 0.0
        %1743 = vmatpush1.msra.mxu0 %v1195
        %1744 = vmatprep.subr.mxu0 0.0
        %1745 = vmatpush1.msra.mxu0 %v1196
        %1746 = vmatprep.subr.mxu0 0.0
        %1747 = vmatpush1.msra.mxu0 %v1197
        %1748 = vmatprep.subr.mxu0 0.0
        %1749 = vmatpush1.msra.mxu0 %v1198
        %1750 = vmatprep.subr.mxu0 0.0
        %1751 = vmatpush1.msra.mxu0 %v1199
        %1752 = vmatprep.subr.mxu0 0.0
        %1753 = vmatpush1.msra.mxu0 %v1200
        %1754 = vmatprep.subr.mxu0 0.0
        %1755 = vmatpush1.msra.mxu0 %v1201
        %1756 = vmatprep.subr.mxu0 0.0
        %1757 = vmatpush1.msra.mxu0 %v1202
        %1758 = vmatprep.subr.mxu0 0.0
        %1759 = vmatpush1.msra.mxu0 %v1203
        %1760 = vmatprep.subr.mxu0 0.0
        %1761 = vmatpush1.msra.mxu0 %v1204
        %1762 = vmatprep.subr.mxu0 0.0
        %1763 = vmatpush1.msra.mxu0 %v1205
        %1764 = vmatprep.subr.mxu0 0.0
        %1765 = vmatpush1.msra.mxu0 %v1206
        %1766 = vmatprep.subr.mxu0 0.0
        %1767 = vmatpush1.msra.mxu0 %v1207
        %1768 = vmatprep.subr.mxu0 0.0
        %1769 = vmatpush1.msra.mxu0 0.0
        %1770 = vmatprep.subr.mxu0 0.0
        %1771 = vmatpush1.msra.mxu0 0.0
        %1772 = vmatprep.subr.mxu0 0.0
        %1773 = vmatpush1.msra.mxu0 0.0
        %1774 = vmatprep.subr.mxu0 0.0
        %1775 = vmatpush1.msra.mxu0 0.0
        %1776 = vmatprep.subr.mxu0 0.0
        %1777 = vmatpush1.msra.mxu0 0.0
        %1778 = vmatprep.subr.mxu0 0.0
        %1779 = vmatpush1.msra.mxu0 0.0
        %1780 = vmatprep.subr.mxu0 0.0
        %1781 = vmatpush1.msra.mxu0 0.0
        %1782 = vmatprep.subr.mxu0 0.0
        %1783 = vmatpush1.msra.mxu0 0.0
        %1784 = vmatprep.subr.mxu0 0.0
        %1785 = vmatpush1.msra.mxu0 0.0
        %1786 = vmatprep.subr.mxu0 0.0
        %1787 = vmatpush1.msra.mxu0 0.0
        %1788 = vmatprep.subr.mxu0 0.0
        %1789 = vmatpush1.msra.mxu0 0.0
        %1790 = vmatprep.subr.mxu0 0.0
        %1791 = vmatpush1.msra.mxu0 0.0
        %1792 = vmatprep.subr.mxu0 0.0
        %1793 = vmatpush1.msra.mxu0 0.0
        %1794 = vmatprep.subr.mxu0 0.0
        %1795 = vmatpush1.msra.mxu0 0.0
        %1796 = vmatprep.subr.mxu0 0.0
        %1797 = vmatpush1.msra.mxu0 0.0
        %1798 = vmatprep.subr.mxu0 0.0
        %1799 = vmatpush1.msra.mxu0 0.0
        %1800 = vmatprep.mubr.f32.mxu0 0.0
        %1801 = vmatmul.mubr.f32.gmra.mrb[0].mxu0 %v1189
        %v1802 = vpop.f32.mrb[0].mxu0
        %v1803 = vadd.f32 %v1733, %v1802
        %v1804 = vpop.f32.mrb[0].mxu0
        %1805 = vdwg.mxu0
        %v1806 = vld [vmem:[%s13] sm:$0x1]
        %v1808 = vlaneseq
        %v1809 = vshrl.u32 %v1808, 7
        %v1810 = vsub.s32 0, %v1809
        %v1811 = vrot.slane %v1806, %v1810
        %v1813 = vadd.f32 %v1803, %v1811
        %v1814 = vadd.f32 %v715, %v1813
        %v1815 = vld [vmem:[%s4] sm:$0x1]
        %v1816 = vld [vmem:[%s5] sm:$0x1]
        %1817 = vadd.xlane.f32.xlu0 %v1814
        %v1818 = vpop.xlane.xlu0 %1817
        %v1819 = vmul.f32 %v1818, 0.02
        %v1820 = vsub.f32 %v1814, %v1819
        %v1821 = vsel %vm719, %v1820, 0.0
        %v1822 = vmul.f32 %v1821, %v1821
        %1823 = vadd.xlane.f32.xlu0 %v1822
        %v1824 = vpop.xlane.xlu0 %1823
        %v1825 = vmul.f32 %v1824, 0.020408163
        %v1826 = vrsqrt.pop %v1825
        %v1827 = vmul.f32 %v1825, %v1826
        %vm1828 = vcmp.eq.f32.partialorder %v1825, inf
        %v1829 = vsel %vm1828, %v1825, %v1827
        %vm1830 = vcmp.eq.f32.partialorder %v1825, 0.0
        %v1831 = vand.u32 %v1825, 2147483648
        %v1832 = vsel %vm1830, %v1831, %v1829
        %v1834 = vlaneseq
        %v1835 = vshrl.u32 %v1834, 7
        %v1836 = vsub.s32 0, %v1835
        %v1837 = vrot.slane %v1815, %v1836
        %v1839 = vmul.f32 %v1837, %v1821
        %v1840 = vadd.f32 %v1832, 1e-06
        %v1841 = vrcp.pop %v1840
        %v1842 = vmul.f32 %v1839, %v1841
        %v1844 = vlaneseq
        %v1845 = vshrl.u32 %v1844, 7
        %v1846 = vsub.s32 0, %v1845
        %v1847 = vrot.slane %v1816, %v1846
        %v1849 = vadd.f32 %v1842, %v1847
        %v1850 = vld [vmem:[#allocation13] sm:$0xff]
        %v1851 = vld [vmem:[#allocation13 + $0x8] sm:$0xff]
        %v1852 = vld [vmem:[#allocation13 + $0x10] sm:$0xff]
        %v1853 = vld [vmem:[#allocation13 + $0x18] sm:$0xff]
        %v1854 = vld [vmem:[#allocation13 + $0x20] sm:$0xff]
        %v1855 = vld [vmem:[#allocation13 + $0x28] sm:$0xff]
        %v1856 = vld [vmem:[#allocation13 + $0x30] sm:$0xff]
        %v1857 = vld [vmem:[#allocation13 + $0x38] sm:$0xff]
        %v1858 = vld [vmem:[#allocation13 + $0x40] sm:$0xff]
        %v1859 = vld [vmem:[#allocation13 + $0x48] sm:$0xff]
        %v1860 = vld [vmem:[#allocation13 + $0x50] sm:$0xff]
        %v1861 = vld [vmem:[#allocation13 + $0x58] sm:$0xff]
        %v1862 = vld [vmem:[#allocation13 + $0x60] sm:$0xff]
        %v1863 = vld [vmem:[#allocation13 + $0x68] sm:$0xff]
        %v1864 = vld [vmem:[#allocation13 + $0x70] sm:$0xff]
        %v1865 = vld [vmem:[#allocation13 + $0x78] sm:$0xff]
        %v1866 = vld [vmem:[#allocation13 + $0x80] sm:$0xff]
        %v1867 = vld [vmem:[#allocation13 + $0x88] sm:$0xff]
        %v1868 = vld [vmem:[#allocation13 + $0x90] sm:$0xff]
        %v1869 = vld [vmem:[#allocation13 + $0x98] sm:$0xff]
        %v1870 = vld [vmem:[#allocation13 + $0xa0] sm:$0xff]
        %v1871 = vld [vmem:[#allocation13 + $0xa8] sm:$0xff]
        %v1872 = vld [vmem:[#allocation13 + $0xb0] sm:$0xff]
        %v1873 = vld [vmem:[#allocation13 + $0xb8] sm:$0xff]
        %v1874 = vld [vmem:[#allocation13 + $0xc0] sm:$0xff]
        %v1875 = vld [vmem:[#allocation13 + $0xc8] sm:$0xff]
        %v1876 = vld [vmem:[#allocation13 + $0xd0] sm:$0xff]
        %v1877 = vld [vmem:[#allocation13 + $0xd8] sm:$0xff]
        %v1878 = vld [vmem:[#allocation13 + $0xe0] sm:$0xff]
        %v1879 = vld [vmem:[#allocation13 + $0xe8] sm:$0xff]
        %v1880 = vld [vmem:[#allocation13 + $0xf0] sm:$0xff]
        %v1881 = vld [vmem:[#allocation13 + $0xf8] sm:$0xff]
        %v1882 = vld [vmem:[#allocation13 + $0x100] sm:$0xff]
        %v1883 = vld [vmem:[#allocation13 + $0x108] sm:$0xff]
        %v1884 = vld [vmem:[#allocation13 + $0x110] sm:$0xff]
        %v1885 = vld [vmem:[#allocation13 + $0x118] sm:$0xff]
        %v1886 = vld [vmem:[#allocation13 + $0x120] sm:$0xff]
        %v1887 = vld [vmem:[#allocation13 + $0x128] sm:$0xff]
        %v1888 = vld [vmem:[#allocation13 + $0x130] sm:$0xff]
        %v1889 = vld [vmem:[#allocation13 + $0x138] sm:$0xff]
        %v1890 = vld [vmem:[#allocation13 + $0x140] sm:$0xff]
        %v1891 = vld [vmem:[#allocation13 + $0x148] sm:$0xff]
        %v1892 = vld [vmem:[#allocation13 + $0x150] sm:$0xff]
        %v1893 = vld [vmem:[#allocation13 + $0x158] sm:$0xff]
        %v1894 = vld [vmem:[#allocation13 + $0x160] sm:$0xff]
        %v1895 = vld [vmem:[#allocation13 + $0x168] sm:$0xff]
        %v1896 = vld [vmem:[#allocation13 + $0x170] sm:$0xff]
        %v1897 = vld [vmem:[#allocation13 + $0x178] sm:$0xff]
        %v1898 = vld [vmem:[#allocation13 + $0x180] sm:$0xff]
        %v1899 = vld [vmem:[#allocation13 + $0x188] sm:$0xff]
        %v1900 = vld [vmem:[#allocation13 + $0x190] sm:$0xff]
        %v1901 = vld [vmem:[#allocation13 + $0x198] sm:$0xff]
        %v1902 = vld [vmem:[#allocation13 + $0x1a0] sm:$0xff]
        %v1903 = vld [vmem:[#allocation13 + $0x1a8] sm:$0xff]
        %v1904 = vld [vmem:[#allocation13 + $0x1b0] sm:$0xff]
        %v1905 = vld [vmem:[#allocation13 + $0x1b8] sm:$0xff]
        %v1906 = vld [vmem:[#allocation13 + $0x1c0] sm:$0xff]
        %v1907 = vld [vmem:[#allocation13 + $0x1c8] sm:$0xff]
        %v1908 = vld [vmem:[#allocation13 + $0x1d0] sm:$0xff]
        %v1909 = vld [vmem:[#allocation13 + $0x1d8] sm:$0xff]
        %v1910 = vld [vmem:[#allocation13 + $0x1e0] sm:$0xff]
        %v1911 = vld [vmem:[#allocation13 + $0x1e8] sm:$0xff]
        %v1912 = vld [vmem:[#allocation13 + $0x1f0] sm:$0xff]
        %v1913 = vld [vmem:[#allocation13 + $0x1f8] sm:$0xff]
        %v1914 = vld [vmem:[#allocation13 + $0x200] sm:$0xff]
        %v1915 = vld [vmem:[#allocation13 + $0x208] sm:$0xff]
        %v1916 = vld [vmem:[#allocation13 + $0x210] sm:$0xff]
        %v1917 = vld [vmem:[#allocation13 + $0x218] sm:$0xff]
        %v1918 = vld [vmem:[#allocation13 + $0x220] sm:$0xff]
        %v1919 = vld [vmem:[#allocation13 + $0x228] sm:$0xff]
        %v1920 = vld [vmem:[#allocation13 + $0x230] sm:$0xff]
        %v1921 = vld [vmem:[#allocation13 + $0x238] sm:$0xff]
        %v1922 = vld [vmem:[#allocation13 + $0x240] sm:$0xff]
        %v1923 = vld [vmem:[#allocation13 + $0x248] sm:$0xff]
        %v1924 = vld [vmem:[#allocation13 + $0x250] sm:$0xff]
        %v1925 = vld [vmem:[#allocation13 + $0x258] sm:$0xff]
        %v1926 = vld [vmem:[#allocation13 + $0x260] sm:$0xff]
        %v1927 = vld [vmem:[#allocation13 + $0x268] sm:$0xff]
        %v1928 = vld [vmem:[#allocation13 + $0x270] sm:$0xff]
        %v1929 = vld [vmem:[#allocation13 + $0x278] sm:$0xff]
        %v1930 = vld [vmem:[#allocation13 + $0x280] sm:$0xff]
        %v1931 = vld [vmem:[#allocation13 + $0x288] sm:$0xff]
        %v1932 = vld [vmem:[#allocation13 + $0x290] sm:$0xff]
        %v1933 = vld [vmem:[#allocation13 + $0x298] sm:$0xff]
        %v1934 = vld [vmem:[#allocation13 + $0x2a0] sm:$0xff]
        %v1935 = vld [vmem:[#allocation13 + $0x2a8] sm:$0xff]
        %v1936 = vld [vmem:[#allocation13 + $0x2b0] sm:$0xff]
        %v1937 = vld [vmem:[#allocation13 + $0x2b8] sm:$0xff]
        %v1938 = vld [vmem:[#allocation13 + $0x2c0] sm:$0xff]
        %v1939 = vld [vmem:[#allocation13 + $0x2c8] sm:$0xff]
        %v1940 = vld [vmem:[#allocation13 + $0x2d0] sm:$0xff]
        %v1941 = vld [vmem:[#allocation13 + $0x2d8] sm:$0xff]
        %v1942 = vld [vmem:[#allocation13 + $0x2e0] sm:$0xff]
        %v1943 = vld [vmem:[#allocation13 + $0x2e8] sm:$0xff]
        %v1944 = vld [vmem:[#allocation13 + $0x2f0] sm:$0xff]
        %v1945 = vld [vmem:[#allocation13 + $0x2f8] sm:$0xff]
        %v1946 = vld [vmem:[#allocation13 + $0x300] sm:$0xff]
        %v1947 = vld [vmem:[#allocation13 + $0x308] sm:$0xff]
        %v1948 = vld [vmem:[#allocation13 + $0x310] sm:$0xff]
        %v1949 = vld [vmem:[#allocation13 + $0x318] sm:$0xff]
        %v1950 = vld [vmem:[#allocation13 + $0x320] sm:$0xff]
        %v1951 = vld [vmem:[#allocation13 + $0x328] sm:$0xff]
        %v1952 = vld [vmem:[#allocation13 + $0x330] sm:$0xff]
        %v1953 = vld [vmem:[#allocation13 + $0x338] sm:$0xff]
        %v1954 = vld [vmem:[#allocation13 + $0x340] sm:$0xff]
        %v1955 = vld [vmem:[#allocation13 + $0x348] sm:$0xff]
        %v1956 = vld [vmem:[#allocation13 + $0x350] sm:$0xff]
        %v1957 = vld [vmem:[#allocation13 + $0x358] sm:$0xff]
        %v1958 = vld [vmem:[#allocation13 + $0x360] sm:$0xff]
        %v1959 = vld [vmem:[#allocation13 + $0x368] sm:$0xff]
        %v1960 = vld [vmem:[#allocation13 + $0x370] sm:$0xff]
        %v1961 = vld [vmem:[#allocation13 + $0x378] sm:$0xff]
        %v1962 = vld [vmem:[#allocation13 + $0x380] sm:$0xff]
        %v1963 = vld [vmem:[#allocation13 + $0x388] sm:$0xff]
        %v1964 = vld [vmem:[#allocation13 + $0x390] sm:$0xff]
        %v1965 = vld [vmem:[#allocation13 + $0x398] sm:$0xff]
        %v1966 = vld [vmem:[#allocation13 + $0x3a0] sm:$0xff]
        %v1967 = vld [vmem:[#allocation13 + $0x3a8] sm:$0xff]
        %v1968 = vld [vmem:[#allocation13 + $0x3b0] sm:$0xff]
        %v1969 = vld [vmem:[#allocation13 + $0x3b8] sm:$0xff]
        %v1970 = vld [vmem:[#allocation13 + $0x3c0] sm:$0xff]
        %v1971 = vld [vmem:[#allocation13 + $0x3c8] sm:$0xff]
        %v1972 = vld [vmem:[#allocation13 + $0x3d0] sm:$0xff]
        %v1973 = vld [vmem:[#allocation13 + $0x3d8] sm:$0xff]
        %v1974 = vld [vmem:[#allocation13 + $0x3e0] sm:$0xff]
        %v1975 = vld [vmem:[#allocation13 + $0x3e8] sm:$0xff]
        %v1976 = vld [vmem:[#allocation13 + $0x3f0] sm:$0xff]
        %v1977 = vld [vmem:[#allocation13 + $0x3f8] sm:$0xff]
        %v1978 = vld [vmem:[#allocation13 + $0x400] sm:$0xff]
        %v1979 = vld [vmem:[#allocation13 + $0x408] sm:$0xff]
        %v1980 = vld [vmem:[#allocation13 + $0x410] sm:$0xff]
        %v1981 = vld [vmem:[#allocation13 + $0x418] sm:$0xff]
        %v1982 = vld [vmem:[#allocation13 + $0x420] sm:$0xff]
        %v1983 = vld [vmem:[#allocation13 + $0x428] sm:$0xff]
        %v1984 = vld [vmem:[#allocation13 + $0x430] sm:$0xff]
        %v1985 = vld [vmem:[#allocation13 + $0x438] sm:$0xff]
        %v1986 = vld [vmem:[#allocation13 + $0x440] sm:$0xff]
        %v1987 = vld [vmem:[#allocation13 + $0x448] sm:$0xff]
        %v1988 = vld [vmem:[#allocation13 + $0x450] sm:$0xff]
        %v1989 = vld [vmem:[#allocation13 + $0x458] sm:$0xff]
        %v1990 = vld [vmem:[#allocation13 + $0x460] sm:$0xff]
        %v1991 = vld [vmem:[#allocation13 + $0x468] sm:$0xff]
        %v1992 = vld [vmem:[#allocation13 + $0x470] sm:$0xff]
        %v1993 = vld [vmem:[#allocation13 + $0x478] sm:$0xff]
        %v1994 = vld [vmem:[#allocation13 + $0x480] sm:$0xff]
        %v1995 = vld [vmem:[#allocation13 + $0x488] sm:$0xff]
        %v1996 = vld [vmem:[#allocation13 + $0x490] sm:$0xff]
        %v1997 = vld [vmem:[#allocation13 + $0x498] sm:$0xff]
        %v1998 = vld [vmem:[#allocation13 + $0x4a0] sm:$0xff]
        %v1999 = vld [vmem:[#allocation13 + $0x4a8] sm:$0xff]
        %v2000 = vld [vmem:[#allocation13 + $0x4b0] sm:$0xff]
        %v2001 = vld [vmem:[#allocation13 + $0x4b8] sm:$0xff]
        %v2002 = vld [vmem:[#allocation13 + $0x4c0] sm:$0xff]
        %v2003 = vld [vmem:[#allocation13 + $0x4c8] sm:$0xff]
        %v2004 = vld [vmem:[#allocation13 + $0x4d0] sm:$0xff]
        %v2005 = vld [vmem:[#allocation13 + $0x4d8] sm:$0xff]
        %v2006 = vld [vmem:[#allocation13 + $0x4e0] sm:$0xff]
        %v2007 = vld [vmem:[#allocation13 + $0x4e8] sm:$0xff]
        %v2008 = vld [vmem:[#allocation13 + $0x4f0] sm:$0xff]
        %v2009 = vld [vmem:[#allocation13 + $0x4f8] sm:$0xff]
        %v2010 = vld [vmem:[#allocation13 + $0x500] sm:$0xff]
        %v2011 = vld [vmem:[#allocation13 + $0x508] sm:$0xff]
        %v2012 = vld [vmem:[#allocation13 + $0x510] sm:$0xff]
        %v2013 = vld [vmem:[#allocation13 + $0x518] sm:$0xff]
        %v2014 = vld [vmem:[#allocation13 + $0x520] sm:$0xff]
        %v2015 = vld [vmem:[#allocation13 + $0x528] sm:$0xff]
        %v2016 = vld [vmem:[#allocation13 + $0x530] sm:$0xff]
        %v2017 = vld [vmem:[#allocation13 + $0x538] sm:$0xff]
        %v2018 = vld [vmem:[#allocation13 + $0x540] sm:$0xff]
        %v2019 = vld [vmem:[#allocation13 + $0x548] sm:$0xff]
        %v2020 = vld [vmem:[#allocation13 + $0x550] sm:$0xff]
        %v2021 = vld [vmem:[#allocation13 + $0x558] sm:$0xff]
        %v2022 = vld [vmem:[#allocation13 + $0x560] sm:$0xff]
        %v2023 = vld [vmem:[#allocation13 + $0x568] sm:$0xff]
        %v2024 = vld [vmem:[#allocation13 + $0x570] sm:$0xff]
        %v2025 = vld [vmem:[#allocation13 + $0x578] sm:$0xff]
        %v2026 = vld [vmem:[#allocation13 + $0x580] sm:$0xff]
        %v2027 = vld [vmem:[#allocation13 + $0x588] sm:$0xff]
        %v2028 = vld [vmem:[#allocation13 + $0x590] sm:$0xff]
        %v2029 = vld [vmem:[#allocation13 + $0x598] sm:$0xff]
        %v2030 = vld [vmem:[#allocation13 + $0x5a0] sm:$0xff]
        %v2031 = vld [vmem:[#allocation13 + $0x5a8] sm:$0xff]
        %v2032 = vld [vmem:[#allocation13 + $0x5b0] sm:$0xff]
        %v2033 = vld [vmem:[#allocation13 + $0x5b8] sm:$0xff]
        %v2034 = vld [vmem:[#allocation13 + $0x5c0] sm:$0xff]
        %v2035 = vld [vmem:[#allocation13 + $0x5c8] sm:$0xff]
        %v2036 = vld [vmem:[#allocation13 + $0x5d0] sm:$0xff]
        %v2037 = vld [vmem:[#allocation13 + $0x5d8] sm:$0xff]
        %v2038 = vld [vmem:[#allocation13 + $0x5e0] sm:$0xff]
        %v2039 = vld [vmem:[#allocation13 + $0x5e8] sm:$0xff]
        %v2040 = vld [vmem:[#allocation13 + $0x5f0] sm:$0xff]
        %v2041 = vld [vmem:[#allocation13 + $0x5f8] sm:$0xff]
        %v2042 = vld [vmem:[#allocation13 + $0x600] sm:$0xff]
        %v2043 = vld [vmem:[#allocation13 + $0x608] sm:$0xff]
        %v2044 = vld [vmem:[#allocation13 + $0x610] sm:$0xff]
        %v2045 = vld [vmem:[#allocation13 + $0x618] sm:$0xff]
        %v2046 = vld [vmem:[#allocation13 + $0x620] sm:$0xff]
        %v2047 = vld [vmem:[#allocation13 + $0x628] sm:$0xff]
        %v2048 = vld [vmem:[#allocation13 + $0x630] sm:$0xff]
        %v2049 = vld [vmem:[#allocation13 + $0x638] sm:$0xff]
        %v2050 = vld [vmem:[#allocation13 + $0x640] sm:$0xff]
        %v2051 = vld [vmem:[#allocation13 + $0x648] sm:$0xff]
        %v2052 = vld [vmem:[#allocation13 + $0x650] sm:$0xff]
        %v2053 = vld [vmem:[#allocation13 + $0x658] sm:$0xff]
        %v2054 = vld [vmem:[#allocation13 + $0x660] sm:$0xff]
        %v2055 = vld [vmem:[#allocation13 + $0x668] sm:$0xff]
        %v2056 = vld [vmem:[#allocation13 + $0x670] sm:$0xff]
        %v2057 = vld [vmem:[#allocation13 + $0x678] sm:$0xff]
        %v2058 = vld [vmem:[#allocation13 + $0x680] sm:$0xff]
        %v2059 = vld [vmem:[#allocation13 + $0x688] sm:$0xff]
        %v2060 = vld [vmem:[#allocation13 + $0x690] sm:$0xff]
        %v2061 = vld [vmem:[#allocation13 + $0x698] sm:$0xff]
        %v2062 = vld [vmem:[#allocation13 + $0x6a0] sm:$0xff]
        %v2063 = vld [vmem:[#allocation13 + $0x6a8] sm:$0xff]
        %v2064 = vld [vmem:[#allocation13 + $0x6b0] sm:$0xff]
        %v2065 = vld [vmem:[#allocation13 + $0x6b8] sm:$0xff]
        %v2066 = vld [vmem:[#allocation13 + $0x6c0] sm:$0xff]
        %v2067 = vld [vmem:[#allocation13 + $0x6c8] sm:$0xff]
        %v2068 = vld [vmem:[#allocation13 + $0x6d0] sm:$0xff]
        %v2069 = vld [vmem:[#allocation13 + $0x6d8] sm:$0xff]
        %v2070 = vld [vmem:[#allocation13 + $0x6e0] sm:$0xff]
        %v2071 = vld [vmem:[#allocation13 + $0x6e8] sm:$0xff]
        %v2072 = vld [vmem:[#allocation13 + $0x6f0] sm:$0xff]
        %v2073 = vld [vmem:[#allocation13 + $0x6f8] sm:$0xff]
        %v2074 = vld [vmem:[#allocation13 + $0x700] sm:$0xff]
        %v2075 = vld [vmem:[#allocation13 + $0x708] sm:$0xff]
        %v2076 = vld [vmem:[#allocation13 + $0x710] sm:$0xff]
        %v2077 = vld [vmem:[#allocation13 + $0x718] sm:$0xff]
        %v2078 = vld [vmem:[#allocation13 + $0x720] sm:$0xff]
        %v2079 = vld [vmem:[#allocation13 + $0x728] sm:$0xff]
        %v2080 = vld [vmem:[#allocation13 + $0x730] sm:$0xff]
        %v2081 = vld [vmem:[#allocation13 + $0x738] sm:$0xff]
        %v2082 = vld [vmem:[#allocation13 + $0x740] sm:$0xff]
        %v2083 = vld [vmem:[#allocation13 + $0x748] sm:$0xff]
        %v2084 = vld [vmem:[#allocation13 + $0x750] sm:$0xff]
        %v2085 = vld [vmem:[#allocation13 + $0x758] sm:$0xff]
        %v2086 = vld [vmem:[#allocation13 + $0x760] sm:$0xff]
        %v2087 = vld [vmem:[#allocation13 + $0x768] sm:$0xff]
        %v2088 = vld [vmem:[#allocation13 + $0x770] sm:$0xff]
        %v2089 = vld [vmem:[#allocation13 + $0x778] sm:$0xff]
        %v2090 = vld [vmem:[#allocation13 + $0x780] sm:$0xff]
        %v2091 = vld [vmem:[#allocation13 + $0x788] sm:$0xff]
        %v2092 = vld [vmem:[#allocation13 + $0x790] sm:$0xff]
        %v2093 = vld [vmem:[#allocation13 + $0x798] sm:$0xff]
        %v2094 = vld [vmem:[#allocation13 + $0x7a0] sm:$0xff]
        %v2095 = vld [vmem:[#allocation13 + $0x7a8] sm:$0xff]
        %v2096 = vld [vmem:[#allocation13 + $0x7b0] sm:$0xff]
        %v2097 = vld [vmem:[#allocation13 + $0x7b8] sm:$0xff]
        %v2098 = vld [vmem:[#allocation13 + $0x7c0] sm:$0xff]
        %v2099 = vld [vmem:[#allocation13 + $0x7c8] sm:$0xff]
        %v2100 = vld [vmem:[#allocation13 + $0x7d0] sm:$0xff]
        %v2101 = vld [vmem:[#allocation13 + $0x7d8] sm:$0xff]
        %v2102 = vld [vmem:[#allocation13 + $0x7e0] sm:$0xff]
        %v2103 = vld [vmem:[#allocation13 + $0x7e8] sm:$0xff]
        %v2104 = vld [vmem:[#allocation13 + $0x7f0] sm:$0xff]
        %v2105 = vld [vmem:[#allocation13 + $0x7f8] sm:$0xff]
        %v2106 = vld [vmem:[%s15] sm:$0xff]
        %v2107 = vld [vmem:[%s15 + $0x8] sm:$0xff]
        %v2110 = vlaneseq
        %v2111 = vshrl.u32 %v2110, 7
        %v2112 = vsub.s32 0, %v2111
        %v2113 = vrot.slane %v2106, %v2112
        %v2114 = vlaneseq
        %v2115 = vshrl.u32 %v2114, 7
        %v2116 = vsub.s32 1, %v2115
        %v2117 = vrot.slane %v2106, %v2116
        %v2118 = vlaneseq
        %v2119 = vshrl.u32 %v2118, 7
        %v2120 = vsub.s32 2, %v2119
        %v2121 = vrot.slane %v2106, %v2120
        %v2122 = vlaneseq
        %v2123 = vshrl.u32 %v2122, 7
        %v2124 = vsub.s32 3, %v2123
        %v2125 = vrot.slane %v2106, %v2124
        %v2126 = vlaneseq
        %v2127 = vshrl.u32 %v2126, 7
        %v2128 = vsub.s32 4, %v2127
        %v2129 = vrot.slane %v2106, %v2128
        %v2130 = vlaneseq
        %v2131 = vshrl.u32 %v2130, 7
        %v2132 = vsub.s32 5, %v2131
        %v2133 = vrot.slane %v2106, %v2132
        %v2134 = vlaneseq
        %v2135 = vshrl.u32 %v2134, 7
        %v2136 = vsub.s32 6, %v2135
        %v2137 = vrot.slane %v2106, %v2136
        %v2138 = vlaneseq
        %v2139 = vshrl.u32 %v2138, 7
        %v2140 = vsub.s32 7, %v2139
        %v2141 = vrot.slane %v2106, %v2140
        %v2142 = vlaneseq
        %v2143 = vshrl.u32 %v2142, 7
        %v2144 = vsub.s32 0, %v2143
        %v2145 = vrot.slane %v2107, %v2144
        %v2146 = vlaneseq
        %v2147 = vshrl.u32 %v2146, 7
        %v2148 = vsub.s32 1, %v2147
        %v2149 = vrot.slane %v2107, %v2148
        %v2150 = vlaneseq
        %v2151 = vshrl.u32 %v2150, 7
        %v2152 = vsub.s32 2, %v2151
        %v2153 = vrot.slane %v2107, %v2152
        %v2154 = vlaneseq
        %v2155 = vshrl.u32 %v2154, 7
        %v2156 = vsub.s32 3, %v2155
        %v2157 = vrot.slane %v2107, %v2156
        %v2158 = vlaneseq
        %v2159 = vshrl.u32 %v2158, 7
        %v2160 = vsub.s32 4, %v2159
        %v2161 = vrot.slane %v2107, %v2160
        %v2162 = vlaneseq
        %v2163 = vshrl.u32 %v2162, 7
        %v2164 = vsub.s32 5, %v2163
        %v2165 = vrot.slane %v2107, %v2164
        %v2166 = vlaneseq
        %v2167 = vshrl.u32 %v2166, 7
        %v2168 = vsub.s32 6, %v2167
        %v2169 = vrot.slane %v2107, %v2168
        %v2170 = vlaneseq
        %v2171 = vshrl.u32 %v2170, 7
        %v2172 = vsub.s32 7, %v2171
        %v2173 = vrot.slane %v2107, %v2172
        %2190 = vmatprep.subr.mxu0 %v1851
        %2191 = vmatpush1.msra.mxu0 %v1850
        %2192 = vmatprep.subr.mxu0 %v1867
        %2193 = vmatpush1.msra.mxu0 %v1866
        %2194 = vmatprep.subr.mxu0 %v1883
        %2195 = vmatpush1.msra.mxu0 %v1882
        %2196 = vmatprep.subr.mxu0 %v1899
        %2197 = vmatpush1.msra.mxu0 %v1898
        %2198 = vmatprep.subr.mxu0 %v1915
        %2199 = vmatpush1.msra.mxu0 %v1914
        %2200 = vmatprep.subr.mxu0 %v1931
        %2201 = vmatpush1.msra.mxu0 %v1930
        %2202 = vmatprep.subr.mxu0 %v1947
        %2203 = vmatpush1.msra.mxu0 %v1946
        %2204 = vmatprep.subr.mxu0 %v1963
        %2205 = vmatpush1.msra.mxu0 %v1962
        %2206 = vmatprep.subr.mxu0 %v1979
        %2207 = vmatpush1.msra.mxu0 %v1978
        %2208 = vmatprep.subr.mxu0 %v1995
        %2209 = vmatpush1.msra.mxu0 %v1994
        %2210 = vmatprep.subr.mxu0 %v2011
        %2211 = vmatpush1.msra.mxu0 %v2010
        %2212 = vmatprep.subr.mxu0 %v2027
        %2213 = vmatpush1.msra.mxu0 %v2026
        %2214 = vmatprep.subr.mxu0 %v2043
        %2215 = vmatpush1.msra.mxu0 %v2042
        %2216 = vmatprep.subr.mxu0 %v2059
        %2217 = vmatpush1.msra.mxu0 %v2058
        %2218 = vmatprep.subr.mxu0 %v2075
        %2219 = vmatpush1.msra.mxu0 %v2074
        %2220 = vmatprep.subr.mxu0 %v2091
        %2221 = vmatpush1.msra.mxu0 %v2090
        %2222 = vmatprep.subr.mxu0 0.0
        %2223 = vmatpush1.msra.mxu0 0.0
        %2224 = vmatprep.subr.mxu0 0.0
        %2225 = vmatpush1.msra.mxu0 0.0
        %2226 = vmatprep.subr.mxu0 0.0
        %2227 = vmatpush1.msra.mxu0 0.0
        %2228 = vmatprep.subr.mxu0 0.0
        %2229 = vmatpush1.msra.mxu0 0.0
        %2230 = vmatprep.subr.mxu0 0.0
        %2231 = vmatpush1.msra.mxu0 0.0
        %2232 = vmatprep.subr.mxu0 0.0
        %2233 = vmatpush1.msra.mxu0 0.0
        %2234 = vmatprep.subr.mxu0 0.0
        %2235 = vmatpush1.msra.mxu0 0.0
        %2236 = vmatprep.subr.mxu0 0.0
        %2237 = vmatpush1.msra.mxu0 0.0
        %2238 = vmatprep.subr.mxu0 0.0
        %2239 = vmatpush1.msra.mxu0 0.0
        %2240 = vmatprep.subr.mxu0 0.0
        %2241 = vmatpush1.msra.mxu0 0.0
        %2242 = vmatprep.subr.mxu0 0.0
        %2243 = vmatpush1.msra.mxu0 0.0
        %2244 = vmatprep.subr.mxu0 0.0
        %2245 = vmatpush1.msra.mxu0 0.0
        %2246 = vmatprep.subr.mxu0 0.0
        %2247 = vmatpush1.msra.mxu0 0.0
        %2248 = vmatprep.subr.mxu0 0.0
        %2249 = vmatpush1.msra.mxu0 0.0
        %2250 = vmatprep.subr.mxu0 0.0
        %2251 = vmatpush1.msra.mxu0 0.0
        %2252 = vmatprep.subr.mxu0 0.0
        %2253 = vmatpush1.msra.mxu0 0.0
        %2254 = vmatprep.mubr.f32.mxu0 0.0
        %2255 = vmatmul.mubr.f32.gmra.mrb[0].mxu0 %v1849
        %v2256 = vpop.f32.mrb[0].mxu0
        %v2257 = vadd.f32 %v2113, %v2256
        %v2258 = vpop.f32.mrb[0].mxu0
        %v2259 = vadd.f32 %v2117, %v2258
        %2260 = vdwg.mxu0
        %2261 = vmatprep.subr.mxu0 %v1853
        %2262 = vmatpush1.msra.mxu0 %v1852
        %2263 = vmatprep.subr.mxu0 %v1869
        %2264 = vmatpush1.msra.mxu0 %v1868
        %2265 = vmatprep.subr.mxu0 %v1885
        %2266 = vmatpush1.msra.mxu0 %v1884
        %2267 = vmatprep.subr.mxu0 %v1901
        %2268 = vmatpush1.msra.mxu0 %v1900
        %2269 = vmatprep.subr.mxu0 %v1917
        %2270 = vmatpush1.msra.mxu0 %v1916
        %2271 = vmatprep.subr.mxu0 %v1933
        %2272 = vmatpush1.msra.mxu0 %v1932
        %2273 = vmatprep.subr.mxu0 %v1949
        %2274 = vmatpush1.msra.mxu0 %v1948
        %2275 = vmatprep.subr.mxu0 %v1965
        %2276 = vmatpush1.msra.mxu0 %v1964
        %2277 = vmatprep.subr.mxu0 %v1981
        %2278 = vmatpush1.msra.mxu0 %v1980
        %2279 = vmatprep.subr.mxu0 %v1997
        %2280 = vmatpush1.msra.mxu0 %v1996
        %2281 = vmatprep.subr.mxu0 %v2013
        %2282 = vmatpush1.msra.mxu0 %v2012
        %2283 = vmatprep.subr.mxu0 %v2029
        %2284 = vmatpush1.msra.mxu0 %v2028
        %2285 = vmatprep.subr.mxu0 %v2045
        %2286 = vmatpush1.msra.mxu0 %v2044
        %2287 = vmatprep.subr.mxu0 %v2061
        %2288 = vmatpush1.msra.mxu0 %v2060
        %2289 = vmatprep.subr.mxu0 %v2077
        %2290 = vmatpush1.msra.mxu0 %v2076
        %2291 = vmatprep.subr.mxu0 %v2093
        %2292 = vmatpush1.msra.mxu0 %v2092
        %2293 = vmatprep.subr.mxu0 0.0
        %2294 = vmatpush1.msra.mxu0 0.0
        %2295 = vmatprep.subr.mxu0 0.0
        %2296 = vmatpush1.msra.mxu0 0.0
        %2297 = vmatprep.subr.mxu0 0.0
        %2298 = vmatpush1.msra.mxu0 0.0
        %2299 = vmatprep.subr.mxu0 0.0
        %2300 = vmatpush1.msra.mxu0 0.0
        %2301 = vmatprep.subr.mxu0 0.0
        %2302 = vmatpush1.msra.mxu0 0.0
        %2303 = vmatprep.subr.mxu0 0.0
        %2304 = vmatpush1.msra.mxu0 0.0
        %2305 = vmatprep.subr.mxu0 0.0
        %2306 = vmatpush1.msra.mxu0 0.0
        %2307 = vmatprep.subr.mxu0 0.0
        %2308 = vmatpush1.msra.mxu0 0.0
        %2309 = vmatprep.subr.mxu0 0.0
        %2310 = vmatpush1.msra.mxu0 0.0
        %2311 = vmatprep.subr.mxu0 0.0
        %2312 = vmatpush1.msra.mxu0 0.0
        %2313 = vmatprep.subr.mxu0 0.0
        %2314 = vmatpush1.msra.mxu0 0.0
        %2315 = vmatprep.subr.mxu0 0.0
        %2316 = vmatpush1.msra.mxu0 0.0
        %2317 = vmatprep.subr.mxu0 0.0
        %2318 = vmatpush1.msra.mxu0 0.0
        %2319 = vmatprep.subr.mxu0 0.0
        %2320 = vmatpush1.msra.mxu0 0.0
        %2321 = vmatprep.subr.mxu0 0.0
        %2322 = vmatpush1.msra.mxu0 0.0
        %2323 = vmatprep.subr.mxu0 0.0
        %2324 = vmatpush1.msra.mxu0 0.0
        %2325 = vmatprep.mubr.f32.mxu0 0.0
        %2326 = vmatmul.mubr.f32.gmra.mrb[0].mxu0 %v1849
        %v2327 = vpop.f32.mrb[0].mxu0
        %v2328 = vadd.f32 %v2121, %v2327
        %v2329 = vpop.f32.mrb[0].mxu0
        %v2330 = vadd.f32 %v2125, %v2329
        %2331 = vdwg.mxu0
        %2332 = vmatprep.subr.mxu0 %v1855
        %2333 = vmatpush1.msra.mxu0 %v1854
        %2334 = vmatprep.subr.mxu0 %v1871
        %2335 = vmatpush1.msra.mxu0 %v1870
        %2336 = vmatprep.subr.mxu0 %v1887
        %2337 = vmatpush1.msra.mxu0 %v1886
        %2338 = vmatprep.subr.mxu0 %v1903
        %2339 = vmatpush1.msra.mxu0 %v1902
        %2340 = vmatprep.subr.mxu0 %v1919
        %2341 = vmatpush1.msra.mxu0 %v1918
        %2342 = vmatprep.subr.mxu0 %v1935
        %2343 = vmatpush1.msra.mxu0 %v1934
        %2344 = vmatprep.subr.mxu0 %v1951
        %2345 = vmatpush1.msra.mxu0 %v1950
        %2346 = vmatprep.subr.mxu0 %v1967
        %2347 = vmatpush1.msra.mxu0 %v1966
        %2348 = vmatprep.subr.mxu0 %v1983
        %2349 = vmatpush1.msra.mxu0 %v1982
        %2350 = vmatprep.subr.mxu0 %v1999
        %2351 = vmatpush1.msra.mxu0 %v1998
        %2352 = vmatprep.subr.mxu0 %v2015
        %2353 = vmatpush1.msra.mxu0 %v2014
        %2354 = vmatprep.subr.mxu0 %v2031
        %2355 = vmatpush1.msra.mxu0 %v2030
        %2356 = vmatprep.subr.mxu0 %v2047
        %2357 = vmatpush1.msra.mxu0 %v2046
        %2358 = vmatprep.subr.mxu0 %v2063
        %2359 = vmatpush1.msra.mxu0 %v2062
        %2360 = vmatprep.subr.mxu0 %v2079
        %2361 = vmatpush1.msra.mxu0 %v2078
        %2362 = vmatprep.subr.mxu0 %v2095
        %2363 = vmatpush1.msra.mxu0 %v2094
        %2364 = vmatprep.subr.mxu0 0.0
        %2365 = vmatpush1.msra.mxu0 0.0
        %2366 = vmatprep.subr.mxu0 0.0
        %2367 = vmatpush1.msra.mxu0 0.0
        %2368 = vmatprep.subr.mxu0 0.0
        %2369 = vmatpush1.msra.mxu0 0.0
        %2370 = vmatprep.subr.mxu0 0.0
        %2371 = vmatpush1.msra.mxu0 0.0
        %2372 = vmatprep.subr.mxu0 0.0
        %2373 = vmatpush1.msra.mxu0 0.0
        %2374 = vmatprep.subr.mxu0 0.0
        %2375 = vmatpush1.msra.mxu0 0.0
        %2376 = vmatprep.subr.mxu0 0.0
        %2377 = vmatpush1.msra.mxu0 0.0
        %2378 = vmatprep.subr.mxu0 0.0
        %2379 = vmatpush1.msra.mxu0 0.0
        %2380 = vmatprep.subr.mxu0 0.0
        %2381 = vmatpush1.msra.mxu0 0.0
        %2382 = vmatprep.subr.mxu0 0.0
        %2383 = vmatpush1.msra.mxu0 0.0
        %2384 = vmatprep.subr.mxu0 0.0
        %2385 = vmatpush1.msra.mxu0 0.0
        %2386 = vmatprep.subr.mxu0 0.0
        %2387 = vmatpush1.msra.mxu0 0.0
        %2388 = vmatprep.subr.mxu0 0.0
        %2389 = vmatpush1.msra.mxu0 0.0
        %2390 = vmatprep.subr.mxu0 0.0
        %2391 = vmatpush1.msra.mxu0 0.0
        %2392 = vmatprep.subr.mxu0 0.0
        %2393 = vmatpush1.msra.mxu0 0.0
        %2394 = vmatprep.subr.mxu0 0.0
        %2395 = vmatpush1.msra.mxu0 0.0
        %2396 = vmatprep.mubr.f32.mxu0 0.0
        %2397 = vmatmul.mubr.f32.gmra.mrb[0].mxu0 %v1849
        %v2398 = vpop.f32.mrb[0].mxu0
        %v2399 = vadd.f32 %v2129, %v2398
        %v2400 = vpop.f32.mrb[0].mxu0
        %v2401 = vadd.f32 %v2133, %v2400
        %2402 = vdwg.mxu0
        %2403 = vmatprep.subr.mxu0 %v1857
        %2404 = vmatpush1.msra.mxu0 %v1856
        %2405 = vmatprep.subr.mxu0 %v1873
        %2406 = vmatpush1.msra.mxu0 %v1872
        %2407 = vmatprep.subr.mxu0 %v1889
        %2408 = vmatpush1.msra.mxu0 %v1888
        %2409 = vmatprep.subr.mxu0 %v1905
        %2410 = vmatpush1.msra.mxu0 %v1904
        %2411 = vmatprep.subr.mxu0 %v1921
        %2412 = vmatpush1.msra.mxu0 %v1920
        %2413 = vmatprep.subr.mxu0 %v1937
        %2414 = vmatpush1.msra.mxu0 %v1936
        %2415 = vmatprep.subr.mxu0 %v1953
        %2416 = vmatpush1.msra.mxu0 %v1952
        %2417 = vmatprep.subr.mxu0 %v1969
        %2418 = vmatpush1.msra.mxu0 %v1968
        %2419 = vmatprep.subr.mxu0 %v1985
        %2420 = vmatpush1.msra.mxu0 %v1984
        %2421 = vmatprep.subr.mxu0 %v2001
        %2422 = vmatpush1.msra.mxu0 %v2000
        %2423 = vmatprep.subr.mxu0 %v2017
        %2424 = vmatpush1.msra.mxu0 %v2016
        %2425 = vmatprep.subr.mxu0 %v2033
        %2426 = vmatpush1.msra.mxu0 %v2032
        %2427 = vmatprep.subr.mxu0 %v2049
        %2428 = vmatpush1.msra.mxu0 %v2048
        %2429 = vmatprep.subr.mxu0 %v2065
        %2430 = vmatpush1.msra.mxu0 %v2064
        %2431 = vmatprep.subr.mxu0 %v2081
        %2432 = vmatpush1.msra.mxu0 %v2080
        %2433 = vmatprep.subr.mxu0 %v2097
        %2434 = vmatpush1.msra.mxu0 %v2096
        %2435 = vmatprep.subr.mxu0 0.0
        %2436 = vmatpush1.msra.mxu0 0.0
        %2437 = vmatprep.subr.mxu0 0.0
        %2438 = vmatpush1.msra.mxu0 0.0
        %2439 = vmatprep.subr.mxu0 0.0
        %2440 = vmatpush1.msra.mxu0 0.0
        %2441 = vmatprep.subr.mxu0 0.0
        %2442 = vmatpush1.msra.mxu0 0.0
        %2443 = vmatprep.subr.mxu0 0.0
        %2444 = vmatpush1.msra.mxu0 0.0
        %2445 = vmatprep.subr.mxu0 0.0
        %2446 = vmatpush1.msra.mxu0 0.0
        %2447 = vmatprep.subr.mxu0 0.0
        %2448 = vmatpush1.msra.mxu0 0.0
        %2449 = vmatprep.subr.mxu0 0.0
        %2450 = vmatpush1.msra.mxu0 0.0
        %2451 = vmatprep.subr.mxu0 0.0
        %2452 = vmatpush1.msra.mxu0 0.0
        %2453 = vmatprep.subr.mxu0 0.0
        %2454 = vmatpush1.msra.mxu0 0.0
        %2455 = vmatprep.subr.mxu0 0.0
        %2456 = vmatpush1.msra.mxu0 0.0
        %2457 = vmatprep.subr.mxu0 0.0
        %2458 = vmatpush1.msra.mxu0 0.0
        %2459 = vmatprep.subr.mxu0 0.0
        %2460 = vmatpush1.msra.mxu0 0.0
        %2461 = vmatprep.subr.mxu0 0.0
        %2462 = vmatpush1.msra.mxu0 0.0
        %2463 = vmatprep.subr.mxu0 0.0
        %2464 = vmatpush1.msra.mxu0 0.0
        %2465 = vmatprep.subr.mxu0 0.0
        %2466 = vmatpush1.msra.mxu0 0.0
        %2467 = vmatprep.mubr.f32.mxu0 0.0
        %2468 = vmatmul.mubr.f32.gmra.mrb[0].mxu0 %v1849
        %v2469 = vpop.f32.mrb[0].mxu0
        %v2470 = vadd.f32 %v2137, %v2469
        %v2471 = vpop.f32.mrb[0].mxu0
        %v2472 = vadd.f32 %v2141, %v2471
        %2473 = vdwg.mxu0
        %2474 = vmatprep.subr.mxu0 %v1859
        %2475 = vmatpush1.msra.mxu0 %v1858
        %2476 = vmatprep.subr.mxu0 %v1875
        %2477 = vmatpush1.msra.mxu0 %v1874
        %2478 = vmatprep.subr.mxu0 %v1891
        %2479 = vmatpush1.msra.mxu0 %v1890
        %2480 = vmatprep.subr.mxu0 %v1907
        %2481 = vmatpush1.msra.mxu0 %v1906
        %2482 = vmatprep.subr.mxu0 %v1923
        %2483 = vmatpush1.msra.mxu0 %v1922
        %2484 = vmatprep.subr.mxu0 %v1939
        %2485 = vmatpush1.msra.mxu0 %v1938
        %2486 = vmatprep.subr.mxu0 %v1955
        %2487 = vmatpush1.msra.mxu0 %v1954
        %2488 = vmatprep.subr.mxu0 %v1971
        %2489 = vmatpush1.msra.mxu0 %v1970
        %2490 = vmatprep.subr.mxu0 %v1987
        %2491 = vmatpush1.msra.mxu0 %v1986
        %2492 = vmatprep.subr.mxu0 %v2003
        %2493 = vmatpush1.msra.mxu0 %v2002
        %2494 = vmatprep.subr.mxu0 %v2019
        %2495 = vmatpush1.msra.mxu0 %v2018
        %2496 = vmatprep.subr.mxu0 %v2035
        %2497 = vmatpush1.msra.mxu0 %v2034
        %2498 = vmatprep.subr.mxu0 %v2051
        %2499 = vmatpush1.msra.mxu0 %v2050
        %2500 = vmatprep.subr.mxu0 %v2067
        %2501 = vmatpush1.msra.mxu0 %v2066
        %2502 = vmatprep.subr.mxu0 %v2083
        %2503 = vmatpush1.msra.mxu0 %v2082
        %2504 = vmatprep.subr.mxu0 %v2099
        %2505 = vmatpush1.msra.mxu0 %v2098
        %2506 = vmatprep.subr.mxu0 0.0
        %2507 = vmatpush1.msra.mxu0 0.0
        %2508 = vmatprep.subr.mxu0 0.0
        %2509 = vmatpush1.msra.mxu0 0.0
        %2510 = vmatprep.subr.mxu0 0.0
        %2511 = vmatpush1.msra.mxu0 0.0
        %2512 = vmatprep.subr.mxu0 0.0
        %2513 = vmatpush1.msra.mxu0 0.0
        %2514 = vmatprep.subr.mxu0 0.0
        %2515 = vmatpush1.msra.mxu0 0.0
        %2516 = vmatprep.subr.mxu0 0.0
        %2517 = vmatpush1.msra.mxu0 0.0
        %2518 = vmatprep.subr.mxu0 0.0
        %2519 = vmatpush1.msra.mxu0 0.0
        %2520 = vmatprep.subr.mxu0 0.0
        %2521 = vmatpush1.msra.mxu0 0.0
        %2522 = vmatprep.subr.mxu0 0.0
        %2523 = vmatpush1.msra.mxu0 0.0
        %2524 = vmatprep.subr.mxu0 0.0
        %2525 = vmatpush1.msra.mxu0 0.0
        %2526 = vmatprep.subr.mxu0 0.0
        %2527 = vmatpush1.msra.mxu0 0.0
        %2528 = vmatprep.subr.mxu0 0.0
        %2529 = vmatpush1.msra.mxu0 0.0
        %2530 = vmatprep.subr.mxu0 0.0
        %2531 = vmatpush1.msra.mxu0 0.0
        %2532 = vmatprep.subr.mxu0 0.0
        %2533 = vmatpush1.msra.mxu0 0.0
        %2534 = vmatprep.subr.mxu0 0.0
        %2535 = vmatpush1.msra.mxu0 0.0
        %2536 = vmatprep.subr.mxu0 0.0
        %2537 = vmatpush1.msra.mxu0 0.0
        %2538 = vmatprep.mubr.f32.mxu0 0.0
        %2539 = vmatmul.mubr.f32.gmra.mrb[0].mxu0 %v1849
        %v2540 = vpop.f32.mrb[0].mxu0
        %v2541 = vadd.f32 %v2145, %v2540
        %v2542 = vpop.f32.mrb[0].mxu0
        %v2543 = vadd.f32 %v2149, %v2542
        %2544 = vdwg.mxu0
        %2545 = vmatprep.subr.mxu0 %v1861
        %2546 = vmatpush1.msra.mxu0 %v1860
        %2547 = vmatprep.subr.mxu0 %v1877
        %2548 = vmatpush1.msra.mxu0 %v1876
        %2549 = vmatprep.subr.mxu0 %v1893
        %2550 = vmatpush1.msra.mxu0 %v1892
        %2551 = vmatprep.subr.mxu0 %v1909
        %2552 = vmatpush1.msra.mxu0 %v1908
        %2553 = vmatprep.subr.mxu0 %v1925
        %2554 = vmatpush1.msra.mxu0 %v1924
        %2555 = vmatprep.subr.mxu0 %v1941
        %2556 = vmatpush1.msra.mxu0 %v1940
        %2557 = vmatprep.subr.mxu0 %v1957
        %2558 = vmatpush1.msra.mxu0 %v1956
        %2559 = vmatprep.subr.mxu0 %v1973
        %2560 = vmatpush1.msra.mxu0 %v1972
        %2561 = vmatprep.subr.mxu0 %v1989
        %2562 = vmatpush1.msra.mxu0 %v1988
        %2563 = vmatprep.subr.mxu0 %v2005
        %2564 = vmatpush1.msra.mxu0 %v2004
        %2565 = vmatprep.subr.mxu0 %v2021
        %2566 = vmatpush1.msra.mxu0 %v2020
        %2567 = vmatprep.subr.mxu0 %v2037
        %2568 = vmatpush1.msra.mxu0 %v2036
        %2569 = vmatprep.subr.mxu0 %v2053
        %2570 = vmatpush1.msra.mxu0 %v2052
        %2571 = vmatprep.subr.mxu0 %v2069
        %2572 = vmatpush1.msra.mxu0 %v2068
        %2573 = vmatprep.subr.mxu0 %v2085
        %2574 = vmatpush1.msra.mxu0 %v2084
        %2575 = vmatprep.subr.mxu0 %v2101
        %2576 = vmatpush1.msra.mxu0 %v2100
        %2577 = vmatprep.subr.mxu0 0.0
        %2578 = vmatpush1.msra.mxu0 0.0
        %2579 = vmatprep.subr.mxu0 0.0
        %2580 = vmatpush1.msra.mxu0 0.0
        %2581 = vmatprep.subr.mxu0 0.0
        %2582 = vmatpush1.msra.mxu0 0.0
        %2583 = vmatprep.subr.mxu0 0.0
        %2584 = vmatpush1.msra.mxu0 0.0
        %2585 = vmatprep.subr.mxu0 0.0
        %2586 = vmatpush1.msra.mxu0 0.0
        %2587 = vmatprep.subr.mxu0 0.0
        %2588 = vmatpush1.msra.mxu0 0.0
        %2589 = vmatprep.subr.mxu0 0.0
        %2590 = vmatpush1.msra.mxu0 0.0
        %2591 = vmatprep.subr.mxu0 0.0
        %2592 = vmatpush1.msra.mxu0 0.0
        %2593 = vmatprep.subr.mxu0 0.0
        %2594 = vmatpush1.msra.mxu0 0.0
        %2595 = vmatprep.subr.mxu0 0.0
        %2596 = vmatpush1.msra.mxu0 0.0
        %2597 = vmatprep.subr.mxu0 0.0
        %2598 = vmatpush1.msra.mxu0 0.0
        %2599 = vmatprep.subr.mxu0 0.0
        %2600 = vmatpush1.msra.mxu0 0.0
        %2601 = vmatprep.subr.mxu0 0.0
        %2602 = vmatpush1.msra.mxu0 0.0
        %2603 = vmatprep.subr.mxu0 0.0
        %2604 = vmatpush1.msra.mxu0 0.0
        %2605 = vmatprep.subr.mxu0 0.0
        %2606 = vmatpush1.msra.mxu0 0.0
        %2607 = vmatprep.subr.mxu0 0.0
        %2608 = vmatpush1.msra.mxu0 0.0
        %2609 = vmatprep.mubr.f32.mxu0 0.0
        %2610 = vmatmul.mubr.f32.gmra.mrb[0].mxu0 %v1849
        %v2611 = vpop.f32.mrb[0].mxu0
        %v2612 = vadd.f32 %v2153, %v2611
        %v2613 = vpop.f32.mrb[0].mxu0
        %v2614 = vadd.f32 %v2157, %v2613
        %2615 = vdwg.mxu0
        %2616 = vmatprep.subr.mxu0 %v1863
        %2617 = vmatpush1.msra.mxu0 %v1862
        %2618 = vmatprep.subr.mxu0 %v1879
        %2619 = vmatpush1.msra.mxu0 %v1878
        %2620 = vmatprep.subr.mxu0 %v1895
        %2621 = vmatpush1.msra.mxu0 %v1894
        %2622 = vmatprep.subr.mxu0 %v1911
        %2623 = vmatpush1.msra.mxu0 %v1910
        %2624 = vmatprep.subr.mxu0 %v1927
        %2625 = vmatpush1.msra.mxu0 %v1926
        %2626 = vmatprep.subr.mxu0 %v1943
        %2627 = vmatpush1.msra.mxu0 %v1942
        %2628 = vmatprep.subr.mxu0 %v1959
        %2629 = vmatpush1.msra.mxu0 %v1958
        %2630 = vmatprep.subr.mxu0 %v1975
        %2631 = vmatpush1.msra.mxu0 %v1974
        %2632 = vmatprep.subr.mxu0 %v1991
        %2633 = vmatpush1.msra.mxu0 %v1990
        %2634 = vmatprep.subr.mxu0 %v2007
        %2635 = vmatpush1.msra.mxu0 %v2006
        %2636 = vmatprep.subr.mxu0 %v2023
        %2637 = vmatpush1.msra.mxu0 %v2022
        %2638 = vmatprep.subr.mxu0 %v2039
        %2639 = vmatpush1.msra.mxu0 %v2038
        %2640 = vmatprep.subr.mxu0 %v2055
        %2641 = vmatpush1.msra.mxu0 %v2054
        %2642 = vmatprep.subr.mxu0 %v2071
        %2643 = vmatpush1.msra.mxu0 %v2070
        %2644 = vmatprep.subr.mxu0 %v2087
        %2645 = vmatpush1.msra.mxu0 %v2086
        %2646 = vmatprep.subr.mxu0 %v2103
        %2647 = vmatpush1.msra.mxu0 %v2102
        %2648 = vmatprep.subr.mxu0 0.0
        %2649 = vmatpush1.msra.mxu0 0.0
        %2650 = vmatprep.subr.mxu0 0.0
        %2651 = vmatpush1.msra.mxu0 0.0
        %2652 = vmatprep.subr.mxu0 0.0
        %2653 = vmatpush1.msra.mxu0 0.0
        %2654 = vmatprep.subr.mxu0 0.0
        %2655 = vmatpush1.msra.mxu0 0.0
        %2656 = vmatprep.subr.mxu0 0.0
        %2657 = vmatpush1.msra.mxu0 0.0
        %2658 = vmatprep.subr.mxu0 0.0
        %2659 = vmatpush1.msra.mxu0 0.0
        %2660 = vmatprep.subr.mxu0 0.0
        %2661 = vmatpush1.msra.mxu0 0.0
        %2662 = vmatprep.subr.mxu0 0.0
        %2663 = vmatpush1.msra.mxu0 0.0
        %2664 = vmatprep.subr.mxu0 0.0
        %2665 = vmatpush1.msra.mxu0 0.0
        %2666 = vmatprep.subr.mxu0 0.0
        %2667 = vmatpush1.msra.mxu0 0.0
        %2668 = vmatprep.subr.mxu0 0.0
        %2669 = vmatpush1.msra.mxu0 0.0
        %2670 = vmatprep.subr.mxu0 0.0
        %2671 = vmatpush1.msra.mxu0 0.0
        %2672 = vmatprep.subr.mxu0 0.0
        %2673 = vmatpush1.msra.mxu0 0.0
        %2674 = vmatprep.subr.mxu0 0.0
        %2675 = vmatpush1.msra.mxu0 0.0
        %2676 = vmatprep.subr.mxu0 0.0
        %2677 = vmatpush1.msra.mxu0 0.0
        %2678 = vmatprep.subr.mxu0 0.0
        %2679 = vmatpush1.msra.mxu0 0.0
        %2680 = vmatprep.mubr.f32.mxu0 0.0
        %2681 = vmatmul.mubr.f32.gmra.mrb[0].mxu0 %v1849
        %v2682 = vpop.f32.mrb[0].mxu0
        %v2683 = vadd.f32 %v2161, %v2682
        %v2684 = vpop.f32.mrb[0].mxu0
        %v2685 = vadd.f32 %v2165, %v2684
        %2686 = vdwg.mxu0
        %2687 = vmatprep.subr.mxu0 %v1865
        %2688 = vmatpush1.msra.mxu0 %v1864
        %2689 = vmatprep.subr.mxu0 %v1881
        %2690 = vmatpush1.msra.mxu0 %v1880
        %2691 = vmatprep.subr.mxu0 %v1897
        %2692 = vmatpush1.msra.mxu0 %v1896
        %2693 = vmatprep.subr.mxu0 %v1913
        %2694 = vmatpush1.msra.mxu0 %v1912
        %2695 = vmatprep.subr.mxu0 %v1929
        %2696 = vmatpush1.msra.mxu0 %v1928
        %2697 = vmatprep.subr.mxu0 %v1945
        %2698 = vmatpush1.msra.mxu0 %v1944
        %2699 = vmatprep.subr.mxu0 %v1961
        %2700 = vmatpush1.msra.mxu0 %v1960
        %2701 = vmatprep.subr.mxu0 %v1977
        %2702 = vmatpush1.msra.mxu0 %v1976
        %2703 = vmatprep.subr.mxu0 %v1993
        %2704 = vmatpush1.msra.mxu0 %v1992
        %2705 = vmatprep.subr.mxu0 %v2009
        %2706 = vmatpush1.msra.mxu0 %v2008
        %2707 = vmatprep.subr.mxu0 %v2025
        %2708 = vmatpush1.msra.mxu0 %v2024
        %2709 = vmatprep.subr.mxu0 %v2041
        %2710 = vmatpush1.msra.mxu0 %v2040
        %2711 = vmatprep.subr.mxu0 %v2057
        %2712 = vmatpush1.msra.mxu0 %v2056
        %2713 = vmatprep.subr.mxu0 %v2073
        %2714 = vmatpush1.msra.mxu0 %v2072
        %2715 = vmatprep.subr.mxu0 %v2089
        %2716 = vmatpush1.msra.mxu0 %v2088
        %2717 = vmatprep.subr.mxu0 %v2105
        %2718 = vmatpush1.msra.mxu0 %v2104
        %2719 = vmatprep.subr.mxu0 0.0
        %2720 = vmatpush1.msra.mxu0 0.0
        %2721 = vmatprep.subr.mxu0 0.0
        %2722 = vmatpush1.msra.mxu0 0.0
        %2723 = vmatprep.subr.mxu0 0.0
        %2724 = vmatpush1.msra.mxu0 0.0
        %2725 = vmatprep.subr.mxu0 0.0
        %2726 = vmatpush1.msra.mxu0 0.0
        %2727 = vmatprep.subr.mxu0 0.0
        %2728 = vmatpush1.msra.mxu0 0.0
        %2729 = vmatprep.subr.mxu0 0.0
        %2730 = vmatpush1.msra.mxu0 0.0
        %2731 = vmatprep.subr.mxu0 0.0
        %2732 = vmatpush1.msra.mxu0 0.0
        %2733 = vmatprep.subr.mxu0 0.0
        %2734 = vmatpush1.msra.mxu0 0.0
        %2735 = vmatprep.subr.mxu0 0.0
        %2736 = vmatpush1.msra.mxu0 0.0
        %2737 = vmatprep.subr.mxu0 0.0
        %2738 = vmatpush1.msra.mxu0 0.0
        %2739 = vmatprep.subr.mxu0 0.0
        %2740 = vmatpush1.msra.mxu0 0.0
        %2741 = vmatprep.subr.mxu0 0.0
        %2742 = vmatpush1.msra.mxu0 0.0
        %2743 = vmatprep.subr.mxu0 0.0
        %2744 = vmatpush1.msra.mxu0 0.0
        %2745 = vmatprep.subr.mxu0 0.0
        %2746 = vmatpush1.msra.mxu0 0.0
        %2747 = vmatprep.subr.mxu0 0.0
        %2748 = vmatpush1.msra.mxu0 0.0
        %2749 = vmatprep.subr.mxu0 0.0
        %2750 = vmatpush1.msra.mxu0 0.0
        %2751 = vmatprep.mubr.f32.mxu0 0.0
        %2752 = vmatmul.mubr.f32.gmra.mrb[0].mxu0 %v1849
        %v2753 = vpop.f32.mrb[0].mxu0
        %v2754 = vadd.f32 %v2169, %v2753
        %v2755 = vpop.f32.mrb[0].mxu0
        %v2756 = vadd.f32 %v2173, %v2755
        %2757 = vdwg.mxu0
        %v2758 = vmax.f32 %v2257, 0.0
        %v2759 = vmax.f32 %v2259, 0.0
        %v2760 = vmax.f32 %v2328, 0.0
        %v2761 = vmax.f32 %v2330, 0.0
        %v2762 = vmax.f32 %v2399, 0.0
        %v2763 = vmax.f32 %v2401, 0.0
        %v2764 = vmax.f32 %v2470, 0.0
        %v2765 = vmax.f32 %v2472, 0.0
        %v2766 = vmax.f32 %v2541, 0.0
        %v2767 = vmax.f32 %v2543, 0.0
        %v2768 = vmax.f32 %v2612, 0.0
        %v2769 = vmax.f32 %v2614, 0.0
        %v2770 = vmax.f32 %v2683, 0.0
        %v2771 = vmax.f32 %v2685, 0.0
        %v2772 = vmax.f32 %v2754, 0.0
        %v2773 = vmax.f32 %v2756, 0.0
        %v2774 = vld [vmem:[#allocation14] sm:$0xff]
        %v2775 = vld [vmem:[#allocation14 + $0x8] sm:$0xff]
        %v2776 = vld [vmem:[#allocation14 + $0x10] sm:$0xff]
        %v2777 = vld [vmem:[#allocation14 + $0x18] sm:$0xff]
        %v2778 = vld [vmem:[#allocation14 + $0x20] sm:$0xff]
        %v2779 = vld [vmem:[#allocation14 + $0x28] sm:$0xff]
        %v2780 = vld [vmem:[#allocation14 + $0x30] sm:$0xff]
        %v2781 = vld [vmem:[#allocation14 + $0x38] sm:$0xff]
        %v2782 = vld [vmem:[#allocation14 + $0x40] sm:$0xff]
        %v2783 = vld [vmem:[#allocation14 + $0x48] sm:$0xff]
        %v2784 = vld [vmem:[#allocation14 + $0x50] sm:$0xff]
        %v2785 = vld [vmem:[#allocation14 + $0x58] sm:$0xff]
        %v2786 = vld [vmem:[#allocation14 + $0x60] sm:$0xff]
        %v2787 = vld [vmem:[#allocation14 + $0x68] sm:$0xff]
        %v2788 = vld [vmem:[#allocation14 + $0x70] sm:$0xff]
        %v2789 = vld [vmem:[#allocation14 + $0x78] sm:$0xff]
        %v2790 = vld [vmem:[#allocation14 + $0x80] sm:$0xff]
        %v2791 = vld [vmem:[#allocation14 + $0x88] sm:$0xff]
        %v2792 = vld [vmem:[#allocation14 + $0x90] sm:$0xff]
        %v2793 = vld [vmem:[#allocation14 + $0x98] sm:$0xff]
        %v2794 = vld [vmem:[#allocation14 + $0xa0] sm:$0xff]
        %v2795 = vld [vmem:[#allocation14 + $0xa8] sm:$0xff]
        %v2796 = vld [vmem:[#allocation14 + $0xb0] sm:$0xff]
        %v2797 = vld [vmem:[#allocation14 + $0xb8] sm:$0xff]
        %v2798 = vld [vmem:[#allocation14 + $0xc0] sm:$0xff]
        %v2799 = vld [vmem:[#allocation14 + $0xc8] sm:$0xff]
        %v2800 = vld [vmem:[#allocation14 + $0xd0] sm:$0xff]
        %v2801 = vld [vmem:[#allocation14 + $0xd8] sm:$0xff]
        %v2802 = vld [vmem:[#allocation14 + $0xe0] sm:$0xff]
        %v2803 = vld [vmem:[#allocation14 + $0xe8] sm:$0xff]
        %v2804 = vld [vmem:[#allocation14 + $0xf0] sm:$0xff]
        %v2805 = vld [vmem:[#allocation14 + $0xf8] sm:$0xff]
        %v2806 = vld [vmem:[#allocation14 + $0x100] sm:$0xff]
        %v2807 = vld [vmem:[#allocation14 + $0x108] sm:$0xff]
        %v2808 = vld [vmem:[#allocation14 + $0x110] sm:$0xff]
        %v2809 = vld [vmem:[#allocation14 + $0x118] sm:$0xff]
        %v2810 = vld [vmem:[#allocation14 + $0x120] sm:$0xff]
        %v2811 = vld [vmem:[#allocation14 + $0x128] sm:$0xff]
        %v2812 = vld [vmem:[#allocation14 + $0x130] sm:$0xff]
        %v2813 = vld [vmem:[#allocation14 + $0x138] sm:$0xff]
        %v2814 = vld [vmem:[#allocation14 + $0x140] sm:$0xff]
        %v2815 = vld [vmem:[#allocation14 + $0x148] sm:$0xff]
        %v2816 = vld [vmem:[#allocation14 + $0x150] sm:$0xff]
        %v2817 = vld [vmem:[#allocation14 + $0x158] sm:$0xff]
        %v2818 = vld [vmem:[#allocation14 + $0x160] sm:$0xff]
        %v2819 = vld [vmem:[#allocation14 + $0x168] sm:$0xff]
        %v2820 = vld [vmem:[#allocation14 + $0x170] sm:$0xff]
        %v2821 = vld [vmem:[#allocation14 + $0x178] sm:$0xff]
        %v2822 = vld [vmem:[#allocation14 + $0x180] sm:$0xff]
        %v2823 = vld [vmem:[#allocation14 + $0x188] sm:$0xff]
        %v2824 = vld [vmem:[#allocation14 + $0x190] sm:$0xff]
        %v2825 = vld [vmem:[#allocation14 + $0x198] sm:$0xff]
        %v2826 = vld [vmem:[#allocation14 + $0x1a0] sm:$0xff]
        %v2827 = vld [vmem:[#allocation14 + $0x1a8] sm:$0xff]
        %v2828 = vld [vmem:[#allocation14 + $0x1b0] sm:$0xff]
        %v2829 = vld [vmem:[#allocation14 + $0x1b8] sm:$0xff]
        %v2830 = vld [vmem:[#allocation14 + $0x1c0] sm:$0xff]
        %v2831 = vld [vmem:[#allocation14 + $0x1c8] sm:$0xff]
        %v2832 = vld [vmem:[#allocation14 + $0x1d0] sm:$0xff]
        %v2833 = vld [vmem:[#allocation14 + $0x1d8] sm:$0xff]
        %v2834 = vld [vmem:[#allocation14 + $0x1e0] sm:$0xff]
        %v2835 = vld [vmem:[#allocation14 + $0x1e8] sm:$0xff]
        %v2836 = vld [vmem:[#allocation14 + $0x1f0] sm:$0xff]
        %v2837 = vld [vmem:[#allocation14 + $0x1f8] sm:$0xff]
        %v2838 = vld [vmem:[#allocation14 + $0x200] sm:$0xff]
        %v2839 = vld [vmem:[#allocation14 + $0x208] sm:$0xff]
        %v2840 = vld [vmem:[#allocation14 + $0x210] sm:$0xff]
        %v2841 = vld [vmem:[#allocation14 + $0x218] sm:$0xff]
        %v2842 = vld [vmem:[#allocation14 + $0x220] sm:$0xff]
        %v2843 = vld [vmem:[#allocation14 + $0x228] sm:$0xff]
        %v2844 = vld [vmem:[#allocation14 + $0x230] sm:$0xff]
        %v2845 = vld [vmem:[#allocation14 + $0x238] sm:$0xff]
        %v2846 = vld [vmem:[#allocation14 + $0x240] sm:$0xff]
        %v2847 = vld [vmem:[#allocation14 + $0x248] sm:$0xff]
        %v2848 = vld [vmem:[#allocation14 + $0x250] sm:$0xff]
        %v2849 = vld [vmem:[#allocation14 + $0x258] sm:$0xff]
        %v2850 = vld [vmem:[#allocation14 + $0x260] sm:$0xff]
        %v2851 = vld [vmem:[#allocation14 + $0x268] sm:$0xff]
        %v2852 = vld [vmem:[#allocation14 + $0x270] sm:$0xff]
        %v2853 = vld [vmem:[#allocation14 + $0x278] sm:$0xff]
        %v2854 = vld [vmem:[#allocation14 + $0x280] sm:$0xff]
        %v2855 = vld [vmem:[#allocation14 + $0x288] sm:$0xff]
        %v2856 = vld [vmem:[#allocation14 + $0x290] sm:$0xff]
        %v2857 = vld [vmem:[#allocation14 + $0x298] sm:$0xff]
        %v2858 = vld [vmem:[#allocation14 + $0x2a0] sm:$0xff]
        %v2859 = vld [vmem:[#allocation14 + $0x2a8] sm:$0xff]
        %v2860 = vld [vmem:[#allocation14 + $0x2b0] sm:$0xff]
        %v2861 = vld [vmem:[#allocation14 + $0x2b8] sm:$0xff]
        %v2862 = vld [vmem:[#allocation14 + $0x2c0] sm:$0xff]
        %v2863 = vld [vmem:[#allocation14 + $0x2c8] sm:$0xff]
        %v2864 = vld [vmem:[#allocation14 + $0x2d0] sm:$0xff]
        %v2865 = vld [vmem:[#allocation14 + $0x2d8] sm:$0xff]
        %v2866 = vld [vmem:[#allocation14 + $0x2e0] sm:$0xff]
        %v2867 = vld [vmem:[#allocation14 + $0x2e8] sm:$0xff]
        %v2868 = vld [vmem:[#allocation14 + $0x2f0] sm:$0xff]
        %v2869 = vld [vmem:[#allocation14 + $0x2f8] sm:$0xff]
        %v2870 = vld [vmem:[#allocation14 + $0x300] sm:$0xff]
        %v2871 = vld [vmem:[#allocation14 + $0x308] sm:$0xff]
        %v2872 = vld [vmem:[#allocation14 + $0x310] sm:$0xff]
        %v2873 = vld [vmem:[#allocation14 + $0x318] sm:$0xff]
        %v2874 = vld [vmem:[#allocation14 + $0x320] sm:$0xff]
        %v2875 = vld [vmem:[#allocation14 + $0x328] sm:$0xff]
        %v2876 = vld [vmem:[#allocation14 + $0x330] sm:$0xff]
        %v2877 = vld [vmem:[#allocation14 + $0x338] sm:$0xff]
        %v2878 = vld [vmem:[#allocation14 + $0x340] sm:$0xff]
        %v2879 = vld [vmem:[#allocation14 + $0x348] sm:$0xff]
        %v2880 = vld [vmem:[#allocation14 + $0x350] sm:$0xff]
        %v2881 = vld [vmem:[#allocation14 + $0x358] sm:$0xff]
        %v2882 = vld [vmem:[#allocation14 + $0x360] sm:$0xff]
        %v2883 = vld [vmem:[#allocation14 + $0x368] sm:$0xff]
        %v2884 = vld [vmem:[#allocation14 + $0x370] sm:$0xff]
        %v2885 = vld [vmem:[#allocation14 + $0x378] sm:$0xff]
        %v2886 = vld [vmem:[#allocation14 + $0x380] sm:$0xff]
        %v2887 = vld [vmem:[#allocation14 + $0x388] sm:$0xff]
        %v2888 = vld [vmem:[#allocation14 + $0x390] sm:$0xff]
        %v2889 = vld [vmem:[#allocation14 + $0x398] sm:$0xff]
        %v2890 = vld [vmem:[#allocation14 + $0x3a0] sm:$0xff]
        %v2891 = vld [vmem:[#allocation14 + $0x3a8] sm:$0xff]
        %v2892 = vld [vmem:[#allocation14 + $0x3b0] sm:$0xff]
        %v2893 = vld [vmem:[#allocation14 + $0x3b8] sm:$0xff]
        %v2894 = vld [vmem:[#allocation14 + $0x3c0] sm:$0xff]
        %v2895 = vld [vmem:[#allocation14 + $0x3c8] sm:$0xff]
        %v2896 = vld [vmem:[#allocation14 + $0x3d0] sm:$0xff]
        %v2897 = vld [vmem:[#allocation14 + $0x3d8] sm:$0xff]
        %v2898 = vld [vmem:[#allocation14 + $0x3e0] sm:$0xff]
        %v2899 = vld [vmem:[#allocation14 + $0x3e8] sm:$0xff]
        %v2900 = vld [vmem:[#allocation14 + $0x3f0] sm:$0xff]
        %v2901 = vld [vmem:[#allocation14 + $0x3f8] sm:$0xff]
        %v2902 = vld [vmem:[#allocation14 + $0x400] sm:$0xff]
        %v2903 = vld [vmem:[#allocation14 + $0x408] sm:$0xff]
        %v2904 = vld [vmem:[#allocation14 + $0x410] sm:$0xff]
        %v2905 = vld [vmem:[#allocation14 + $0x418] sm:$0xff]
        %v2906 = vld [vmem:[#allocation14 + $0x420] sm:$0xff]
        %v2907 = vld [vmem:[#allocation14 + $0x428] sm:$0xff]
        %v2908 = vld [vmem:[#allocation14 + $0x430] sm:$0xff]
        %v2909 = vld [vmem:[#allocation14 + $0x438] sm:$0xff]
        %v2910 = vld [vmem:[#allocation14 + $0x440] sm:$0xff]
        %v2911 = vld [vmem:[#allocation14 + $0x448] sm:$0xff]
        %v2912 = vld [vmem:[#allocation14 + $0x450] sm:$0xff]
        %v2913 = vld [vmem:[#allocation14 + $0x458] sm:$0xff]
        %v2914 = vld [vmem:[#allocation14 + $0x460] sm:$0xff]
        %v2915 = vld [vmem:[#allocation14 + $0x468] sm:$0xff]
        %v2916 = vld [vmem:[#allocation14 + $0x470] sm:$0xff]
        %v2917 = vld [vmem:[#allocation14 + $0x478] sm:$0xff]
        %v2918 = vld [vmem:[#allocation14 + $0x480] sm:$0xff]
        %v2919 = vld [vmem:[#allocation14 + $0x488] sm:$0xff]
        %v2920 = vld [vmem:[#allocation14 + $0x490] sm:$0xff]
        %v2921 = vld [vmem:[#allocation14 + $0x498] sm:$0xff]
        %v2922 = vld [vmem:[#allocation14 + $0x4a0] sm:$0xff]
        %v2923 = vld [vmem:[#allocation14 + $0x4a8] sm:$0xff]
        %v2924 = vld [vmem:[#allocation14 + $0x4b0] sm:$0xff]
        %v2925 = vld [vmem:[#allocation14 + $0x4b8] sm:$0xff]
        %v2926 = vld [vmem:[#allocation14 + $0x4c0] sm:$0xff]
        %v2927 = vld [vmem:[#allocation14 + $0x4c8] sm:$0xff]
        %v2928 = vld [vmem:[#allocation14 + $0x4d0] sm:$0xff]
        %v2929 = vld [vmem:[#allocation14 + $0x4d8] sm:$0xff]
        %v2930 = vld [vmem:[#allocation14 + $0x4e0] sm:$0xff]
        %v2931 = vld [vmem:[#allocation14 + $0x4e8] sm:$0xff]
        %v2932 = vld [vmem:[#allocation14 + $0x4f0] sm:$0xff]
        %v2933 = vld [vmem:[#allocation14 + $0x4f8] sm:$0xff]
        %v2934 = vld [vmem:[#allocation14 + $0x500] sm:$0xff]
        %v2935 = vld [vmem:[#allocation14 + $0x508] sm:$0xff]
        %v2936 = vld [vmem:[#allocation14 + $0x510] sm:$0xff]
        %v2937 = vld [vmem:[#allocation14 + $0x518] sm:$0xff]
        %v2938 = vld [vmem:[#allocation14 + $0x520] sm:$0xff]
        %v2939 = vld [vmem:[#allocation14 + $0x528] sm:$0xff]
        %v2940 = vld [vmem:[#allocation14 + $0x530] sm:$0xff]
        %v2941 = vld [vmem:[#allocation14 + $0x538] sm:$0xff]
        %v2942 = vld [vmem:[#allocation14 + $0x540] sm:$0xff]
        %v2943 = vld [vmem:[#allocation14 + $0x548] sm:$0xff]
        %v2944 = vld [vmem:[#allocation14 + $0x550] sm:$0xff]
        %v2945 = vld [vmem:[#allocation14 + $0x558] sm:$0xff]
        %v2946 = vld [vmem:[#allocation14 + $0x560] sm:$0xff]
        %v2947 = vld [vmem:[#allocation14 + $0x568] sm:$0xff]
        %v2948 = vld [vmem:[#allocation14 + $0x570] sm:$0xff]
        %v2949 = vld [vmem:[#allocation14 + $0x578] sm:$0xff]
        %v2950 = vld [vmem:[#allocation14 + $0x580] sm:$0xff]
        %v2951 = vld [vmem:[#allocation14 + $0x588] sm:$0xff]
        %v2952 = vld [vmem:[#allocation14 + $0x590] sm:$0xff]
        %v2953 = vld [vmem:[#allocation14 + $0x598] sm:$0xff]
        %v2954 = vld [vmem:[#allocation14 + $0x5a0] sm:$0xff]
        %v2955 = vld [vmem:[#allocation14 + $0x5a8] sm:$0xff]
        %v2956 = vld [vmem:[#allocation14 + $0x5b0] sm:$0xff]
        %v2957 = vld [vmem:[#allocation14 + $0x5b8] sm:$0xff]
        %v2958 = vld [vmem:[#allocation14 + $0x5c0] sm:$0xff]
        %v2959 = vld [vmem:[#allocation14 + $0x5c8] sm:$0xff]
        %v2960 = vld [vmem:[#allocation14 + $0x5d0] sm:$0xff]
        %v2961 = vld [vmem:[#allocation14 + $0x5d8] sm:$0xff]
        %v2962 = vld [vmem:[#allocation14 + $0x5e0] sm:$0xff]
        %v2963 = vld [vmem:[#allocation14 + $0x5e8] sm:$0xff]
        %v2964 = vld [vmem:[#allocation14 + $0x5f0] sm:$0xff]
        %v2965 = vld [vmem:[#allocation14 + $0x5f8] sm:$0xff]
        %v2966 = vld [vmem:[#allocation14 + $0x600] sm:$0xff]
        %v2967 = vld [vmem:[#allocation14 + $0x608] sm:$0xff]
        %v2968 = vld [vmem:[#allocation14 + $0x610] sm:$0xff]
        %v2969 = vld [vmem:[#allocation14 + $0x618] sm:$0xff]
        %v2970 = vld [vmem:[#allocation14 + $0x620] sm:$0xff]
        %v2971 = vld [vmem:[#allocation14 + $0x628] sm:$0xff]
        %v2972 = vld [vmem:[#allocation14 + $0x630] sm:$0xff]
        %v2973 = vld [vmem:[#allocation14 + $0x638] sm:$0xff]
        %v2974 = vld [vmem:[#allocation14 + $0x640] sm:$0xff]
        %v2975 = vld [vmem:[#allocation14 + $0x648] sm:$0xff]
        %v2976 = vld [vmem:[#allocation14 + $0x650] sm:$0xff]
        %v2977 = vld [vmem:[#allocation14 + $0x658] sm:$0xff]
        %v2978 = vld [vmem:[#allocation14 + $0x660] sm:$0xff]
        %v2979 = vld [vmem:[#allocation14 + $0x668] sm:$0xff]
        %v2980 = vld [vmem:[#allocation14 + $0x670] sm:$0xff]
        %v2981 = vld [vmem:[#allocation14 + $0x678] sm:$0xff]
        %v2982 = vld [vmem:[#allocation14 + $0x680] sm:$0xff]
        %v2983 = vld [vmem:[#allocation14 + $0x688] sm:$0xff]
        %v2984 = vld [vmem:[#allocation14 + $0x690] sm:$0xff]
        %v2985 = vld [vmem:[#allocation14 + $0x698] sm:$0xff]
        %v2986 = vld [vmem:[#allocation14 + $0x6a0] sm:$0xff]
        %v2987 = vld [vmem:[#allocation14 + $0x6a8] sm:$0xff]
        %v2988 = vld [vmem:[#allocation14 + $0x6b0] sm:$0xff]
        %v2989 = vld [vmem:[#allocation14 + $0x6b8] sm:$0xff]
        %v2990 = vld [vmem:[#allocation14 + $0x6c0] sm:$0xff]
        %v2991 = vld [vmem:[#allocation14 + $0x6c8] sm:$0xff]
        %v2992 = vld [vmem:[#allocation14 + $0x6d0] sm:$0xff]
        %v2993 = vld [vmem:[#allocation14 + $0x6d8] sm:$0xff]
        %v2994 = vld [vmem:[#allocation14 + $0x6e0] sm:$0xff]
        %v2995 = vld [vmem:[#allocation14 + $0x6e8] sm:$0xff]
        %v2996 = vld [vmem:[#allocation14 + $0x6f0] sm:$0xff]
        %v2997 = vld [vmem:[#allocation14 + $0x6f8] sm:$0xff]
        %v2998 = vld [vmem:[#allocation14 + $0x700] sm:$0xff]
        %v2999 = vld [vmem:[#allocation14 + $0x708] sm:$0xff]
        %v3000 = vld [vmem:[#allocation14 + $0x710] sm:$0xff]
        %v3001 = vld [vmem:[#allocation14 + $0x718] sm:$0xff]
        %v3002 = vld [vmem:[#allocation14 + $0x720] sm:$0xff]
        %v3003 = vld [vmem:[#allocation14 + $0x728] sm:$0xff]
        %v3004 = vld [vmem:[#allocation14 + $0x730] sm:$0xff]
        %v3005 = vld [vmem:[#allocation14 + $0x738] sm:$0xff]
        %v3006 = vld [vmem:[#allocation14 + $0x740] sm:$0xff]
        %v3007 = vld [vmem:[#allocation14 + $0x748] sm:$0xff]
        %v3008 = vld [vmem:[#allocation14 + $0x750] sm:$0xff]
        %v3009 = vld [vmem:[#allocation14 + $0x758] sm:$0xff]
        %v3010 = vld [vmem:[#allocation14 + $0x760] sm:$0xff]
        %v3011 = vld [vmem:[#allocation14 + $0x768] sm:$0xff]
        %v3012 = vld [vmem:[#allocation14 + $0x770] sm:$0xff]
        %v3013 = vld [vmem:[#allocation14 + $0x778] sm:$0xff]
        %v3014 = vld [vmem:[#allocation14 + $0x780] sm:$0xff]
        %v3015 = vld [vmem:[#allocation14 + $0x788] sm:$0xff]
        %v3016 = vld [vmem:[#allocation14 + $0x790] sm:$0xff]
        %v3017 = vld [vmem:[#allocation14 + $0x798] sm:$0xff]
        %v3018 = vld [vmem:[#allocation14 + $0x7a0] sm:$0xff]
        %v3019 = vld [vmem:[#allocation14 + $0x7a8] sm:$0xff]
        %v3020 = vld [vmem:[#allocation14 + $0x7b0] sm:$0xff]
        %v3021 = vld [vmem:[#allocation14 + $0x7b8] sm:$0xff]
        %v3022 = vld [vmem:[#allocation14 + $0x7c0] sm:$0xff]
        %v3023 = vld [vmem:[#allocation14 + $0x7c8] sm:$0xff]
        %v3024 = vld [vmem:[#allocation14 + $0x7d0] sm:$0xff]
        %v3025 = vld [vmem:[#allocation14 + $0x7d8] sm:$0xff]
        %v3026 = vld [vmem:[#allocation14 + $0x7e0] sm:$0xff]
        %v3027 = vld [vmem:[#allocation14 + $0x7e8] sm:$0xff]
        %v3028 = vld [vmem:[#allocation14 + $0x7f0] sm:$0xff]
        %v3029 = vld [vmem:[#allocation14 + $0x7f8] sm:$0xff]
        %v3030 = vld [vmem:[%s17] sm:$0x1]
        %v3032 = vlaneseq
        %v3033 = vshrl.u32 %v3032, 7
        %v3034 = vsub.s32 0, %v3033
        %v3035 = vrot.slane %v3030, %v3034
        %3037 = vmatprep.subr.mxu0 0.0
        %3038 = vmatpush1.msra.mxu0 %v2774
        %3039 = vmatprep.subr.mxu0 0.0
        %3040 = vmatpush1.msra.mxu0 %v2775
        %3041 = vmatprep.subr.mxu0 0.0
        %3042 = vmatpush1.msra.mxu0 %v2776
        %3043 = vmatprep.subr.mxu0 0.0
        %3044 = vmatpush1.msra.mxu0 %v2777
        %3045 = vmatprep.subr.mxu0 0.0
        %3046 = vmatpush1.msra.mxu0 %v2778
        %3047 = vmatprep.subr.mxu0 0.0
        %3048 = vmatpush1.msra.mxu0 %v2779
        %3049 = vmatprep.subr.mxu0 0.0
        %3050 = vmatpush1.msra.mxu0 %v2780
        %3051 = vmatprep.subr.mxu0 0.0
        %3052 = vmatpush1.msra.mxu0 %v2781
        %3053 = vmatprep.subr.mxu0 0.0
        %3054 = vmatpush1.msra.mxu0 %v2782
        %3055 = vmatprep.subr.mxu0 0.0
        %3056 = vmatpush1.msra.mxu0 %v2783
        %3057 = vmatprep.subr.mxu0 0.0
        %3058 = vmatpush1.msra.mxu0 %v2784
        %3059 = vmatprep.subr.mxu0 0.0
        %3060 = vmatpush1.msra.mxu0 %v2785
        %3061 = vmatprep.subr.mxu0 0.0
        %3062 = vmatpush1.msra.mxu0 %v2786
        %3063 = vmatprep.subr.mxu0 0.0
        %3064 = vmatpush1.msra.mxu0 %v2787
        %3065 = vmatprep.subr.mxu0 0.0
        %3066 = vmatpush1.msra.mxu0 %v2788
        %3067 = vmatprep.subr.mxu0 0.0
        %3068 = vmatpush1.msra.mxu0 %v2789
        %3069 = vmatprep.subr.mxu0 0.0
        %3070 = vmatpush1.msra.mxu0 %v2790
        %3071 = vmatprep.subr.mxu0 0.0
        %3072 = vmatpush1.msra.mxu0 %v2791
        %3073 = vmatprep.subr.mxu0 0.0
        %3074 = vmatpush1.msra.mxu0 %v2792
        %3075 = vmatprep.subr.mxu0 0.0
        %3076 = vmatpush1.msra.mxu0 %v2793
        %3077 = vmatprep.subr.mxu0 0.0
        %3078 = vmatpush1.msra.mxu0 %v2794
        %3079 = vmatprep.subr.mxu0 0.0
        %3080 = vmatpush1.msra.mxu0 %v2795
        %3081 = vmatprep.subr.mxu0 0.0
        %3082 = vmatpush1.msra.mxu0 %v2796
        %3083 = vmatprep.subr.mxu0 0.0
        %3084 = vmatpush1.msra.mxu0 %v2797
        %3085 = vmatprep.subr.mxu0 0.0
        %3086 = vmatpush1.msra.mxu0 %v2798
        %3087 = vmatprep.subr.mxu0 0.0
        %3088 = vmatpush1.msra.mxu0 %v2799
        %3089 = vmatprep.subr.mxu0 0.0
        %3090 = vmatpush1.msra.mxu0 %v2800
        %3091 = vmatprep.subr.mxu0 0.0
        %3092 = vmatpush1.msra.mxu0 %v2801
        %3093 = vmatprep.subr.mxu0 0.0
        %3094 = vmatpush1.msra.mxu0 %v2802
        %3095 = vmatprep.subr.mxu0 0.0
        %3096 = vmatpush1.msra.mxu0 %v2803
        %3097 = vmatprep.subr.mxu0 0.0
        %3098 = vmatpush1.msra.mxu0 %v2804
        %3099 = vmatprep.subr.mxu0 0.0
        %3100 = vmatpush1.msra.mxu0 %v2805
        %3101 = vmatprep.mubr.f32.mxu0 %v2759
        %3102 = vmatmul.mubr.f32.gmra.mrb[0].mxu0 %v2758
        %v3103 = vpop.f32.mrb[0].mxu0
        %v3104 = vadd.f32 %v3035, %v3103
        %v3105 = vpop.f32.mrb[0].mxu0
        %3106 = vdwg.mxu0
        %3107 = vmatprep.subr.mxu0 0.0
        %3108 = vmatpush1.msra.mxu0 %v2806
        %3109 = vmatprep.subr.mxu0 0.0
        %3110 = vmatpush1.msra.mxu0 %v2807
        %3111 = vmatprep.subr.mxu0 0.0
        %3112 = vmatpush1.msra.mxu0 %v2808
        %3113 = vmatprep.subr.mxu0 0.0
        %3114 = vmatpush1.msra.mxu0 %v2809
        %3115 = vmatprep.subr.mxu0 0.0
        %3116 = vmatpush1.msra.mxu0 %v2810
        %3117 = vmatprep.subr.mxu0 0.0
        %3118 = vmatpush1.msra.mxu0 %v2811
        %3119 = vmatprep.subr.mxu0 0.0
        %3120 = vmatpush1.msra.mxu0 %v2812
        %3121 = vmatprep.subr.mxu0 0.0
        %3122 = vmatpush1.msra.mxu0 %v2813
        %3123 = vmatprep.subr.mxu0 0.0
        %3124 = vmatpush1.msra.mxu0 %v2814
        %3125 = vmatprep.subr.mxu0 0.0
        %3126 = vmatpush1.msra.mxu0 %v2815
        %3127 = vmatprep.subr.mxu0 0.0
        %3128 = vmatpush1.msra.mxu0 %v2816
        %3129 = vmatprep.subr.mxu0 0.0
        %3130 = vmatpush1.msra.mxu0 %v2817
        %3131 = vmatprep.subr.mxu0 0.0
        %3132 = vmatpush1.msra.mxu0 %v2818
        %3133 = vmatprep.subr.mxu0 0.0
        %3134 = vmatpush1.msra.mxu0 %v2819
        %3135 = vmatprep.subr.mxu0 0.0
        %3136 = vmatpush1.msra.mxu0 %v2820
        %3137 = vmatprep.subr.mxu0 0.0
        %3138 = vmatpush1.msra.mxu0 %v2821
        %3139 = vmatprep.subr.mxu0 0.0
        %3140 = vmatpush1.msra.mxu0 %v2822
        %3141 = vmatprep.subr.mxu0 0.0
        %3142 = vmatpush1.msra.mxu0 %v2823
        %3143 = vmatprep.subr.mxu0 0.0
        %3144 = vmatpush1.msra.mxu0 %v2824
        %3145 = vmatprep.subr.mxu0 0.0
        %3146 = vmatpush1.msra.mxu0 %v2825
        %3147 = vmatprep.subr.mxu0 0.0
        %3148 = vmatpush1.msra.mxu0 %v2826
        %3149 = vmatprep.subr.mxu0 0.0
        %3150 = vmatpush1.msra.mxu0 %v2827
        %3151 = vmatprep.subr.mxu0 0.0
        %3152 = vmatpush1.msra.mxu0 %v2828
        %3153 = vmatprep.subr.mxu0 0.0
        %3154 = vmatpush1.msra.mxu0 %v2829
        %3155 = vmatprep.subr.mxu0 0.0
        %3156 = vmatpush1.msra.mxu0 %v2830
        %3157 = vmatprep.subr.mxu0 0.0
        %3158 = vmatpush1.msra.mxu0 %v2831
        %3159 = vmatprep.subr.mxu0 0.0
        %3160 = vmatpush1.msra.mxu0 %v2832
        %3161 = vmatprep.subr.mxu0 0.0
        %3162 = vmatpush1.msra.mxu0 %v2833
        %3163 = vmatprep.subr.mxu0 0.0
        %3164 = vmatpush1.msra.mxu0 %v2834
        %3165 = vmatprep.subr.mxu0 0.0
        %3166 = vmatpush1.msra.mxu0 %v2835
        %3167 = vmatprep.subr.mxu0 0.0
        %3168 = vmatpush1.msra.mxu0 %v2836
        %3169 = vmatprep.subr.mxu0 0.0
        %3170 = vmatpush1.msra.mxu0 %v2837
        %3171 = vmatprep.mubr.f32.mxu0 %v2761
        %3172 = vmatmul.mubr.f32.gmra.mrb[0].mxu0 %v2760
        %v3173 = vpop.f32.mrb[0].mxu0
        %v3174 = vadd.f32 %v3104, %v3173
        %v3175 = vpop.f32.mrb[0].mxu0
        %3176 = vdwg.mxu0
        %3177 = vmatprep.subr.mxu0 0.0
        %3178 = vmatpush1.msra.mxu0 %v2838
        %3179 = vmatprep.subr.mxu0 0.0
        %3180 = vmatpush1.msra.mxu0 %v2839
        %3181 = vmatprep.subr.mxu0 0.0
        %3182 = vmatpush1.msra.mxu0 %v2840
        %3183 = vmatprep.subr.mxu0 0.0
        %3184 = vmatpush1.msra.mxu0 %v2841
        %3185 = vmatprep.subr.mxu0 0.0
        %3186 = vmatpush1.msra.mxu0 %v2842
        %3187 = vmatprep.subr.mxu0 0.0
        %3188 = vmatpush1.msra.mxu0 %v2843
        %3189 = vmatprep.subr.mxu0 0.0
        %3190 = vmatpush1.msra.mxu0 %v2844
        %3191 = vmatprep.subr.mxu0 0.0
        %3192 = vmatpush1.msra.mxu0 %v2845
        %3193 = vmatprep.subr.mxu0 0.0
        %3194 = vmatpush1.msra.mxu0 %v2846
        %3195 = vmatprep.subr.mxu0 0.0
        %3196 = vmatpush1.msra.mxu0 %v2847
        %3197 = vmatprep.subr.mxu0 0.0
        %3198 = vmatpush1.msra.mxu0 %v2848
        %3199 = vmatprep.subr.mxu0 0.0
        %3200 = vmatpush1.msra.mxu0 %v2849
        %3201 = vmatprep.subr.mxu0 0.0
        %3202 = vmatpush1.msra.mxu0 %v2850
        %3203 = vmatprep.subr.mxu0 0.0
        %3204 = vmatpush1.msra.mxu0 %v2851
        %3205 = vmatprep.subr.mxu0 0.0
        %3206 = vmatpush1.msra.mxu0 %v2852
        %3207 = vmatprep.subr.mxu0 0.0
        %3208 = vmatpush1.msra.mxu0 %v2853
        %3209 = vmatprep.subr.mxu0 0.0
        %3210 = vmatpush1.msra.mxu0 %v2854
        %3211 = vmatprep.subr.mxu0 0.0
        %3212 = vmatpush1.msra.mxu0 %v2855
        %3213 = vmatprep.subr.mxu0 0.0
        %3214 = vmatpush1.msra.mxu0 %v2856
        %3215 = vmatprep.subr.mxu0 0.0
        %3216 = vmatpush1.msra.mxu0 %v2857
        %3217 = vmatprep.subr.mxu0 0.0
        %3218 = vmatpush1.msra.mxu0 %v2858
        %3219 = vmatprep.subr.mxu0 0.0
        %3220 = vmatpush1.msra.mxu0 %v2859
        %3221 = vmatprep.subr.mxu0 0.0
        %3222 = vmatpush1.msra.mxu0 %v2860
        %3223 = vmatprep.subr.mxu0 0.0
        %3224 = vmatpush1.msra.mxu0 %v2861
        %3225 = vmatprep.subr.mxu0 0.0
        %3226 = vmatpush1.msra.mxu0 %v2862
        %3227 = vmatprep.subr.mxu0 0.0
        %3228 = vmatpush1.msra.mxu0 %v2863
        %3229 = vmatprep.subr.mxu0 0.0
        %3230 = vmatpush1.msra.mxu0 %v2864
        %3231 = vmatprep.subr.mxu0 0.0
        %3232 = vmatpush1.msra.mxu0 %v2865
        %3233 = vmatprep.subr.mxu0 0.0
        %3234 = vmatpush1.msra.mxu0 %v2866
        %3235 = vmatprep.subr.mxu0 0.0
        %3236 = vmatpush1.msra.mxu0 %v2867
        %3237 = vmatprep.subr.mxu0 0.0
        %3238 = vmatpush1.msra.mxu0 %v2868
        %3239 = vmatprep.subr.mxu0 0.0
        %3240 = vmatpush1.msra.mxu0 %v2869
        %3241 = vmatprep.mubr.f32.mxu0 %v2763
        %3242 = vmatmul.mubr.f32.gmra.mrb[0].mxu0 %v2762
        %v3243 = vpop.f32.mrb[0].mxu0
        %v3244 = vadd.f32 %v3174, %v3243
        %v3245 = vpop.f32.mrb[0].mxu0
        %3246 = vdwg.mxu0
        %3247 = vmatprep.subr.mxu0 0.0
        %3248 = vmatpush1.msra.mxu0 %v2870
        %3249 = vmatprep.subr.mxu0 0.0
        %3250 = vmatpush1.msra.mxu0 %v2871
        %3251 = vmatprep.subr.mxu0 0.0
        %3252 = vmatpush1.msra.mxu0 %v2872
        %3253 = vmatprep.subr.mxu0 0.0
        %3254 = vmatpush1.msra.mxu0 %v2873
        %3255 = vmatprep.subr.mxu0 0.0
        %3256 = vmatpush1.msra.mxu0 %v2874
        %3257 = vmatprep.subr.mxu0 0.0
        %3258 = vmatpush1.msra.mxu0 %v2875
        %3259 = vmatprep.subr.mxu0 0.0
        %3260 = vmatpush1.msra.mxu0 %v2876
        %3261 = vmatprep.subr.mxu0 0.0
        %3262 = vmatpush1.msra.mxu0 %v2877
        %3263 = vmatprep.subr.mxu0 0.0
        %3264 = vmatpush1.msra.mxu0 %v2878
        %3265 = vmatprep.subr.mxu0 0.0
        %3266 = vmatpush1.msra.mxu0 %v2879
        %3267 = vmatprep.subr.mxu0 0.0
        %3268 = vmatpush1.msra.mxu0 %v2880
        %3269 = vmatprep.subr.mxu0 0.0
        %3270 = vmatpush1.msra.mxu0 %v2881
        %3271 = vmatprep.subr.mxu0 0.0
        %3272 = vmatpush1.msra.mxu0 %v2882
        %3273 = vmatprep.subr.mxu0 0.0
        %3274 = vmatpush1.msra.mxu0 %v2883
        %3275 = vmatprep.subr.mxu0 0.0
        %3276 = vmatpush1.msra.mxu0 %v2884
        %3277 = vmatprep.subr.mxu0 0.0
        %3278 = vmatpush1.msra.mxu0 %v2885
        %3279 = vmatprep.subr.mxu0 0.0
        %3280 = vmatpush1.msra.mxu0 %v2886
        %3281 = vmatprep.subr.mxu0 0.0
        %3282 = vmatpush1.msra.mxu0 %v2887
        %3283 = vmatprep.subr.mxu0 0.0
        %3284 = vmatpush1.msra.mxu0 %v2888
        %3285 = vmatprep.subr.mxu0 0.0
        %3286 = vmatpush1.msra.mxu0 %v2889
        %3287 = vmatprep.subr.mxu0 0.0
        %3288 = vmatpush1.msra.mxu0 %v2890
        %3289 = vmatprep.subr.mxu0 0.0
        %3290 = vmatpush1.msra.mxu0 %v2891
        %3291 = vmatprep.subr.mxu0 0.0
        %3292 = vmatpush1.msra.mxu0 %v2892
        %3293 = vmatprep.subr.mxu0 0.0
        %3294 = vmatpush1.msra.mxu0 %v2893
        %3295 = vmatprep.subr.mxu0 0.0
        %3296 = vmatpush1.msra.mxu0 %v2894
        %3297 = vmatprep.subr.mxu0 0.0
        %3298 = vmatpush1.msra.mxu0 %v2895
        %3299 = vmatprep.subr.mxu0 0.0
        %3300 = vmatpush1.msra.mxu0 %v2896
        %3301 = vmatprep.subr.mxu0 0.0
        %3302 = vmatpush1.msra.mxu0 %v2897
        %3303 = vmatprep.subr.mxu0 0.0
        %3304 = vmatpush1.msra.mxu0 %v2898
        %3305 = vmatprep.subr.mxu0 0.0
        %3306 = vmatpush1.msra.mxu0 %v2899
        %3307 = vmatprep.subr.mxu0 0.0
        %3308 = vmatpush1.msra.mxu0 %v2900
        %3309 = vmatprep.subr.mxu0 0.0
        %3310 = vmatpush1.msra.mxu0 %v2901
        %3311 = vmatprep.mubr.f32.mxu0 %v2765
        %3312 = vmatmul.mubr.f32.gmra.mrb[0].mxu0 %v2764
        %v3313 = vpop.f32.mrb[0].mxu0
        %v3314 = vadd.f32 %v3244, %v3313
        %v3315 = vpop.f32.mrb[0].mxu0
        %3316 = vdwg.mxu0
        %3317 = vmatprep.subr.mxu0 0.0
        %3318 = vmatpush1.msra.mxu0 %v2902
        %3319 = vmatprep.subr.mxu0 0.0
        %3320 = vmatpush1.msra.mxu0 %v2903
        %3321 = vmatprep.subr.mxu0 0.0
        %3322 = vmatpush1.msra.mxu0 %v2904
        %3323 = vmatprep.subr.mxu0 0.0
        %3324 = vmatpush1.msra.mxu0 %v2905
        %3325 = vmatprep.subr.mxu0 0.0
        %3326 = vmatpush1.msra.mxu0 %v2906
        %3327 = vmatprep.subr.mxu0 0.0
        %3328 = vmatpush1.msra.mxu0 %v2907
        %3329 = vmatprep.subr.mxu0 0.0
        %3330 = vmatpush1.msra.mxu0 %v2908
        %3331 = vmatprep.subr.mxu0 0.0
        %3332 = vmatpush1.msra.mxu0 %v2909
        %3333 = vmatprep.subr.mxu0 0.0
        %3334 = vmatpush1.msra.mxu0 %v2910
        %3335 = vmatprep.subr.mxu0 0.0
        %3336 = vmatpush1.msra.mxu0 %v2911
        %3337 = vmatprep.subr.mxu0 0.0
        %3338 = vmatpush1.msra.mxu0 %v2912
        %3339 = vmatprep.subr.mxu0 0.0
        %3340 = vmatpush1.msra.mxu0 %v2913
        %3341 = vmatprep.subr.mxu0 0.0
        %3342 = vmatpush1.msra.mxu0 %v2914
        %3343 = vmatprep.subr.mxu0 0.0
        %3344 = vmatpush1.msra.mxu0 %v2915
        %3345 = vmatprep.subr.mxu0 0.0
        %3346 = vmatpush1.msra.mxu0 %v2916
        %3347 = vmatprep.subr.mxu0 0.0
        %3348 = vmatpush1.msra.mxu0 %v2917
        %3349 = vmatprep.subr.mxu0 0.0
        %3350 = vmatpush1.msra.mxu0 %v2918
        %3351 = vmatprep.subr.mxu0 0.0
        %3352 = vmatpush1.msra.mxu0 %v2919
        %3353 = vmatprep.subr.mxu0 0.0
        %3354 = vmatpush1.msra.mxu0 %v2920
        %3355 = vmatprep.subr.mxu0 0.0
        %3356 = vmatpush1.msra.mxu0 %v2921
        %3357 = vmatprep.subr.mxu0 0.0
        %3358 = vmatpush1.msra.mxu0 %v2922
        %3359 = vmatprep.subr.mxu0 0.0
        %3360 = vmatpush1.msra.mxu0 %v2923
        %3361 = vmatprep.subr.mxu0 0.0
        %3362 = vmatpush1.msra.mxu0 %v2924
        %3363 = vmatprep.subr.mxu0 0.0
        %3364 = vmatpush1.msra.mxu0 %v2925
        %3365 = vmatprep.subr.mxu0 0.0
        %3366 = vmatpush1.msra.mxu0 %v2926
        %3367 = vmatprep.subr.mxu0 0.0
        %3368 = vmatpush1.msra.mxu0 %v2927
        %3369 = vmatprep.subr.mxu0 0.0
        %3370 = vmatpush1.msra.mxu0 %v2928
        %3371 = vmatprep.subr.mxu0 0.0
        %3372 = vmatpush1.msra.mxu0 %v2929
        %3373 = vmatprep.subr.mxu0 0.0
        %3374 = vmatpush1.msra.mxu0 %v2930
        %3375 = vmatprep.subr.mxu0 0.0
        %3376 = vmatpush1.msra.mxu0 %v2931
        %3377 = vmatprep.subr.mxu0 0.0
        %3378 = vmatpush1.msra.mxu0 %v2932
        %3379 = vmatprep.subr.mxu0 0.0
        %3380 = vmatpush1.msra.mxu0 %v2933
        %3381 = vmatprep.mubr.f32.mxu0 %v2767
        %3382 = vmatmul.mubr.f32.gmra.mrb[0].mxu0 %v2766
        %v3383 = vpop.f32.mrb[0].mxu0
        %v3384 = vadd.f32 %v3314, %v3383
        %v3385 = vpop.f32.mrb[0].mxu0
        %3386 = vdwg.mxu0
        %3387 = vmatprep.subr.mxu0 0.0
        %3388 = vmatpush1.msra.mxu0 %v2934
        %3389 = vmatprep.subr.mxu0 0.0
        %3390 = vmatpush1.msra.mxu0 %v2935
        %3391 = vmatprep.subr.mxu0 0.0
        %3392 = vmatpush1.msra.mxu0 %v2936
        %3393 = vmatprep.subr.mxu0 0.0
        %3394 = vmatpush1.msra.mxu0 %v2937
        %3395 = vmatprep.subr.mxu0 0.0
        %3396 = vmatpush1.msra.mxu0 %v2938
        %3397 = vmatprep.subr.mxu0 0.0
        %3398 = vmatpush1.msra.mxu0 %v2939
        %3399 = vmatprep.subr.mxu0 0.0
        %3400 = vmatpush1.msra.mxu0 %v2940
        %3401 = vmatprep.subr.mxu0 0.0
        %3402 = vmatpush1.msra.mxu0 %v2941
        %3403 = vmatprep.subr.mxu0 0.0
        %3404 = vmatpush1.msra.mxu0 %v2942
        %3405 = vmatprep.subr.mxu0 0.0
        %3406 = vmatpush1.msra.mxu0 %v2943
        %3407 = vmatprep.subr.mxu0 0.0
        %3408 = vmatpush1.msra.mxu0 %v2944
        %3409 = vmatprep.subr.mxu0 0.0
        %3410 = vmatpush1.msra.mxu0 %v2945
        %3411 = vmatprep.subr.mxu0 0.0
        %3412 = vmatpush1.msra.mxu0 %v2946
        %3413 = vmatprep.subr.mxu0 0.0
        %3414 = vmatpush1.msra.mxu0 %v2947
        %3415 = vmatprep.subr.mxu0 0.0
        %3416 = vmatpush1.msra.mxu0 %v2948
        %3417 = vmatprep.subr.mxu0 0.0
        %3418 = vmatpush1.msra.mxu0 %v2949
        %3419 = vmatprep.subr.mxu0 0.0
        %3420 = vmatpush1.msra.mxu0 %v2950
        %3421 = vmatprep.subr.mxu0 0.0
        %3422 = vmatpush1.msra.mxu0 %v2951
        %3423 = vmatprep.subr.mxu0 0.0
        %3424 = vmatpush1.msra.mxu0 %v2952
        %3425 = vmatprep.subr.mxu0 0.0
        %3426 = vmatpush1.msra.mxu0 %v2953
        %3427 = vmatprep.subr.mxu0 0.0
        %3428 = vmatpush1.msra.mxu0 %v2954
        %3429 = vmatprep.subr.mxu0 0.0
        %3430 = vmatpush1.msra.mxu0 %v2955
        %3431 = vmatprep.subr.mxu0 0.0
        %3432 = vmatpush1.msra.mxu0 %v2956
        %3433 = vmatprep.subr.mxu0 0.0
        %3434 = vmatpush1.msra.mxu0 %v2957
        %3435 = vmatprep.subr.mxu0 0.0
        %3436 = vmatpush1.msra.mxu0 %v2958
        %3437 = vmatprep.subr.mxu0 0.0
        %3438 = vmatpush1.msra.mxu0 %v2959
        %3439 = vmatprep.subr.mxu0 0.0
        %3440 = vmatpush1.msra.mxu0 %v2960
        %3441 = vmatprep.subr.mxu0 0.0
        %3442 = vmatpush1.msra.mxu0 %v2961
        %3443 = vmatprep.subr.mxu0 0.0
        %3444 = vmatpush1.msra.mxu0 %v2962
        %3445 = vmatprep.subr.mxu0 0.0
        %3446 = vmatpush1.msra.mxu0 %v2963
        %3447 = vmatprep.subr.mxu0 0.0
        %3448 = vmatpush1.msra.mxu0 %v2964
        %3449 = vmatprep.subr.mxu0 0.0
        %3450 = vmatpush1.msra.mxu0 %v2965
        %3451 = vmatprep.mubr.f32.mxu0 %v2769
        %3452 = vmatmul.mubr.f32.gmra.mrb[0].mxu0 %v2768
        %v3453 = vpop.f32.mrb[0].mxu0
        %v3454 = vadd.f32 %v3384, %v3453
        %v3455 = vpop.f32.mrb[0].mxu0
        %3456 = vdwg.mxu0
        %3457 = vmatprep.subr.mxu0 0.0
        %3458 = vmatpush1.msra.mxu0 %v2966
        %3459 = vmatprep.subr.mxu0 0.0
        %3460 = vmatpush1.msra.mxu0 %v2967
        %3461 = vmatprep.subr.mxu0 0.0
        %3462 = vmatpush1.msra.mxu0 %v2968
        %3463 = vmatprep.subr.mxu0 0.0
        %3464 = vmatpush1.msra.mxu0 %v2969
        %3465 = vmatprep.subr.mxu0 0.0
        %3466 = vmatpush1.msra.mxu0 %v2970
        %3467 = vmatprep.subr.mxu0 0.0
        %3468 = vmatpush1.msra.mxu0 %v2971
        %3469 = vmatprep.subr.mxu0 0.0
        %3470 = vmatpush1.msra.mxu0 %v2972
        %3471 = vmatprep.subr.mxu0 0.0
        %3472 = vmatpush1.msra.mxu0 %v2973
        %3473 = vmatprep.subr.mxu0 0.0
        %3474 = vmatpush1.msra.mxu0 %v2974
        %3475 = vmatprep.subr.mxu0 0.0
        %3476 = vmatpush1.msra.mxu0 %v2975
        %3477 = vmatprep.subr.mxu0 0.0
        %3478 = vmatpush1.msra.mxu0 %v2976
        %3479 = vmatprep.subr.mxu0 0.0
        %3480 = vmatpush1.msra.mxu0 %v2977
        %3481 = vmatprep.subr.mxu0 0.0
        %3482 = vmatpush1.msra.mxu0 %v2978
        %3483 = vmatprep.subr.mxu0 0.0
        %3484 = vmatpush1.msra.mxu0 %v2979
        %3485 = vmatprep.subr.mxu0 0.0
        %3486 = vmatpush1.msra.mxu0 %v2980
        %3487 = vmatprep.subr.mxu0 0.0
        %3488 = vmatpush1.msra.mxu0 %v2981
        %3489 = vmatprep.subr.mxu0 0.0
        %3490 = vmatpush1.msra.mxu0 %v2982
        %3491 = vmatprep.subr.mxu0 0.0
        %3492 = vmatpush1.msra.mxu0 %v2983
        %3493 = vmatprep.subr.mxu0 0.0
        %3494 = vmatpush1.msra.mxu0 %v2984
        %3495 = vmatprep.subr.mxu0 0.0
        %3496 = vmatpush1.msra.mxu0 %v2985
        %3497 = vmatprep.subr.mxu0 0.0
        %3498 = vmatpush1.msra.mxu0 %v2986
        %3499 = vmatprep.subr.mxu0 0.0
        %3500 = vmatpush1.msra.mxu0 %v2987
        %3501 = vmatprep.subr.mxu0 0.0
        %3502 = vmatpush1.msra.mxu0 %v2988
        %3503 = vmatprep.subr.mxu0 0.0
        %3504 = vmatpush1.msra.mxu0 %v2989
        %3505 = vmatprep.subr.mxu0 0.0
        %3506 = vmatpush1.msra.mxu0 %v2990
        %3507 = vmatprep.subr.mxu0 0.0
        %3508 = vmatpush1.msra.mxu0 %v2991
        %3509 = vmatprep.subr.mxu0 0.0
        %3510 = vmatpush1.msra.mxu0 %v2992
        %3511 = vmatprep.subr.mxu0 0.0
        %3512 = vmatpush1.msra.mxu0 %v2993
        %3513 = vmatprep.subr.mxu0 0.0
        %3514 = vmatpush1.msra.mxu0 %v2994
        %3515 = vmatprep.subr.mxu0 0.0
        %3516 = vmatpush1.msra.mxu0 %v2995
        %3517 = vmatprep.subr.mxu0 0.0
        %3518 = vmatpush1.msra.mxu0 %v2996
        %3519 = vmatprep.subr.mxu0 0.0
        %3520 = vmatpush1.msra.mxu0 %v2997
        %3521 = vmatprep.mubr.f32.mxu0 %v2771
        %3522 = vmatmul.mubr.f32.gmra.mrb[0].mxu0 %v2770
        %v3523 = vpop.f32.mrb[0].mxu0
        %v3524 = vadd.f32 %v3454, %v3523
        %v3525 = vpop.f32.mrb[0].mxu0
        %3526 = vdwg.mxu0
        %3527 = vmatprep.subr.mxu0 0.0
        %3528 = vmatpush1.msra.mxu0 %v2998
        %3529 = vmatprep.subr.mxu0 0.0
        %3530 = vmatpush1.msra.mxu0 %v2999
        %3531 = vmatprep.subr.mxu0 0.0
        %3532 = vmatpush1.msra.mxu0 %v3000
        %3533 = vmatprep.subr.mxu0 0.0
        %3534 = vmatpush1.msra.mxu0 %v3001
        %3535 = vmatprep.subr.mxu0 0.0
        %3536 = vmatpush1.msra.mxu0 %v3002
        %3537 = vmatprep.subr.mxu0 0.0
        %3538 = vmatpush1.msra.mxu0 %v3003
        %3539 = vmatprep.subr.mxu0 0.0
        %3540 = vmatpush1.msra.mxu0 %v3004
        %3541 = vmatprep.subr.mxu0 0.0
        %3542 = vmatpush1.msra.mxu0 %v3005
        %3543 = vmatprep.subr.mxu0 0.0
        %3544 = vmatpush1.msra.mxu0 %v3006
        %3545 = vmatprep.subr.mxu0 0.0
        %3546 = vmatpush1.msra.mxu0 %v3007
        %3547 = vmatprep.subr.mxu0 0.0
        %3548 = vmatpush1.msra.mxu0 %v3008
        %3549 = vmatprep.subr.mxu0 0.0
        %3550 = vmatpush1.msra.mxu0 %v3009
        %3551 = vmatprep.subr.mxu0 0.0
        %3552 = vmatpush1.msra.mxu0 %v3010
        %3553 = vmatprep.subr.mxu0 0.0
        %3554 = vmatpush1.msra.mxu0 %v3011
        %3555 = vmatprep.subr.mxu0 0.0
        %3556 = vmatpush1.msra.mxu0 %v3012
        %3557 = vmatprep.subr.mxu0 0.0
        %3558 = vmatpush1.msra.mxu0 %v3013
        %3559 = vmatprep.subr.mxu0 0.0
        %3560 = vmatpush1.msra.mxu0 %v3014
        %3561 = vmatprep.subr.mxu0 0.0
        %3562 = vmatpush1.msra.mxu0 %v3015
        %3563 = vmatprep.subr.mxu0 0.0
        %3564 = vmatpush1.msra.mxu0 %v3016
        %3565 = vmatprep.subr.mxu0 0.0
        %3566 = vmatpush1.msra.mxu0 %v3017
        %3567 = vmatprep.subr.mxu0 0.0
        %3568 = vmatpush1.msra.mxu0 %v3018
        %3569 = vmatprep.subr.mxu0 0.0
        %3570 = vmatpush1.msra.mxu0 %v3019
        %3571 = vmatprep.subr.mxu0 0.0
        %3572 = vmatpush1.msra.mxu0 %v3020
        %3573 = vmatprep.subr.mxu0 0.0
        %3574 = vmatpush1.msra.mxu0 %v3021
        %3575 = vmatprep.subr.mxu0 0.0
        %3576 = vmatpush1.msra.mxu0 %v3022
        %3577 = vmatprep.subr.mxu0 0.0
        %3578 = vmatpush1.msra.mxu0 %v3023
        %3579 = vmatprep.subr.mxu0 0.0
        %3580 = vmatpush1.msra.mxu0 %v3024
        %3581 = vmatprep.subr.mxu0 0.0
        %3582 = vmatpush1.msra.mxu0 %v3025
        %3583 = vmatprep.subr.mxu0 0.0
        %3584 = vmatpush1.msra.mxu0 %v3026
        %3585 = vmatprep.subr.mxu0 0.0
        %3586 = vmatpush1.msra.mxu0 %v3027
        %3587 = vmatprep.subr.mxu0 0.0
        %3588 = vmatpush1.msra.mxu0 %v3028
        %3589 = vmatprep.subr.mxu0 0.0
        %3590 = vmatpush1.msra.mxu0 %v3029
        %3591 = vmatprep.mubr.f32.mxu0 %v2773
        %3592 = vmatmul.mubr.f32.gmra.mrb[0].mxu0 %v2772
        %v3593 = vpop.f32.mrb[0].mxu0
        %v3594 = vadd.f32 %v3524, %v3593
        %v3595 = vpop.f32.mrb[0].mxu0
        %3596 = vdwg.mxu0
        %v3597 = vadd.f32 %v1814, %v3594
        %3598 = vst [vmem:[%s714] sm:$0xff] %v3597
        %s3599 = sand.u32 %s437, 1
        %s3600 = scalar_lea.sflag [#allocation4], %s3599
        %s3601 = sand.u32 %s437, 1
        %s3602 = smul.addr %s3601, 8
        %s3603 = scalar_lea.vmem [#allocation16], %s3602
        // Predicated region
        $region125: #{tpu_custom_call.1} parent=91 // pred_check
          %p3604 = pneg %p447
        $region126: #{tpu_custom_call.1} parent=91 // pred_check_branch
          %3606 = sbr.rel (%p3604) target = $region128
        $region127: #{tpu_custom_call.1} parent=91 // pred_region
          %s3608 = ssub.s32 128, 128
          %3609 = vsyncadd %s3600, %s3608
          %s3610 = smul.addr %s41, 128
          %s3611 = scalar_lea.hbm %s18, %s3610
          %s3613 = sshll.u32 %s3603, 4
          %s3614 = int_to_ptr.vmem [resolvable:$true] %s3613
          %3616 = dma.vmem_to_hbm [thread:$0]  %s3614, 128, %s3611, %s3600
        $region128: #{tpu_custom_call.1} parent=91 // pred_fallthru
          _
      $region92: #{tpu_custom_call.1} parent=5 // pred_fallthru
        _
      %p3617 = scmp.le.s32.totalorder 2, %s36
      // Predicated region
      $region129: #{tpu_custom_call.1} parent=5 // pred_check
        %p3618 = pneg %p3617
      $region130: #{tpu_custom_call.1} parent=5 // pred_check_branch
        %3620 = sbr.rel (%p3618) target = $region132
      $region131: #{tpu_custom_call.1} parent=5 // pred_region
        %s3621 = ssub.s32 %s36, 2
        // Predicated region
        $region133: #{tpu_custom_call.1} parent=131 // pred_check
          %p3622 = pneg %p453
        $region134: #{tpu_custom_call.1} parent=131 // pred_check_branch
          %3624 = sbr.rel (%p3622) target = $region136
        $region135: #{tpu_custom_call.1} parent=131 // pred_region
          %s3625 = sand.u32 %s438, 1
          %s3626 = scalar_lea.sflag [#allocation4], %s3625
          %s3627 = sand.u32 %s438, 1
          %s3628 = smul.addr %s3627, 8
          %s3629 = scalar_lea.vmem [#allocation16], %s3628
          %3630 = dma.done %s3626, 128
        $region136: #{tpu_custom_call.1} parent=131 // pred_fallthru
          _
      $region132: #{tpu_custom_call.1} parent=5 // pred_fallthru
        _
    $region6: #{tpu_custom_call.1} parent=1 // loop_footer
      %s40 = sadd.s32 1, %s36
    $region7: #{tpu_custom_call.1} parent=1 // loop_footer_branch
      %35 = sbr.rel target = $region3
    $region8: #{tpu_custom_call.1} parent=1 // loop_exit
      _
    %3631 = vsyncpa [#allocation3], 1
    %s3632 = scalar_lea.sflag [#allocation3], 1
    %3633 = vsyncpa %s3632, 1
    %3634 = vsyncpa [#allocation6], 1
    %s3635 = scalar_lea.sflag [#allocation6], 1
    %3636 = vsyncpa %s3635, 1
    %3637 = vsyncpa [#allocation9], 1
    %3638 = vsyncpa [#allocation12], 1
    %3639 = vsyncpa [#allocation15], 1
    %3640 = vsyncpa [#allocation4], 1
    %s3641 = scalar_lea.sflag [#allocation4], 1
    %3642 = vsyncpa %s3641, 1

</llo_original>
